<compile_context>
chip_gen: v7x
topology: tpu7x:2x2x1
jax: 0.10.0
libtpu: 0.0.40
codegen_flags: <defaults>
</compile_context>

<pallas_src>
import functools
import math

import jax
import jax.numpy as jnp
from jax import lax
from jax.experimental import pallas as pl
from jax.experimental.pallas import tpu as pltpu


# ----------------------------- in-kernel helpers -----------------------------

def _layernorm(x, g, b):
    mu = jnp.mean(x, axis=-1, keepdims=True)
    var = jnp.mean((x - mu) ** 2, axis=-1, keepdims=True)
    return (x - mu) * lax.rsqrt(var + 1e-12) * g + b


def _gelu(x):
    # TODO(synk): HuggingFace BertModel uses exact erf GELU; tanh approximation
    #             (EUP-friendly) is used here -> small numeric drift.
    c = math.sqrt(2.0 / math.pi)
    return 0.5 * x * (1.0 + jnp.tanh(c * (x + 0.044715 * x * x * x)))


# ------------------------------ fused Pallas kernel ---------------------------
# grid = (num_batch_tiles, num_layers); layer axis is innermost / "arbitrary".
# Activation carried across layers in a VMEM scratch; epilogue fires on last layer.

def _encoder_kernel(x_ref, bias_ref, ent_ref,
                    wq_ref, bq_ref, wk_ref, bk_ref, wv_ref, bv_ref,
                    wo_ref, bo_ref, ln1g_ref, ln1b_ref,
                    wf1_ref, bf1_ref, wf2_ref, bf2_ref,
                    ln2g_ref, ln2b_ref,
                    pw_ref, pb_ref, fw_ref, fb_ref,
                    out_ref, acc_ref, *, tem, out_lanes):
    l = pl.program_id(1)
    Bt, S, H = x_ref.shape
    inv_tem = 1.0 / tem

    @pl.when(l == 0)
    def _():
        # Load this batch tile's embeddings once; batch is flattened into the MXU
        # M dimension (rows = Bt*S) for all row-wise matmuls.
        acc_ref[...] = x_ref[...].reshape(Bt * S, H)

    xr = acc_ref[...]                               # (Bt*S, H) f32 residual stream
    xb = xr.astype(jnp.bfloat16)                    # hoisted cast: feeds q/k/v

    def mm(a_bf16, w_ref):
        # bf16 operands on the MXU, f32 accumulation.
        return jnp.dot(a_bf16, w_ref[...], preferred_element_type=jnp.float32)

    # --- self-attention (single head, head_dim == H); 1/sqrt(H) folded into wq/bq.
    q = mm(xb, wq_ref) + bq_ref[...]
    k = mm(xb, wk_ref) + bk_ref[...]
    v = mm(xb, wv_ref) + bv_ref[...]

    qb = q.reshape(Bt, S, H).astype(jnp.bfloat16)
    kb = k.reshape(Bt, S, H).astype(jnp.bfloat16)
    vb = v.reshape(Bt, S, H).astype(jnp.bfloat16)

    # TODO(synk): at real sequence length, tile the SxS softmax flash-style
    #             (KV-blocked online softmax) instead of materializing it in f32.
    scores = jnp.einsum('bqd,bkd->bqk', qb, kb,
                        preferred_element_type=jnp.float32)     # (Bt, S, S) f32
    scores = scores + bias_ref[...]                 # (Bt,1,S) key-mask bias, f32
    m = jnp.max(scores, axis=-1, keepdims=True)
    p = jnp.exp(scores - m)
    p = p * pl.reciprocal(jnp.sum(p, axis=-1, keepdims=True), approx=True)

    ctx = jnp.einsum('bqk,bkd->bqd', p.astype(jnp.bfloat16), vb,
                     preferred_element_type=jnp.float32)        # (Bt, S, H) f32
    attn = mm(ctx.reshape(Bt * S, H).astype(jnp.bfloat16), wo_ref) + bo_ref[...]

    # --- residual + LN + FFN + residual + LN (all f32, bf16 MXU operands).
    h = _layernorm(xr + attn, ln1g_ref[...], ln1b_ref[...])
    hb = h.astype(jnp.bfloat16)                     # hoisted cast: feeds FFN-in
    ff = _gelu(mm(hb, wf1_ref) + bf1_ref[...])
    ff = mm(ff.astype(jnp.bfloat16), wf2_ref) + bf2_ref[...]
    new_x = _layernorm(h + ff, ln2g_ref[...], ln2b_ref[...])
    acc_ref[...] = new_x

    # ---- epilogue on the last layer: entity extract + proj/ReLU + fc / tem ----
    @pl.when(l == pl.num_programs(1) - 1)
    def _():
        seq = new_x.reshape(Bt, S, H)                              # f32
        # Single MXU pass: stacked head/tail masks (Bt,2,S) x (Bt,S,H) -> (Bt,2,H).
        feat = jnp.einsum('bes,bsh->beh', ent_ref[...], seq,
                          preferred_element_type=jnp.float32)
        feat = feat.reshape(Bt, 2 * H)                             # lane-dense concat

        hproj = jnp.dot(feat.astype(jnp.bfloat16), pw_ref[...],
                        preferred_element_type=jnp.float32) + pb_ref[...]
        hproj = jnp.maximum(hproj, 0.0)                            # ReLU
        logits = jnp.dot(hproj.astype(jnp.bfloat16), fw_ref[...],
                         preferred_element_type=jnp.float32) + fb_ref[...]
        logits = logits * inv_tem

        D = hproj.shape[-1]
        C = logits.shape[-1]
        pad = jnp.zeros((Bt, out_lanes - D - C), jnp.float32)
        # Pack emb || logits into one 128-lane block (unmasked full-lane store).
        packed = jnp.concatenate([hproj, logits, pad], axis=-1)
        out_ref[...] = packed.reshape(Bt, 1, out_lanes)


# ------------------------------- wrapper --------------------------------------

_LAYER_KEYS = ("wq", "bq", "wk", "bk", "wv", "bv", "wo", "bo",
               "ln1_g", "ln1_b", "w_ff1", "b_ff1", "w_ff2", "b_ff2",
               "ln2_g", "ln2_b")
_HEAD_KEYS = ("proj_w", "proj_b", "fc_w", "fc_b")


def _layer_spec(w):
    # Stacked (L, ...) per-layer param: stream one layer per grid step along l.
    nd = w.ndim
    return pl.BlockSpec((None,) + w.shape[1:],
                        lambda b, l, _nd=nd: (l,) + (0,) * (_nd - 1))


def _const_spec(w):
    # Layer-invariant param (epilogue proj/fc): same block every grid step.
    nd = w.ndim
    return pl.BlockSpec(w.shape, lambda b, l, _nd=nd: (0,) * _nd)


def encoder_forward(params, x, attn_bias, ent_mask, *, tem):
    B, S, H = x.shape
    D = params["proj_w"].shape[1]
    C = params["fc_w"].shape[1]
    L = params["wq"].shape[0]
    out_lanes = max(128, ((D + C + 127) // 128) * 128)

    # Split the batch across grid steps (one per TensorCore on v7x; serial on
    # v5e/v6e).  TODO(synk): at real BERT size choose Bt so Bt*S >= 128 (v5e) /
    # 256 (v6e/v7x) rows per step and size vmem_limit_bytes from the real block
    # + double-buffer footprint.
    Bt = B // 2 if (B % 2 == 0 and B >= 2) else B

    weights = [params[k] for k in _LAYER_KEYS] + [params[k] for k in _HEAD_KEYS]

    in_specs = (
        [pl.BlockSpec((Bt, S, H), lambda b, l: (b, 0, 0)),      # x (layer-invariant)
         pl.BlockSpec((Bt, 1, S), lambda b, l: (b, 0, 0)),      # attention mask bias
         pl.BlockSpec((Bt, 2, S), lambda b, l: (b, 0, 0))]      # stacked entity masks
        + [_layer_spec(params[k]) for k in _LAYER_KEYS]
        + [_const_spec(params[k]) for k in _HEAD_KEYS]
    )

    packed = pl.pallas_call(
        functools.partial(_encoder_kernel, tem=tem, out_lanes=out_lanes),
        grid=(B // Bt, L),
        in_specs=in_specs,
        out_specs=pl.BlockSpec((Bt, 1, out_lanes), lambda b, l: (b, 0, 0)),
        out_shape=jax.ShapeDtypeStruct((B, 1, out_lanes), jnp.float32),
        scratch_shapes=[pltpu.VMEM((Bt * S, H), jnp.float32)],   # residual carry
        compiler_params=pltpu.CompilerParams(
            dimension_semantics=("parallel", "arbitrary"),
            vmem_limit_bytes=32 * 1024 * 1024),
    )(x, attn_bias, ent_mask, *weights)

    packed = packed.reshape(B, out_lanes)
    emb = packed[:, :D]
    logits = packed[:, D:D + C]
    return logits, emb


def first_match_mask(input_ids, token):
    # 1 at the FIRST position equal to `token` in each row, else 0 (matches the
    # PyTorch double loop with `break`; all-zero row if token absent).
    eq = (input_ids == token)
    first = eq & (jnp.cumsum(eq.astype(jnp.int32), axis=1) == 1)
    return first.astype(jnp.float32)


# ------------------------------ model params ---------------------------------

def init_params(key, vocab, max_pos, H, F, n_layers, hidden_dim, num_classes):
    def nrm(k, shape):
        return jax.random.normal(k, shape, jnp.float32) * 0.02

    scale = 1.0 / math.sqrt(H)   # single-head attention scale, folded into wq/bq

    keys = jax.random.split(key, 4 + n_layers)
    params = {
        "word_emb": nrm(keys[0], (vocab, H)),
        "pos_emb": nrm(keys[1], (max_pos, H)),
        "emb_gamma": jnp.ones((H,), jnp.float32),
        "emb_beta": jnp.zeros((H,), jnp.float32),
        "proj_w": nrm(keys[2], (2 * H, hidden_dim)),
        "proj_b": jnp.zeros((1, hidden_dim), jnp.float32),
        "fc_w": nrm(keys[3], (hidden_dim, num_classes)),
        "fc_b": jnp.zeros((1, num_classes), jnp.float32),
    }

    layers = []
    for l in range(n_layers):
        lk = jax.random.split(keys[4 + l], 6)
        layers.append({
            # 1/sqrt(H) attention scale pre-folded into wq and bq (f32, then bf16).
            "wq": nrm(lk[0], (H, H)) * scale,
            "bq": jnp.zeros((1, H), jnp.float32) * scale,
            "wk": nrm(lk[1], (H, H)), "bk": jnp.zeros((1, H), jnp.float32),
            "wv": nrm(lk[2], (H, H)), "bv": jnp.zeros((1, H), jnp.float32),
            "wo": nrm(lk[3], (H, H)), "bo": jnp.zeros((1, H), jnp.float32),
            "ln1_g": jnp.ones((1, H), jnp.float32), "ln1_b": jnp.zeros((1, H), jnp.float32),
            "w_ff1": nrm(lk[4], (H, F)), "b_ff1": jnp.zeros((1, F), jnp.float32),
            "w_ff2": nrm(lk[5], (F, H)), "b_ff2": jnp.zeros((1, H), jnp.float32),
            "ln2_g": jnp.ones((1, H), jnp.float32), "ln2_b": jnp.zeros((1, H), jnp.float32),
        })

    # Stack per-layer params along a leading L axis; all matmul weights in bf16
    # (halves weight DMA bytes, hits the bf16 MXU peak; f32 accumulate in-kernel).
    bf16_keys = {"wq", "wk", "wv", "wo", "w_ff1", "w_ff2"}
    for k in layers[0]:
        stacked = jnp.stack([lp[k] for lp in layers])
        if k in bf16_keys:
            stacked = stacked.astype(jnp.bfloat16)
        params[k] = stacked

    params["proj_w"] = params["proj_w"].astype(jnp.bfloat16)
    params["fc_w"] = params["fc_w"].astype(jnp.bfloat16)
    return params


# ------------------------------ model forward ---------------------------------

def forward_virtual(params, input_ids, input_mask, *, tem=1.0):
    B, S = input_ids.shape
    # Embedding gather + embedding LayerNorm stay in XLA glue (tiny; the gather
    # has no clean BlockSpec form).
    x = params["word_emb"][input_ids] + params["pos_emb"][None, :S, :]
    mu = jnp.mean(x, -1, keepdims=True)
    var = jnp.mean((x - mu) ** 2, -1, keepdims=True)
    x = (x - mu) * lax.rsqrt(var + 1e-12) * params["emb_gamma"] + params["emb_beta"]

    attn_bias = ((1.0 - input_mask.astype(jnp.float32)) * -1e9)[:, None, :]  # (B,1,S)
    ent_mask = jnp.stack([first_match_mask(input_ids, 1001),
                          first_match_mask(input_ids, 1030)], axis=1)        # (B,2,S)

    # Single fused Pallas kernel: encoder layers + entity extract + proj/fc.
    logits, emb = encoder_forward(params, x, attn_bias, ent_mask, tem=tem)
    return logits, emb


def forward(params, input_ids, input_mask, *, tem=1.0):
    logits, _ = forward_virtual(params, input_ids, input_mask, tem=tem)
    return logits


# ----------------------------------- main -------------------------------------

if __name__ == "__main__":
    B, S = 2, 8
    H, F, L = 128, 512, 2            # scaled-down BERT (stand-in for 768 / 3072 / 12)
    hidden_dim, num_classes, tem = 32, 4, 1.0
    vocab, max_pos = 2048, 64

    key = jax.random.PRNGKey(0)
    pkey, dkey = jax.random.split(key)
    params = init_params(pkey, vocab, max_pos, H, F, L, hidden_dim, num_classes)

    input_ids = jax.random.randint(dkey, (B, S), 2, 2000, dtype=jnp.int32)
    # plant head (1001) and tail (1030) marker tokens in each row
    input_ids = input_ids.at[0, 2].set(1001).at[0, 5].set(1030)
    input_ids = input_ids.at[1, 1].set(1001).at[1, 6].set(1030)
    input_mask = jnp.ones((B, S), jnp.int32)

    fwd = jax.jit(functools.partial(forward_virtual, tem=tem))
    logits, emb = fwd(params, input_ids, input_mask)
    jax.block_until_ready((logits, emb))
    assert logits.shape == (B, num_classes)
    assert emb.shape == (B, hidden_dim)
    assert logits.dtype == jnp.float32
    print("KERNEL_OK")
</pallas_src>

<mosaic_0001>
module attributes {stable_mosaic.version = 11 : i64} {
  func.func @_encoder_kernel(%arg0: i32, %arg1: i32, %arg2: memref<1x8x128xf32, #tpu.memory_space<vmem>>, %arg3: memref<1x1x8xf32, #tpu.memory_space<vmem>>, %arg4: memref<1x2x8xf32, #tpu.memory_space<vmem>>, %arg5: memref<1x128x128xbf16, #tpu.memory_space<vmem>>, %arg6: memref<1x1x128xf32, #tpu.memory_space<vmem>>, %arg7: memref<1x128x128xbf16, #tpu.memory_space<vmem>>, %arg8: memref<1x1x128xf32, #tpu.memory_space<vmem>>, %arg9: memref<1x128x128xbf16, #tpu.memory_space<vmem>>, %arg10: memref<1x1x128xf32, #tpu.memory_space<vmem>>, %arg11: memref<1x128x128xbf16, #tpu.memory_space<vmem>>, %arg12: memref<1x1x128xf32, #tpu.memory_space<vmem>>, %arg13: memref<1x1x128xf32, #tpu.memory_space<vmem>>, %arg14: memref<1x1x128xf32, #tpu.memory_space<vmem>>, %arg15: memref<1x128x512xbf16, #tpu.memory_space<vmem>>, %arg16: memref<1x1x512xf32, #tpu.memory_space<vmem>>, %arg17: memref<1x512x128xbf16, #tpu.memory_space<vmem>>, %arg18: memref<1x1x128xf32, #tpu.memory_space<vmem>>, %arg19: memref<1x1x128xf32, #tpu.memory_space<vmem>>, %arg20: memref<1x1x128xf32, #tpu.memory_space<vmem>>, %arg21: memref<256x32xbf16, #tpu.memory_space<vmem>>, %arg22: memref<1x32xf32, #tpu.memory_space<vmem>>, %arg23: memref<32x4xbf16, #tpu.memory_space<vmem>>, %arg24: memref<1x4xf32, #tpu.memory_space<vmem>>, %arg25: memref<1x1x128xf32, #tpu.memory_space<vmem>>, %arg26: memref<8x128xf32, #tpu.memory_space<vmem>>) attributes {dimension_semantics = [#tpu.dimension_semantics<parallel>, #tpu.dimension_semantics<arbitrary>], iteration_bounds = array<i64: 2, 2>, scalar_prefetch = 0 : i64, scratch_operands = 1 : i64, tpu.core_type = #tpu.core_type<tc>, window_params = [{transform_indices = @transform_0, window_bounds = array<i64: 1, 8, 128>}, {transform_indices = @transform_1, window_bounds = array<i64: 1, 1, 8>}, {transform_indices = @transform_2, window_bounds = array<i64: 1, 2, 8>}, {transform_indices = @transform_3, window_bounds = array<i64: 1, 128, 128>}, {transform_indices = @transform_4, window_bounds = array<i64: 1, 1, 128>}, {transform_indices = @transform_5, window_bounds = array<i64: 1, 128, 128>}, {transform_indices = @transform_6, window_bounds = array<i64: 1, 1, 128>}, {transform_indices = @transform_7, window_bounds = array<i64: 1, 128, 128>}, {transform_indices = @transform_8, window_bounds = array<i64: 1, 1, 128>}, {transform_indices = @transform_9, window_bounds = array<i64: 1, 128, 128>}, {transform_indices = @transform_10, window_bounds = array<i64: 1, 1, 128>}, {transform_indices = @transform_11, window_bounds = array<i64: 1, 1, 128>}, {transform_indices = @transform_12, window_bounds = array<i64: 1, 1, 128>}, {transform_indices = @transform_13, window_bounds = array<i64: 1, 128, 512>}, {transform_indices = @transform_14, window_bounds = array<i64: 1, 1, 512>}, {transform_indices = @transform_15, window_bounds = array<i64: 1, 512, 128>}, {transform_indices = @transform_16, window_bounds = array<i64: 1, 1, 128>}, {transform_indices = @transform_17, window_bounds = array<i64: 1, 1, 128>}, {transform_indices = @transform_18, window_bounds = array<i64: 1, 1, 128>}, {pipeline_mode = #tpu.pipeline_mode<synchronous>, transform_indices = @transform_19, window_bounds = array<i64: 256, 32>}, {pipeline_mode = #tpu.pipeline_mode<synchronous>, transform_indices = @transform_20, window_bounds = array<i64: 1, 32>}, {pipeline_mode = #tpu.pipeline_mode<synchronous>, transform_indices = @transform_21, window_bounds = array<i64: 32, 4>}, {pipeline_mode = #tpu.pipeline_mode<synchronous>, transform_indices = @transform_22, window_bounds = array<i64: 1, 4>}, {transform_indices = @transform_23, window_bounds = array<i64: 1, 1, 128>}]} {
    %c0_i32 = arith.constant 0 : i32
    %0 = arith.cmpi eq, %arg1, %c0_i32 : i32
    %1 = arith.extui %0 : i1 to i32
    %c0_i32_0 = arith.constant 0 : i32
    %2 = arith.cmpi ne, %1, %c0_i32_0 : i32
    scf.if %2 {
      %c0_79 = arith.constant 0 : index
      %c0_80 = arith.constant 0 : index
      %c0_81 = arith.constant 0 : index
      %144 = vector.load %arg2[%c0_79, %c0_80, %c0_81] : memref<1x8x128xf32, #tpu.memory_space<vmem>>, vector<1x8x128xf32>
      %145 = vector.shape_cast %144 : vector<1x8x128xf32> to vector<8x128xf32>
      %c0_82 = arith.constant 0 : index
      %c0_83 = arith.constant 0 : index
      %146 = vector.load %arg26[%c0_82, %c0_83] : memref<8x128xf32, #tpu.memory_space<vmem>>, vector<8x128xf32>
      tpu.vector_store %arg26[%c0_82, %c0_83], %145 {strides = array<i32>} : memref<8x128xf32, #tpu.memory_space<vmem>>, vector<8x128xf32>,
    } else {
    }
    %c0 = arith.constant 0 : index
    %c0_1 = arith.constant 0 : index
    %3 = vector.load %arg26[%c0, %c0_1] : memref<8x128xf32, #tpu.memory_space<vmem>>, vector<8x128xf32>
    %4 = arith.truncf %3 : vector<8x128xf32> to vector<8x128xbf16>
    %c0_2 = arith.constant 0 : index
    %c0_3 = arith.constant 0 : index
    %c0_4 = arith.constant 0 : index
    %5 = vector.load %arg5[%c0_2, %c0_3, %c0_4] : memref<1x128x128xbf16, #tpu.memory_space<vmem>>, vector<1x128x128xbf16>
    %6 = vector.shape_cast %5 : vector<1x128x128xbf16> to vector<128x128xbf16>
    %cst = arith.constant dense<0.000000e+00> : vector<8x128xf32>
    %7 = tpu.matmul %4, %6, %cst {dimension_numbers = #tpu.dot_dimension_numbers<[1], [0], [0], [1], [0, 0, 1, 1], [], []>} : vector<8x128xbf16>, vector<128x128xbf16>, vector<8x128xf32> -> vector<8x128xf32>
    %c0_5 = arith.constant 0 : index
    %c0_6 = arith.constant 0 : index
    %c0_7 = arith.constant 0 : index
    %8 = vector.load %arg6[%c0_5, %c0_6, %c0_7] : memref<1x1x128xf32, #tpu.memory_space<vmem>>, vector<1x1x128xf32>
    %9 = vector.shape_cast %8 : vector<1x1x128xf32> to vector<1x128xf32>
    %10 = vector.broadcast %9 : vector<1x128xf32> to vector<8x128xf32>
    %11 = arith.addf %7, %10 : vector<8x128xf32>
    %c0_8 = arith.constant 0 : index
    %c0_9 = arith.constant 0 : index
    %c0_10 = arith.constant 0 : index
    %12 = vector.load %arg7[%c0_8, %c0_9, %c0_10] : memref<1x128x128xbf16, #tpu.memory_space<vmem>>, vector<1x128x128xbf16>
    %13 = vector.shape_cast %12 : vector<1x128x128xbf16> to vector<128x128xbf16>
    %cst_11 = arith.constant dense<0.000000e+00> : vector<8x128xf32>
    %14 = tpu.matmul %4, %13, %cst_11 {dimension_numbers = #tpu.dot_dimension_numbers<[1], [0], [0], [1], [0, 0, 1, 1], [], []>} : vector<8x128xbf16>, vector<128x128xbf16>, vector<8x128xf32> -> vector<8x128xf32>
    %c0_12 = arith.constant 0 : index
    %c0_13 = arith.constant 0 : index
    %c0_14 = arith.constant 0 : index
    %15 = vector.load %arg8[%c0_12, %c0_13, %c0_14] : memref<1x1x128xf32, #tpu.memory_space<vmem>>, vector<1x1x128xf32>
    %16 = vector.shape_cast %15 : vector<1x1x128xf32> to vector<1x128xf32>
    %17 = vector.broadcast %16 : vector<1x128xf32> to vector<8x128xf32>
    %18 = arith.addf %14, %17 : vector<8x128xf32>
    %c0_15 = arith.constant 0 : index
    %c0_16 = arith.constant 0 : index
    %c0_17 = arith.constant 0 : index
    %19 = vector.load %arg9[%c0_15, %c0_16, %c0_17] : memref<1x128x128xbf16, #tpu.memory_space<vmem>>, vector<1x128x128xbf16>
    %20 = vector.shape_cast %19 : vector<1x128x128xbf16> to vector<128x128xbf16>
    %cst_18 = arith.constant dense<0.000000e+00> : vector<8x128xf32>
    %21 = tpu.matmul %4, %20, %cst_18 {dimension_numbers = #tpu.dot_dimension_numbers<[1], [0], [0], [1], [0, 0, 1, 1], [], []>} : vector<8x128xbf16>, vector<128x128xbf16>, vector<8x128xf32> -> vector<8x128xf32>
    %c0_19 = arith.constant 0 : index
    %c0_20 = arith.constant 0 : index
    %c0_21 = arith.constant 0 : index
    %22 = vector.load %arg10[%c0_19, %c0_20, %c0_21] : memref<1x1x128xf32, #tpu.memory_space<vmem>>, vector<1x1x128xf32>
    %23 = vector.shape_cast %22 : vector<1x1x128xf32> to vector<1x128xf32>
    %24 = vector.broadcast %23 : vector<1x128xf32> to vector<8x128xf32>
    %25 = arith.addf %21, %24 : vector<8x128xf32>
    %26 = vector.shape_cast %11 : vector<8x128xf32> to vector<1x8x128xf32>
    %27 = arith.truncf %26 : vector<1x8x128xf32> to vector<1x8x128xbf16>
    %28 = vector.shape_cast %18 : vector<8x128xf32> to vector<1x8x128xf32>
    %29 = arith.truncf %28 : vector<1x8x128xf32> to vector<1x8x128xbf16>
    %30 = vector.shape_cast %25 : vector<8x128xf32> to vector<1x8x128xf32>
    %31 = arith.truncf %30 : vector<1x8x128xf32> to vector<1x8x128xbf16>
    "tpu.trace_start"() <{level = 10 : i32, message = "bqd,bkd->bqk"}> : () -> ()
    %cst_22 = arith.constant dense<0.000000e+00> : vector<1x8x8xf32>
    %32 = tpu.matmul %27, %29, %cst_22 {dimension_numbers = #tpu.dot_dimension_numbers<[2], [2], [1], [1], [0, 0, 0, 1, 1, 1], [0], [0]>} : vector<1x8x128xbf16>, vector<1x8x128xbf16>, vector<1x8x8xf32> -> vector<1x8x8xf32>
    "tpu.trace_stop"() : () -> ()
    %c0_23 = arith.constant 0 : index
    %c0_24 = arith.constant 0 : index
    %c0_25 = arith.constant 0 : index
    %33 = vector.load %arg3[%c0_23, %c0_24, %c0_25] : memref<1x1x8xf32, #tpu.memory_space<vmem>>, vector<1x1x8xf32>
    %34 = vector.broadcast %33 : vector<1x1x8xf32> to vector<1x8x8xf32>
    %35 = arith.addf %32, %34 : vector<1x8x8xf32>
    %cst_26 = arith.constant dense<0xFF800000> : vector<1x8xf32>
    %36 = vector.multi_reduction <maximumf>, %35, %cst_26 [2] : vector<1x8x8xf32> to vector<1x8xf32>
    %37 = vector.shape_cast %36 : vector<1x8xf32> to vector<1x8x1xf32>
    %38 = vector.broadcast %37 : vector<1x8x1xf32> to vector<1x8x8xf32>
    %39 = arith.subf %35, %38 : vector<1x8x8xf32>
    %40 = math.exp %39 : vector<1x8x8xf32>
    %cst_27 = arith.constant dense<0.000000e+00> : vector<1x8xf32>
    %41 = vector.multi_reduction <add>, %40, %cst_27 [2] : vector<1x8x8xf32> to vector<1x8xf32>
    %42 = vector.shape_cast %41 : vector<1x8xf32> to vector<1x8x1xf32>
    %43 = tpu.reciprocal %42 {approx = true} : vector<1x8x1xf32> -> vector<1x8x1xf32>
    %44 = vector.broadcast %43 : vector<1x8x1xf32> to vector<1x8x8xf32>
    %45 = arith.mulf %40, %44 : vector<1x8x8xf32>
    %46 = arith.truncf %45 : vector<1x8x8xf32> to vector<1x8x8xbf16>
    "tpu.trace_start"() <{level = 10 : i32, message = "bqk,bkd->bqd"}> : () -> ()
    %cst_28 = arith.constant dense<0.000000e+00> : vector<1x8x128xf32>
    %47 = tpu.matmul %46, %31, %cst_28 {dimension_numbers = #tpu.dot_dimension_numbers<[2], [1], [1], [2], [0, 0, 0, 1, 1, 2], [0], [0]>} : vector<1x8x8xbf16>, vector<1x8x128xbf16>, vector<1x8x128xf32> -> vector<1x8x128xf32>
    "tpu.trace_stop"() : () -> ()
    %48 = vector.shape_cast %47 : vector<1x8x128xf32> to vector<8x128xf32>
    %49 = arith.truncf %48 : vector<8x128xf32> to vector<8x128xbf16>
    %c0_29 = arith.constant 0 : index
    %c0_30 = arith.constant 0 : index
    %c0_31 = arith.constant 0 : index
    %50 = vector.load %arg11[%c0_29, %c0_30, %c0_31] : memref<1x128x128xbf16, #tpu.memory_space<vmem>>, vector<1x128x128xbf16>
    %51 = vector.shape_cast %50 : vector<1x128x128xbf16> to vector<128x128xbf16>
    %cst_32 = arith.constant dense<0.000000e+00> : vector<8x128xf32>
    %52 = tpu.matmul %49, %51, %cst_32 {dimension_numbers = #tpu.dot_dimension_numbers<[1], [0], [0], [1], [0, 0, 1, 1], [], []>} : vector<8x128xbf16>, vector<128x128xbf16>, vector<8x128xf32> -> vector<8x128xf32>
    %c0_33 = arith.constant 0 : index
    %c0_34 = arith.constant 0 : index
    %c0_35 = arith.constant 0 : index
    %53 = vector.load %arg12[%c0_33, %c0_34, %c0_35] : memref<1x1x128xf32, #tpu.memory_space<vmem>>, vector<1x1x128xf32>
    %54 = vector.shape_cast %53 : vector<1x1x128xf32> to vector<1x128xf32>
    %55 = vector.broadcast %54 : vector<1x128xf32> to vector<8x128xf32>
    %56 = arith.addf %52, %55 : vector<8x128xf32>
    %57 = arith.addf %3, %56 : vector<8x128xf32>
    %c0_36 = arith.constant 0 : index
    %c0_37 = arith.constant 0 : index
    %c0_38 = arith.constant 0 : index
    %58 = vector.load %arg13[%c0_36, %c0_37, %c0_38] : memref<1x1x128xf32, #tpu.memory_space<vmem>>, vector<1x1x128xf32>
    %59 = vector.shape_cast %58 : vector<1x1x128xf32> to vector<1x128xf32>
    %c0_39 = arith.constant 0 : index
    %c0_40 = arith.constant 0 : index
    %c0_41 = arith.constant 0 : index
    %60 = vector.load %arg14[%c0_39, %c0_40, %c0_41] : memref<1x1x128xf32, #tpu.memory_space<vmem>>, vector<1x1x128xf32>
    %61 = vector.shape_cast %60 : vector<1x1x128xf32> to vector<1x128xf32>
    %cst_42 = arith.constant dense<0.000000e+00> : vector<8xf32>
    %62 = vector.multi_reduction <add>, %57, %cst_42 [1] : vector<8x128xf32> to vector<8xf32>
    %63 = vector.shape_cast %62 : vector<8xf32> to vector<8x1xf32>
    %cst_43 = arith.constant 1.280000e+02 : f32
    %64 = vector.broadcast %cst_43 : f32 to vector<8x1xf32>
    %65 = arith.divf %63, %64 : vector<8x1xf32>
    %66 = vector.broadcast %65 : vector<8x1xf32> to vector<8x128xf32>
    %67 = arith.subf %57, %66 : vector<8x128xf32>
    %68 = arith.mulf %67, %67 : vector<8x128xf32>
    %cst_44 = arith.constant dense<0.000000e+00> : vector<8xf32>
    %69 = vector.multi_reduction <add>, %68, %cst_44 [1] : vector<8x128xf32> to vector<8xf32>
    %70 = vector.shape_cast %69 : vector<8xf32> to vector<8x1xf32>
    %cst_45 = arith.constant 1.280000e+02 : f32
    %71 = vector.broadcast %cst_45 : f32 to vector<8x1xf32>
    %72 = arith.divf %70, %71 : vector<8x1xf32>
    %73 = vector.broadcast %65 : vector<8x1xf32> to vector<8x128xf32>
    %74 = arith.subf %57, %73 : vector<8x128xf32>
    %cst_46 = arith.constant 9.99999996E-13 : f32
    %75 = vector.broadcast %cst_46 : f32 to vector<8x1xf32>
    %76 = arith.addf %72, %75 : vector<8x1xf32>
    %77 = math.rsqrt %76 : vector<8x1xf32>
    %78 = vector.broadcast %77 : vector<8x1xf32> to vector<8x128xf32>
    %79 = arith.mulf %74, %78 : vector<8x128xf32>
    %80 = vector.broadcast %59 : vector<1x128xf32> to vector<8x128xf32>
    %81 = arith.mulf %79, %80 : vector<8x128xf32>
    %82 = vector.broadcast %61 : vector<1x128xf32> to vector<8x128xf32>
    %83 = arith.addf %81, %82 : vector<8x128xf32>
    %84 = arith.truncf %83 : vector<8x128xf32> to vector<8x128xbf16>
    %c0_47 = arith.constant 0 : index
    %c0_48 = arith.constant 0 : index
    %c0_49 = arith.constant 0 : index
    %85 = vector.load %arg15[%c0_47, %c0_48, %c0_49] : memref<1x128x512xbf16, #tpu.memory_space<vmem>>, vector<1x128x512xbf16>
    %86 = vector.shape_cast %85 : vector<1x128x512xbf16> to vector<128x512xbf16>
    %cst_50 = arith.constant dense<0.000000e+00> : vector<8x512xf32>
    %87 = tpu.matmul %84, %86, %cst_50 {dimension_numbers = #tpu.dot_dimension_numbers<[1], [0], [0], [1], [0, 0, 1, 1], [], []>} : vector<8x128xbf16>, vector<128x512xbf16>, vector<8x512xf32> -> vector<8x512xf32>
    %c0_51 = arith.constant 0 : index
    %c0_52 = arith.constant 0 : index
    %c0_53 = arith.constant 0 : index
    %88 = vector.load %arg16[%c0_51, %c0_52, %c0_53] : memref<1x1x512xf32, #tpu.memory_space<vmem>>, vector<1x1x512xf32>
    %89 = vector.shape_cast %88 : vector<1x1x512xf32> to vector<1x512xf32>
    %90 = vector.broadcast %89 : vector<1x512xf32> to vector<8x512xf32>
    %91 = arith.addf %87, %90 : vector<8x512xf32>
    %cst_54 = arith.constant 5.000000e-01 : f32
    %92 = vector.broadcast %cst_54 : f32 to vector<8x512xf32>
    %93 = arith.mulf %92, %91 : vector<8x512xf32>
    %cst_55 = arith.constant 4.471500e-02 : f32
    %94 = vector.broadcast %cst_55 : f32 to vector<8x512xf32>
    %95 = arith.mulf %94, %91 : vector<8x512xf32>
    %96 = arith.mulf %95, %91 : vector<8x512xf32>
    %97 = arith.mulf %96, %91 : vector<8x512xf32>
    %98 = arith.addf %91, %97 : vector<8x512xf32>
    %cst_56 = arith.constant 0.797884583 : f32
    %99 = vector.broadcast %cst_56 : f32 to vector<8x512xf32>
    %100 = arith.mulf %99, %98 : vector<8x512xf32>
    %101 = math.tanh %100 : vector<8x512xf32>
    %cst_57 = arith.constant 1.000000e+00 : f32
    %102 = vector.broadcast %cst_57 : f32 to vector<8x512xf32>
    %103 = arith.addf %102, %101 : vector<8x512xf32>
    %104 = arith.mulf %93, %103 : vector<8x512xf32>
    %105 = arith.truncf %104 : vector<8x512xf32> to vector<8x512xbf16>
    %c0_58 = arith.constant 0 : index
    %c0_59 = arith.constant 0 : index
    %c0_60 = arith.constant 0 : index
    %106 = vector.load %arg17[%c0_58, %c0_59, %c0_60] : memref<1x512x128xbf16, #tpu.memory_space<vmem>>, vector<1x512x128xbf16>
    %107 = vector.shape_cast %106 : vector<1x512x128xbf16> to vector<512x128xbf16>
    %cst_61 = arith.constant dense<0.000000e+00> : vector<8x128xf32>
    %108 = tpu.matmul %105, %107, %cst_61 {dimension_numbers = #tpu.dot_dimension_numbers<[1], [0], [0], [1], [0, 0, 1, 1], [], []>} : vector<8x512xbf16>, vector<512x128xbf16>, vector<8x128xf32> -> vector<8x128xf32>
    %c0_62 = arith.constant 0 : index
    %c0_63 = arith.constant 0 : index
    %c0_64 = arith.constant 0 : index
    %109 = vector.load %arg18[%c0_62, %c0_63, %c0_64] : memref<1x1x128xf32, #tpu.memory_space<vmem>>, vector<1x1x128xf32>
    %110 = vector.shape_cast %109 : vector<1x1x128xf32> to vector<1x128xf32>
    %111 = vector.broadcast %110 : vector<1x128xf32> to vector<8x128xf32>
    %112 = arith.addf %108, %111 : vector<8x128xf32>
    %113 = arith.addf %83, %112 : vector<8x128xf32>
    %c0_65 = arith.constant 0 : index
    %c0_66 = arith.constant 0 : index
    %c0_67 = arith.constant 0 : index
    %114 = vector.load %arg19[%c0_65, %c0_66, %c0_67] : memref<1x1x128xf32, #tpu.memory_space<vmem>>, vector<1x1x128xf32>
    %115 = vector.shape_cast %114 : vector<1x1x128xf32> to vector<1x128xf32>
    %c0_68 = arith.constant 0 : index
    %c0_69 = arith.constant 0 : index
    %c0_70 = arith.constant 0 : index
    %116 = vector.load %arg20[%c0_68, %c0_69, %c0_70] : memref<1x1x128xf32, #tpu.memory_space<vmem>>, vector<1x1x128xf32>
    %117 = vector.shape_cast %116 : vector<1x1x128xf32> to vector<1x128xf32>
    %cst_71 = arith.constant dense<0.000000e+00> : vector<8xf32>
    %118 = vector.multi_reduction <add>, %113, %cst_71 [1] : vector<8x128xf32> to vector<8xf32>
    %119 = vector.shape_cast %118 : vector<8xf32> to vector<8x1xf32>
    %cst_72 = arith.constant 1.280000e+02 : f32
    %120 = vector.broadcast %cst_72 : f32 to vector<8x1xf32>
    %121 = arith.divf %119, %120 : vector<8x1xf32>
    %122 = vector.broadcast %121 : vector<8x1xf32> to vector<8x128xf32>
    %123 = arith.subf %113, %122 : vector<8x128xf32>
    %124 = arith.mulf %123, %123 : vector<8x128xf32>
    %cst_73 = arith.constant dense<0.000000e+00> : vector<8xf32>
    %125 = vector.multi_reduction <add>, %124, %cst_73 [1] : vector<8x128xf32> to vector<8xf32>
    %126 = vector.shape_cast %125 : vector<8xf32> to vector<8x1xf32>
    %cst_74 = arith.constant 1.280000e+02 : f32
    %127 = vector.broadcast %cst_74 : f32 to vector<8x1xf32>
    %128 = arith.divf %126, %127 : vector<8x1xf32>
    %129 = vector.broadcast %121 : vector<8x1xf32> to vector<8x128xf32>
    %130 = arith.subf %113, %129 : vector<8x128xf32>
    %cst_75 = arith.constant 9.99999996E-13 : f32
    %131 = vector.broadcast %cst_75 : f32 to vector<8x1xf32>
    %132 = arith.addf %128, %131 : vector<8x1xf32>
    %133 = math.rsqrt %132 : vector<8x1xf32>
    %134 = vector.broadcast %133 : vector<8x1xf32> to vector<8x128xf32>
    %135 = arith.mulf %130, %134 : vector<8x128xf32>
    %136 = vector.broadcast %115 : vector<1x128xf32> to vector<8x128xf32>
    %137 = arith.mulf %135, %136 : vector<8x128xf32>
    %138 = vector.broadcast %117 : vector<1x128xf32> to vector<8x128xf32>
    %139 = arith.addf %137, %138 : vector<8x128xf32>
    %c0_76 = arith.constant 0 : index
    %c0_77 = arith.constant 0 : index
    %140 = vector.load %arg26[%c0_76, %c0_77] : memref<8x128xf32, #tpu.memory_space<vmem>>, vector<8x128xf32>
    tpu.vector_store %arg26[%c0_76, %c0_77], %139 {strides = array<i32>} : memref<8x128xf32, #tpu.memory_space<vmem>>, vector<8x128xf32>,
    %c1_i32 = arith.constant 1 : i32
    %141 = arith.cmpi eq, %arg1, %c1_i32 : i32
    %142 = arith.extui %141 : i1 to i32
    %c0_i32_78 = arith.constant 0 : i32
    %143 = arith.cmpi ne, %142, %c0_i32_78 : i32
    scf.if %143 {
      %144 = vector.shape_cast %139 : vector<8x128xf32> to vector<1x8x128xf32>
      %c0_79 = arith.constant 0 : index
      %c0_80 = arith.constant 0 : index
      %c0_81 = arith.constant 0 : index
      %145 = vector.load %arg4[%c0_79, %c0_80, %c0_81] : memref<1x2x8xf32, #tpu.memory_space<vmem>>, vector<1x2x8xf32>
      "tpu.trace_start"() <{level = 10 : i32, message = "bes,bsh->beh"}> : () -> ()
      %cst_82 = arith.constant dense<0.000000e+00> : vector<1x2x128xf32>
      %146 = tpu.matmul %145, %144, %cst_82 {dimension_numbers = #tpu.dot_dimension_numbers<[2], [1], [1], [2], [0, 0, 0, 1, 1, 2], [0], [0]>} : vector<1x2x8xf32>, vector<1x8x128xf32>, vector<1x2x128xf32> -> vector<1x2x128xf32>
      "tpu.trace_stop"() : () -> ()
      %147 = vector.shape_cast %146 : vector<1x2x128xf32> to vector<1x256xf32>
      %148 = arith.truncf %147 : vector<1x256xf32> to vector<1x256xbf16>
      %c0_83 = arith.constant 0 : index
      %c0_84 = arith.constant 0 : index
      %149 = vector.load %arg21[%c0_83, %c0_84] : memref<256x32xbf16, #tpu.memory_space<vmem>>, vector<256x32xbf16>
      %cst_85 = arith.constant dense<0.000000e+00> : vector<1x32xf32>
      %150 = tpu.matmul %148, %149, %cst_85 {dimension_numbers = #tpu.dot_dimension_numbers<[1], [0], [0], [1], [0, 0, 1, 1], [], []>} : vector<1x256xbf16>, vector<256x32xbf16>, vector<1x32xf32> -> vector<1x32xf32>
      %c0_86 = arith.constant 0 : index
      %c0_87 = arith.constant 0 : index
      %151 = vector.load %arg22[%c0_86, %c0_87] : memref<1x32xf32, #tpu.memory_space<vmem>>, vector<1x32xf32>
      %152 = arith.addf %150, %151 : vector<1x32xf32>
      %cst_88 = arith.constant 0.000000e+00 : f32
      %153 = vector.broadcast %cst_88 : f32 to vector<1x32xf32>
      %154 = arith.maximumf %152, %153 : vector<1x32xf32>
      %155 = arith.truncf %154 : vector<1x32xf32> to vector<1x32xbf16>
      %c0_89 = arith.constant 0 : index
      %c0_90 = arith.constant 0 : index
      %156 = vector.load %arg23[%c0_89, %c0_90] : memref<32x4xbf16, #tpu.memory_space<vmem>>, vector<32x4xbf16>
      %cst_91 = arith.constant dense<0.000000e+00> : vector<1x4xf32>
      %157 = tpu.matmul %155, %156, %cst_91 {dimension_numbers = #tpu.dot_dimension_numbers<[1], [0], [0], [1], [0, 0, 1, 1], [], []>} : vector<1x32xbf16>, vector<32x4xbf16>, vector<1x4xf32> -> vector<1x4xf32>
      %c0_92 = arith.constant 0 : index
      %c0_93 = arith.constant 0 : index
      %158 = vector.load %arg24[%c0_92, %c0_93] : memref<1x4xf32, #tpu.memory_space<vmem>>, vector<1x4xf32>
      %159 = arith.addf %157, %158 : vector<1x4xf32>
      %cst_94 = arith.constant 1.000000e+00 : f32
      %160 = vector.broadcast %cst_94 : f32 to vector<1x4xf32>
      %161 = arith.mulf %159, %160 : vector<1x4xf32>
      %cst_95 = arith.constant 0.000000e+00 : f32
      %162 = vector.broadcast %cst_95 : f32 to vector<1x92xf32>
      %163 = tpu.concatenate %154, %161, %162 in 1 : vector<1x32xf32>, vector<1x4xf32>, vector<1x92xf32> -> vector<1x128xf32>
      %164 = vector.shape_cast %163 : vector<1x128xf32> to vector<1x1x128xf32>
      %c0_96 = arith.constant 0 : index
      %c0_97 = arith.constant 0 : index
      %c0_98 = arith.constant 0 : index
      %165 = vector.load %arg25[%c0_96, %c0_97, %c0_98] : memref<1x1x128xf32, #tpu.memory_space<vmem>>, vector<1x1x128xf32>
      tpu.vector_store %arg25[%c0_96, %c0_97, %c0_98], %164 {strides = array<i32>} : memref<1x1x128xf32, #tpu.memory_space<vmem>>, vector<1x1x128xf32>,
    } else {
    }
    return
  }
  func.func @transform_0(%arg0: i32, %arg1: i32) -> (i32, i32, i32) {
    %c0_i32 = arith.constant 0 : i32
    %c0_i32_0 = arith.constant 0 : i32
    %c0_i32_1 = arith.constant 0 : i32
    return %arg0, %c0_i32, %c0_i32_0 : i32, i32, i32
  }
  func.func @transform_1(%arg0: i32, %arg1: i32) -> (i32, i32, i32) {
    %c0_i32 = arith.constant 0 : i32
    %c0_i32_0 = arith.constant 0 : i32
    %c0_i32_1 = arith.constant 0 : i32
    return %arg0, %c0_i32, %c0_i32_0 : i32, i32, i32
  }
  func.func @transform_2(%arg0: i32, %arg1: i32) -> (i32, i32, i32) {
    %c0_i32 = arith.constant 0 : i32
    %c0_i32_0 = arith.constant 0 : i32
    %c0_i32_1 = arith.constant 0 : i32
    return %arg0, %c0_i32, %c0_i32_0 : i32, i32, i32
  }
  func.func @transform_3(%arg0: i32, %arg1: i32) -> (i32, i32, i32) {
    %c0_i32 = arith.constant 0 : i32
    %c0_i32_0 = arith.constant 0 : i32
    %c0_i32_1 = arith.constant 0 : i32
    return %arg1, %c0_i32, %c0_i32_0 : i32, i32, i32
  }
  func.func @transform_4(%arg0: i32, %arg1: i32) -> (i32, i32, i32) {
    %c0_i32 = arith.constant 0 : i32
    %c0_i32_0 = arith.constant 0 : i32
    %c0_i32_1 = arith.constant 0 : i32
    return %arg1, %c0_i32, %c0_i32_0 : i32, i32, i32
  }
  func.func @transform_5(%arg0: i32, %arg1: i32) -> (i32, i32, i32) {
    %c0_i32 = arith.constant 0 : i32
    %c0_i32_0 = arith.constant 0 : i32
    %c0_i32_1 = arith.constant 0 : i32
    return %arg1, %c0_i32, %c0_i32_0 : i32, i32, i32
  }
  func.func @transform_6(%arg0: i32, %arg1: i32) -> (i32, i32, i32) {
    %c0_i32 = arith.constant 0 : i32
    %c0_i32_0 = arith.constant 0 : i32
    %c0_i32_1 = arith.constant 0 : i32
    return %arg1, %c0_i32, %c0_i32_0 : i32, i32, i32
  }
  func.func @transform_7(%arg0: i32, %arg1: i32) -> (i32, i32, i32) {
    %c0_i32 = arith.constant 0 : i32
    %c0_i32_0 = arith.constant 0 : i32
    %c0_i32_1 = arith.constant 0 : i32
    return %arg1, %c0_i32, %c0_i32_0 : i32, i32, i32
  }
  func.func @transform_8(%arg0: i32, %arg1: i32) -> (i32, i32, i32) {
    %c0_i32 = arith.constant 0 : i32
    %c0_i32_0 = arith.constant 0 : i32
    %c0_i32_1 = arith.constant 0 : i32
    return %arg1, %c0_i32, %c0_i32_0 : i32, i32, i32
  }
  func.func @transform_9(%arg0: i32, %arg1: i32) -> (i32, i32, i32) {
    %c0_i32 = arith.constant 0 : i32
    %c0_i32_0 = arith.constant 0 : i32
    %c0_i32_1 = arith.constant 0 : i32
    return %arg1, %c0_i32, %c0_i32_0 : i32, i32, i32
  }
  func.func @transform_10(%arg0: i32, %arg1: i32) -> (i32, i32, i32) {
    %c0_i32 = arith.constant 0 : i32
    %c0_i32_0 = arith.constant 0 : i32
    %c0_i32_1 = arith.constant 0 : i32
    return %arg1, %c0_i32, %c0_i32_0 : i32, i32, i32
  }
  func.func @transform_11(%arg0: i32, %arg1: i32) -> (i32, i32, i32) {
    %c0_i32 = arith.constant 0 : i32
    %c0_i32_0 = arith.constant 0 : i32
    %c0_i32_1 = arith.constant 0 : i32
    return %arg1, %c0_i32, %c0_i32_0 : i32, i32, i32
  }
  func.func @transform_12(%arg0: i32, %arg1: i32) -> (i32, i32, i32) {
    %c0_i32 = arith.constant 0 : i32
    %c0_i32_0 = arith.constant 0 : i32
    %c0_i32_1 = arith.constant 0 : i32
    return %arg1, %c0_i32, %c0_i32_0 : i32, i32, i32
  }
  func.func @transform_13(%arg0: i32, %arg1: i32) -> (i32, i32, i32) {
    %c0_i32 = arith.constant 0 : i32
    %c0_i32_0 = arith.constant 0 : i32
    %c0_i32_1 = arith.constant 0 : i32
    return %arg1, %c0_i32, %c0_i32_0 : i32, i32, i32
  }
  func.func @transform_14(%arg0: i32, %arg1: i32) -> (i32, i32, i32) {
    %c0_i32 = arith.constant 0 : i32
    %c0_i32_0 = arith.constant 0 : i32
    %c0_i32_1 = arith.constant 0 : i32
    return %arg1, %c0_i32, %c0_i32_0 : i32, i32, i32
  }
  func.func @transform_15(%arg0: i32, %arg1: i32) -> (i32, i32, i32) {
    %c0_i32 = arith.constant 0 : i32
    %c0_i32_0 = arith.constant 0 : i32
    %c0_i32_1 = arith.constant 0 : i32
    return %arg1, %c0_i32, %c0_i32_0 : i32, i32, i32
  }
  func.func @transform_16(%arg0: i32, %arg1: i32) -> (i32, i32, i32) {
    %c0_i32 = arith.constant 0 : i32
    %c0_i32_0 = arith.constant 0 : i32
    %c0_i32_1 = arith.constant 0 : i32
    return %arg1, %c0_i32, %c0_i32_0 : i32, i32, i32
  }
  func.func @transform_17(%arg0: i32, %arg1: i32) -> (i32, i32, i32) {
    %c0_i32 = arith.constant 0 : i32
    %c0_i32_0 = arith.constant 0 : i32
    %c0_i32_1 = arith.constant 0 : i32
    return %arg1, %c0_i32, %c0_i32_0 : i32, i32, i32
  }
  func.func @transform_18(%arg0: i32, %arg1: i32) -> (i32, i32, i32) {
    %c0_i32 = arith.constant 0 : i32
    %c0_i32_0 = arith.constant 0 : i32
    %c0_i32_1 = arith.constant 0 : i32
    return %arg1, %c0_i32, %c0_i32_0 : i32, i32, i32
  }
  func.func @transform_19(%arg0: i32, %arg1: i32) -> (i32, i32) {
    %c0_i32 = arith.constant 0 : i32
    %c0_i32_0 = arith.constant 0 : i32
    %c0_i32_1 = arith.constant 0 : i32
    return %c0_i32, %c0_i32_0 : i32, i32
  }
  func.func @transform_20(%arg0: i32, %arg1: i32) -> (i32, i32) {
    %c0_i32 = arith.constant 0 : i32
    %c0_i32_0 = arith.constant 0 : i32
    %c0_i32_1 = arith.constant 0 : i32
    return %c0_i32, %c0_i32_0 : i32, i32
  }
  func.func @transform_21(%arg0: i32, %arg1: i32) -> (i32, i32) {
    %c0_i32 = arith.constant 0 : i32
    %c0_i32_0 = arith.constant 0 : i32
    %c0_i32_1 = arith.constant 0 : i32
    return %c0_i32, %c0_i32_0 : i32, i32
  }
  func.func @transform_22(%arg0: i32, %arg1: i32) -> (i32, i32) {
    %c0_i32 = arith.constant 0 : i32
    %c0_i32_0 = arith.constant 0 : i32
    %c0_i32_1 = arith.constant 0 : i32
    return %c0_i32, %c0_i32_0 : i32, i32
  }
  func.func @transform_23(%arg0: i32, %arg1: i32) -> (i32, i32, i32) {
    %c0_i32 = arith.constant 0 : i32
    %c0_i32_0 = arith.constant 0 : i32
    %c0_i32_1 = arith.constant 0 : i32
    return %arg0, %c0_i32, %c0_i32_0 : i32, i32, i32
  }
}

</mosaic_0001>

<llo_original>
// kernel: forward_virtual.1
$region0: #{forward_virtual.1}
  #allocation0 [shape = 'u32[]', space=smem, size = 0x4, offset = 0x4, fixed_abs, tag = 'smem constant byte address 0x4 - core index']
  #allocation1 [shape = 'u32[144,128]{1,0:T(1,128)}', space=vmem, size = 0x12000, scoped, tag = 'internal scratch']
  #allocation2 [shape = 'f32[8,128]{1,0:T(8,128)}', space=vmem, size = 0x1000, scoped, tag = 'scratch operand']
  %s0 = inlined_call_operand.vmem [shape: f32[2,8,128], index: 0, kind: input, shape index: {}]
  %s1 = inlined_call_operand.vmem [shape: f32[2,1,8], index: 1, kind: input, shape index: {}]
  %s2 = inlined_call_operand.vmem [shape: f32[2,2,8], index: 2, kind: input, shape index: {}]
  %s3 = inlined_call_operand.hbm [shape: bf16[2,128,128], index: 3, kind: input, shape index: {}]
  %s4 = inlined_call_operand.vmem [shape: f32[2,1,128], index: 4, kind: input, shape index: {}]
  %s5 = inlined_call_operand.hbm [shape: bf16[2,128,128], index: 5, kind: input, shape index: {}]
  %s6 = inlined_call_operand.vmem [shape: f32[2,1,128], index: 6, kind: input, shape index: {}]
  %s7 = inlined_call_operand.hbm [shape: bf16[2,128,128], index: 7, kind: input, shape index: {}]
  %s8 = inlined_call_operand.vmem [shape: f32[2,1,128], index: 8, kind: input, shape index: {}]
  %s9 = inlined_call_operand.hbm [shape: bf16[2,128,128], index: 9, kind: input, shape index: {}]
  %s10 = inlined_call_operand.vmem [shape: f32[2,1,128], index: 10, kind: input, shape index: {}]
  %s11 = inlined_call_operand.vmem [shape: f32[2,1,128], index: 11, kind: input, shape index: {}]
  %s12 = inlined_call_operand.vmem [shape: f32[2,1,128], index: 12, kind: input, shape index: {}]
  %s13 = inlined_call_operand.vmem [shape: bf16[2,128,512], index: 13, kind: input, shape index: {}]
  %s14 = inlined_call_operand.vmem [shape: f32[2,1,512], index: 14, kind: input, shape index: {}]
  %s15 = inlined_call_operand.hbm [shape: bf16[2,512,128], index: 15, kind: input, shape index: {}]
  %s16 = inlined_call_operand.vmem [shape: f32[2,1,128], index: 16, kind: input, shape index: {}]
  %s17 = inlined_call_operand.vmem [shape: f32[2,1,128], index: 17, kind: input, shape index: {}]
  %s18 = inlined_call_operand.vmem [shape: f32[2,1,128], index: 18, kind: input, shape index: {}]
  %s19 = inlined_call_operand.vmem [shape: bf16[256,32], index: 19, kind: input, shape index: {}]
  %s20 = inlined_call_operand.vmem [shape: f32[1,32], index: 20, kind: input, shape index: {}]
  %s21 = inlined_call_operand.vmem [shape: bf16[32,4], index: 21, kind: input, shape index: {}]
  %s22 = inlined_call_operand.vmem [shape: f32[1,4], index: 22, kind: input, shape index: {}]
  %s23 = inlined_call_operand.vmem [shape: f32[2,1,128], index: 23, kind: output, shape index: {}]
  %s24 = sld [smem:[#allocation0]]
  $region153: #{forward_virtual.1} parent=0
    _
  %s26 = ssub.s32 1, %s24
  %s27 = scalar_select 0, %s26, %s24
  $region1: #{forward_virtual.1} parent=0
    #allocation3 [shape = 'u8[65536]{0}', space=vmem, size = 0x10000, scoped, tag = 'input window, operand 3']
    #allocation4 [shape = 's32[2]{0}', space=sflag, size = 0x8, scoped, tag = 'scoped memory for forward_virtual.1']
    #allocation5 [shape = 'u8[65536]{0}', space=vmem, size = 0x10000, scoped, tag = 'input window, operand 5']
    #allocation6 [shape = 's32[2]{0}', space=sflag, size = 0x8, scoped, tag = 'scoped memory for forward_virtual.1']
    #allocation7 [shape = 'u8[65536]{0}', space=vmem, size = 0x10000, scoped, tag = 'input window, operand 7']
    #allocation8 [shape = 'u8[65536]{0}', space=vmem, size = 0x10000, scoped, tag = 'input window, operand 9']
    #allocation9 [shape = 's32[2]{0}', space=sflag, size = 0x8, scoped, tag = 'scoped memory for forward_virtual.1']
    #allocation10 [shape = 'u8[262144]{0}', space=vmem, size = 0x40000, scoped, tag = 'input window, operand 15']
    %28 = vsyncpa [#allocation4], 0
    %s29 = scalar_lea.sflag [#allocation4], 1
    %30 = vsyncpa %s29, 0
    %31 = vsyncpa [#allocation6], 0
    %s32 = scalar_lea.sflag [#allocation6], 1
    %33 = vsyncpa %s32, 0
    %34 = vsyncpa [#allocation9], 0
    %s35 = scalar_lea.sflag [#allocation9], 1
    %36 = vsyncpa %s35, 0
    loop: start=0, step=1, limit=6
    $region2: #{forward_virtual.1} parent=1 // loop_pre_header
      _
    $region3: #{forward_virtual.1} parent=1 // loop_header
      %s38 = sphi 0, %s42
      %p39 = scmp.ge.s32.totalorder %s38, 6
      %s45 = sphi 0, %s57
      %s46 = sphi 0, %s53
      %s47 = sphi 0, %s45
      %s48 = sphi 0, %s46
      %s49 = sphi 0, %s47
      %s50 = sphi 0, %s48
      %s60 = sphi 0, %s62
      %s63 = sphi 0, %s60
      %s64 = sphi 0, %s63
      %s80 = sphi 0, %s64
      %s86 = sphi 0, %s88
      %s89 = sphi 0, %s86
      %s90 = sphi 0, %s89
      %s106 = sphi 0, %s90
      %s112 = sphi 0, %s114
      %s115 = sphi 0, %s112
      %s116 = sphi 0, %s115
      %s132 = sphi 0, %s116
      %s138 = sphi 0, %s140
      %s141 = sphi 0, %s138
      %s142 = sphi 0, %s141
      %s158 = sphi 0, %s142
      %s164 = sphi 0, %s166
      %s167 = sphi 0, %s164
      %s168 = sphi 0, %s167
      %s184 = sphi 0, %s168
      %s190 = sphi 0, %s192
      %s193 = sphi 0, %s190
      %s194 = sphi 0, %s193
      %s210 = sphi 0, %s194
      %s216 = sphi 0, %s218
      %s219 = sphi 0, %s216
      %s220 = sphi 0, %s219
      %s236 = sphi 0, %s220
      %s242 = sphi 0, %s244
      %s245 = sphi 0, %s242
      %s246 = sphi 0, %s245
      %s262 = sphi 0, %s246
      %s268 = sphi 0, %s270
      %s271 = sphi 0, %s268
      %s272 = sphi 0, %s271
      %s288 = sphi 0, %s272
      %s294 = sphi 0, %s296
      %s297 = sphi 0, %s294
      %s298 = sphi 0, %s297
      %s314 = sphi 0, %s298
      %s320 = sphi 0, %s322
      %s323 = sphi 0, %s320
      %s324 = sphi 0, %s323
      %s340 = sphi 0, %s324
      %s346 = sphi 0, %s348
      %s349 = sphi 0, %s346
      %s350 = sphi 0, %s349
      %s366 = sphi 0, %s350
      %s372 = sphi 0, %s374
      %s375 = sphi 0, %s372
      %s376 = sphi 0, %s375
      %s392 = sphi 0, %s376
      %s398 = sphi 0, %s400
      %s401 = sphi 0, %s398
      %s402 = sphi 0, %s401
      %s418 = sphi 0, %s402
      %s424 = sphi 0, %s426
      %s427 = sphi 0, %s424
      %s428 = sphi 0, %s427
      %s444 = sphi 0, %s428
      %s450 = sphi 0, %s452
      %s453 = sphi 0, %s450
      %s454 = sphi 0, %s453
      %s470 = sphi 0, %s454
      %s476 = sphi 0, %s478
      %s479 = sphi 0, %s476
      %s480 = sphi 0, %s479
      %s496 = sphi 0, %s480
      %s502 = sphi 0, %s504
      %s505 = sphi 0, %s502
      %s506 = sphi 0, %s505
      %s522 = sphi 0, %s506
      %s528 = sphi 0, %s530
      %s531 = sphi 0, %s528
      %s532 = sphi 0, %s531
      %s548 = sphi 0, %s532
      %s552 = sphi 0, %s552
      %s554 = sphi 0, %s552
      %s555 = sphi 0, %s554
      %s569 = sphi 0, %s555
      %s573 = sphi 0, %s573
      %s575 = sphi 0, %s573
      %s576 = sphi 0, %s575
      %s590 = sphi 0, %s576
      %s594 = sphi 0, %s594
      %s596 = sphi 0, %s594
      %s597 = sphi 0, %s596
      %s611 = sphi 0, %s597
      %s615 = sphi 0, %s615
      %s617 = sphi 0, %s615
      %s618 = sphi 0, %s617
      %s632 = sphi 0, %s618
      %s638 = sphi 0, %s640
      %s641 = sphi 0, %s638
      %s642 = sphi 0, %s641
      %s658 = sphi 0, %s642
    $region4: #{forward_virtual.1} parent=1 // loop_header_branch
      %41 = sbr.rel (%p39) target = $region8
    $region5: #{forward_virtual.1} parent=1 // loop_body
      %s43 = ssub.s32 %s38, 1
      %s44 = ssub.s32 %s38, 2
      %s51 = sadd.s32 1, %s46
      %p52 = scmp.ge.s32.totalorder %s51, 2
      %s53 = scalar_select %p52, 0, %s51
      %s54 = sadd.s32 1, %s45
      %s55 = scalar_select %p52, %s54, %s45
      %p56 = scmp.ge.s32.totalorder %s55, 2
      %s57 = scalar_select %p56, 0, %s55
      %s58 = ssub.s32 %s45, %s57
      %p59 = scmp.eq.s32.totalorder %s58, 0
      %s61 = sadd.s32 %s60, 1
      %s62 = scalar_select %p59, %s60, %s61
      %p65 = pneg %p59
      %p66 = scmp.eq.s32.totalorder %s38, 3
      %p67 = por %p65, %p66
      %p68 = scmp.ne.s32.totalorder %s60, %s63
      %p69 = scmp.eq.s32.totalorder %s38, 0
      %p70 = por %p68, %p69
      %p71 = scmp.ne.s32.totalorder %s60, %s63
      %p72 = scmp.eq.s32.totalorder %s43, 3
      %p73 = por %p71, %p72
      %p74 = scmp.ne.s32.totalorder %s63, %s64
      %p75 = scmp.eq.s32.totalorder %s43, 0
      %p76 = por %p74, %p75
      %p77 = scmp.ne.s32.totalorder %s63, %s64
      %p78 = scmp.eq.s32.totalorder %s44, 3
      %p79 = por %p77, %p78
      %p81 = scmp.ne.s32.totalorder %s64, %s80
      %p82 = scmp.eq.s32.totalorder %s44, 0
      %p83 = por %p81, %p82
      %s84 = ssub.s32 %s45, %s57
      %p85 = scmp.eq.s32.totalorder %s84, 0
      %s87 = sadd.s32 %s86, 1
      %s88 = scalar_select %p85, %s86, %s87
      %p91 = pneg %p85
      %p92 = scmp.eq.s32.totalorder %s38, 3
      %p93 = por %p91, %p92
      %p94 = scmp.ne.s32.totalorder %s86, %s89
      %p95 = scmp.eq.s32.totalorder %s38, 0
      %p96 = por %p94, %p95
      %p97 = scmp.ne.s32.totalorder %s86, %s89
      %p98 = scmp.eq.s32.totalorder %s43, 3
      %p99 = por %p97, %p98
      %p100 = scmp.ne.s32.totalorder %s89, %s90
      %p101 = scmp.eq.s32.totalorder %s43, 0
      %p102 = por %p100, %p101
      %p103 = scmp.ne.s32.totalorder %s89, %s90
      %p104 = scmp.eq.s32.totalorder %s44, 3
      %p105 = por %p103, %p104
      %p107 = scmp.ne.s32.totalorder %s90, %s106
      %p108 = scmp.eq.s32.totalorder %s44, 0
      %p109 = por %p107, %p108
      %s110 = ssub.s32 %s45, %s57
      %p111 = scmp.eq.s32.totalorder %s110, 0
      %s113 = sadd.s32 %s112, 1
      %s114 = scalar_select %p111, %s112, %s113
      %p117 = pneg %p111
      %p118 = scmp.eq.s32.totalorder %s38, 3
      %p119 = por %p117, %p118
      %p120 = scmp.ne.s32.totalorder %s112, %s115
      %p121 = scmp.eq.s32.totalorder %s38, 0
      %p122 = por %p120, %p121
      %p123 = scmp.ne.s32.totalorder %s112, %s115
      %p124 = scmp.eq.s32.totalorder %s43, 3
      %p125 = por %p123, %p124
      %p126 = scmp.ne.s32.totalorder %s115, %s116
      %p127 = scmp.eq.s32.totalorder %s43, 0
      %p128 = por %p126, %p127
      %p129 = scmp.ne.s32.totalorder %s115, %s116
      %p130 = scmp.eq.s32.totalorder %s44, 3
      %p131 = por %p129, %p130
      %p133 = scmp.ne.s32.totalorder %s116, %s132
      %p134 = scmp.eq.s32.totalorder %s44, 0
      %p135 = por %p133, %p134
      %s136 = ssub.s32 %s46, %s53
      %p137 = scmp.eq.s32.totalorder %s136, 0
      %s139 = sadd.s32 %s138, 1
      %s140 = scalar_select %p137, %s138, %s139
      %p143 = pneg %p137
      %p144 = scmp.eq.s32.totalorder %s38, 3
      %p145 = por %p143, %p144
      %p146 = scmp.ne.s32.totalorder %s138, %s141
      %p147 = scmp.eq.s32.totalorder %s38, 0
      %p148 = por %p146, %p147
      %p149 = scmp.ne.s32.totalorder %s138, %s141
      %p150 = scmp.eq.s32.totalorder %s43, 3
      %p151 = por %p149, %p150
      %p152 = scmp.ne.s32.totalorder %s141, %s142
      %p153 = scmp.eq.s32.totalorder %s43, 0
      %p154 = por %p152, %p153
      %p155 = scmp.ne.s32.totalorder %s141, %s142
      %p156 = scmp.eq.s32.totalorder %s44, 3
      %p157 = por %p155, %p156
      %p159 = scmp.ne.s32.totalorder %s142, %s158
      %p160 = scmp.eq.s32.totalorder %s44, 0
      %p161 = por %p159, %p160
      %s162 = ssub.s32 %s46, %s53
      %p163 = scmp.eq.s32.totalorder %s162, 0
      %s165 = sadd.s32 %s164, 1
      %s166 = scalar_select %p163, %s164, %s165
      %p169 = pneg %p163
      %p170 = scmp.eq.s32.totalorder %s38, 3
      %p171 = por %p169, %p170
      %p172 = scmp.ne.s32.totalorder %s164, %s167
      %p173 = scmp.eq.s32.totalorder %s38, 0
      %p174 = por %p172, %p173
      %p175 = scmp.ne.s32.totalorder %s164, %s167
      %p176 = scmp.eq.s32.totalorder %s43, 3
      %p177 = por %p175, %p176
      %p178 = scmp.ne.s32.totalorder %s167, %s168
      %p179 = scmp.eq.s32.totalorder %s43, 0
      %p180 = por %p178, %p179
      %p181 = scmp.ne.s32.totalorder %s167, %s168
      %p182 = scmp.eq.s32.totalorder %s44, 3
      %p183 = por %p181, %p182
      %p185 = scmp.ne.s32.totalorder %s168, %s184
      %p186 = scmp.eq.s32.totalorder %s44, 0
      %p187 = por %p185, %p186
      %s188 = ssub.s32 %s46, %s53
      %p189 = scmp.eq.s32.totalorder %s188, 0
      %s191 = sadd.s32 %s190, 1
      %s192 = scalar_select %p189, %s190, %s191
      %p195 = pneg %p189
      %p196 = scmp.eq.s32.totalorder %s38, 3
      %p197 = por %p195, %p196
      %p198 = scmp.ne.s32.totalorder %s190, %s193
      %p199 = scmp.eq.s32.totalorder %s38, 0
      %p200 = por %p198, %p199
      %p201 = scmp.ne.s32.totalorder %s190, %s193
      %p202 = scmp.eq.s32.totalorder %s43, 3
      %p203 = por %p201, %p202
      %p204 = scmp.ne.s32.totalorder %s193, %s194
      %p205 = scmp.eq.s32.totalorder %s43, 0
      %p206 = por %p204, %p205
      %p207 = scmp.ne.s32.totalorder %s193, %s194
      %p208 = scmp.eq.s32.totalorder %s44, 3
      %p209 = por %p207, %p208
      %p211 = scmp.ne.s32.totalorder %s194, %s210
      %p212 = scmp.eq.s32.totalorder %s44, 0
      %p213 = por %p211, %p212
      %s214 = ssub.s32 %s46, %s53
      %p215 = scmp.eq.s32.totalorder %s214, 0
      %s217 = sadd.s32 %s216, 1
      %s218 = scalar_select %p215, %s216, %s217
      %p221 = pneg %p215
      %p222 = scmp.eq.s32.totalorder %s38, 3
      %p223 = por %p221, %p222
      %p224 = scmp.ne.s32.totalorder %s216, %s219
      %p225 = scmp.eq.s32.totalorder %s38, 0
      %p226 = por %p224, %p225
      %p227 = scmp.ne.s32.totalorder %s216, %s219
      %p228 = scmp.eq.s32.totalorder %s43, 3
      %p229 = por %p227, %p228
      %p230 = scmp.ne.s32.totalorder %s219, %s220
      %p231 = scmp.eq.s32.totalorder %s43, 0
      %p232 = por %p230, %p231
      %p233 = scmp.ne.s32.totalorder %s219, %s220
      %p234 = scmp.eq.s32.totalorder %s44, 3
      %p235 = por %p233, %p234
      %p237 = scmp.ne.s32.totalorder %s220, %s236
      %p238 = scmp.eq.s32.totalorder %s44, 0
      %p239 = por %p237, %p238
      %s240 = ssub.s32 %s46, %s53
      %p241 = scmp.eq.s32.totalorder %s240, 0
      %s243 = sadd.s32 %s242, 1
      %s244 = scalar_select %p241, %s242, %s243
      %p247 = pneg %p241
      %p248 = scmp.eq.s32.totalorder %s38, 3
      %p249 = por %p247, %p248
      %p250 = scmp.ne.s32.totalorder %s242, %s245
      %p251 = scmp.eq.s32.totalorder %s38, 0
      %p252 = por %p250, %p251
      %p253 = scmp.ne.s32.totalorder %s242, %s245
      %p254 = scmp.eq.s32.totalorder %s43, 3
      %p255 = por %p253, %p254
      %p256 = scmp.ne.s32.totalorder %s245, %s246
      %p257 = scmp.eq.s32.totalorder %s43, 0
      %p258 = por %p256, %p257
      %p259 = scmp.ne.s32.totalorder %s245, %s246
      %p260 = scmp.eq.s32.totalorder %s44, 3
      %p261 = por %p259, %p260
      %p263 = scmp.ne.s32.totalorder %s246, %s262
      %p264 = scmp.eq.s32.totalorder %s44, 0
      %p265 = por %p263, %p264
      %s266 = ssub.s32 %s46, %s53
      %p267 = scmp.eq.s32.totalorder %s266, 0
      %s269 = sadd.s32 %s268, 1
      %s270 = scalar_select %p267, %s268, %s269
      %p273 = pneg %p267
      %p274 = scmp.eq.s32.totalorder %s38, 3
      %p275 = por %p273, %p274
      %p276 = scmp.ne.s32.totalorder %s268, %s271
      %p277 = scmp.eq.s32.totalorder %s38, 0
      %p278 = por %p276, %p277
      %p279 = scmp.ne.s32.totalorder %s268, %s271
      %p280 = scmp.eq.s32.totalorder %s43, 3
      %p281 = por %p279, %p280
      %p282 = scmp.ne.s32.totalorder %s271, %s272
      %p283 = scmp.eq.s32.totalorder %s43, 0
      %p284 = por %p282, %p283
      %p285 = scmp.ne.s32.totalorder %s271, %s272
      %p286 = scmp.eq.s32.totalorder %s44, 3
      %p287 = por %p285, %p286
      %p289 = scmp.ne.s32.totalorder %s272, %s288
      %p290 = scmp.eq.s32.totalorder %s44, 0
      %p291 = por %p289, %p290
      %s292 = ssub.s32 %s46, %s53
      %p293 = scmp.eq.s32.totalorder %s292, 0
      %s295 = sadd.s32 %s294, 1
      %s296 = scalar_select %p293, %s294, %s295
      %p299 = pneg %p293
      %p300 = scmp.eq.s32.totalorder %s38, 3
      %p301 = por %p299, %p300
      %p302 = scmp.ne.s32.totalorder %s294, %s297
      %p303 = scmp.eq.s32.totalorder %s38, 0
      %p304 = por %p302, %p303
      %p305 = scmp.ne.s32.totalorder %s294, %s297
      %p306 = scmp.eq.s32.totalorder %s43, 3
      %p307 = por %p305, %p306
      %p308 = scmp.ne.s32.totalorder %s297, %s298
      %p309 = scmp.eq.s32.totalorder %s43, 0
      %p310 = por %p308, %p309
      %p311 = scmp.ne.s32.totalorder %s297, %s298
      %p312 = scmp.eq.s32.totalorder %s44, 3
      %p313 = por %p311, %p312
      %p315 = scmp.ne.s32.totalorder %s298, %s314
      %p316 = scmp.eq.s32.totalorder %s44, 0
      %p317 = por %p315, %p316
      %s318 = ssub.s32 %s46, %s53
      %p319 = scmp.eq.s32.totalorder %s318, 0
      %s321 = sadd.s32 %s320, 1
      %s322 = scalar_select %p319, %s320, %s321
      %p325 = pneg %p319
      %p326 = scmp.eq.s32.totalorder %s38, 3
      %p327 = por %p325, %p326
      %p328 = scmp.ne.s32.totalorder %s320, %s323
      %p329 = scmp.eq.s32.totalorder %s38, 0
      %p330 = por %p328, %p329
      %p331 = scmp.ne.s32.totalorder %s320, %s323
      %p332 = scmp.eq.s32.totalorder %s43, 3
      %p333 = por %p331, %p332
      %p334 = scmp.ne.s32.totalorder %s323, %s324
      %p335 = scmp.eq.s32.totalorder %s43, 0
      %p336 = por %p334, %p335
      %p337 = scmp.ne.s32.totalorder %s323, %s324
      %p338 = scmp.eq.s32.totalorder %s44, 3
      %p339 = por %p337, %p338
      %p341 = scmp.ne.s32.totalorder %s324, %s340
      %p342 = scmp.eq.s32.totalorder %s44, 0
      %p343 = por %p341, %p342
      %s344 = ssub.s32 %s46, %s53
      %p345 = scmp.eq.s32.totalorder %s344, 0
      %s347 = sadd.s32 %s346, 1
      %s348 = scalar_select %p345, %s346, %s347
      %p351 = pneg %p345
      %p352 = scmp.eq.s32.totalorder %s38, 3
      %p353 = por %p351, %p352
      %p354 = scmp.ne.s32.totalorder %s346, %s349
      %p355 = scmp.eq.s32.totalorder %s38, 0
      %p356 = por %p354, %p355
      %p357 = scmp.ne.s32.totalorder %s346, %s349
      %p358 = scmp.eq.s32.totalorder %s43, 3
      %p359 = por %p357, %p358
      %p360 = scmp.ne.s32.totalorder %s349, %s350
      %p361 = scmp.eq.s32.totalorder %s43, 0
      %p362 = por %p360, %p361
      %p363 = scmp.ne.s32.totalorder %s349, %s350
      %p364 = scmp.eq.s32.totalorder %s44, 3
      %p365 = por %p363, %p364
      %p367 = scmp.ne.s32.totalorder %s350, %s366
      %p368 = scmp.eq.s32.totalorder %s44, 0
      %p369 = por %p367, %p368
      %s370 = ssub.s32 %s46, %s53
      %p371 = scmp.eq.s32.totalorder %s370, 0
      %s373 = sadd.s32 %s372, 1
      %s374 = scalar_select %p371, %s372, %s373
      %p377 = pneg %p371
      %p378 = scmp.eq.s32.totalorder %s38, 3
      %p379 = por %p377, %p378
      %p380 = scmp.ne.s32.totalorder %s372, %s375
      %p381 = scmp.eq.s32.totalorder %s38, 0
      %p382 = por %p380, %p381
      %p383 = scmp.ne.s32.totalorder %s372, %s375
      %p384 = scmp.eq.s32.totalorder %s43, 3
      %p385 = por %p383, %p384
      %p386 = scmp.ne.s32.totalorder %s375, %s376
      %p387 = scmp.eq.s32.totalorder %s43, 0
      %p388 = por %p386, %p387
      %p389 = scmp.ne.s32.totalorder %s375, %s376
      %p390 = scmp.eq.s32.totalorder %s44, 3
      %p391 = por %p389, %p390
      %p393 = scmp.ne.s32.totalorder %s376, %s392
      %p394 = scmp.eq.s32.totalorder %s44, 0
      %p395 = por %p393, %p394
      %s396 = ssub.s32 %s46, %s53
      %p397 = scmp.eq.s32.totalorder %s396, 0
      %s399 = sadd.s32 %s398, 1
      %s400 = scalar_select %p397, %s398, %s399
      %p403 = pneg %p397
      %p404 = scmp.eq.s32.totalorder %s38, 3
      %p405 = por %p403, %p404
      %p406 = scmp.ne.s32.totalorder %s398, %s401
      %p407 = scmp.eq.s32.totalorder %s38, 0
      %p408 = por %p406, %p407
      %p409 = scmp.ne.s32.totalorder %s398, %s401
      %p410 = scmp.eq.s32.totalorder %s43, 3
      %p411 = por %p409, %p410
      %p412 = scmp.ne.s32.totalorder %s401, %s402
      %p413 = scmp.eq.s32.totalorder %s43, 0
      %p414 = por %p412, %p413
      %p415 = scmp.ne.s32.totalorder %s401, %s402
      %p416 = scmp.eq.s32.totalorder %s44, 3
      %p417 = por %p415, %p416
      %p419 = scmp.ne.s32.totalorder %s402, %s418
      %p420 = scmp.eq.s32.totalorder %s44, 0
      %p421 = por %p419, %p420
      %s422 = ssub.s32 %s46, %s53
      %p423 = scmp.eq.s32.totalorder %s422, 0
      %s425 = sadd.s32 %s424, 1
      %s426 = scalar_select %p423, %s424, %s425
      %p429 = pneg %p423
      %p430 = scmp.eq.s32.totalorder %s38, 3
      %p431 = por %p429, %p430
      %p432 = scmp.ne.s32.totalorder %s424, %s427
      %p433 = scmp.eq.s32.totalorder %s38, 0
      %p434 = por %p432, %p433
      %p435 = scmp.ne.s32.totalorder %s424, %s427
      %p436 = scmp.eq.s32.totalorder %s43, 3
      %p437 = por %p435, %p436
      %p438 = scmp.ne.s32.totalorder %s427, %s428
      %p439 = scmp.eq.s32.totalorder %s43, 0
      %p440 = por %p438, %p439
      %p441 = scmp.ne.s32.totalorder %s427, %s428
      %p442 = scmp.eq.s32.totalorder %s44, 3
      %p443 = por %p441, %p442
      %p445 = scmp.ne.s32.totalorder %s428, %s444
      %p446 = scmp.eq.s32.totalorder %s44, 0
      %p447 = por %p445, %p446
      %s448 = ssub.s32 %s46, %s53
      %p449 = scmp.eq.s32.totalorder %s448, 0
      %s451 = sadd.s32 %s450, 1
      %s452 = scalar_select %p449, %s450, %s451
      %p455 = pneg %p449
      %p456 = scmp.eq.s32.totalorder %s38, 3
      %p457 = por %p455, %p456
      %p458 = scmp.ne.s32.totalorder %s450, %s453
      %p459 = scmp.eq.s32.totalorder %s38, 0
      %p460 = por %p458, %p459
      %p461 = scmp.ne.s32.totalorder %s450, %s453
      %p462 = scmp.eq.s32.totalorder %s43, 3
      %p463 = por %p461, %p462
      %p464 = scmp.ne.s32.totalorder %s453, %s454
      %p465 = scmp.eq.s32.totalorder %s43, 0
      %p466 = por %p464, %p465
      %p467 = scmp.ne.s32.totalorder %s453, %s454
      %p468 = scmp.eq.s32.totalorder %s44, 3
      %p469 = por %p467, %p468
      %p471 = scmp.ne.s32.totalorder %s454, %s470
      %p472 = scmp.eq.s32.totalorder %s44, 0
      %p473 = por %p471, %p472
      %s474 = ssub.s32 %s46, %s53
      %p475 = scmp.eq.s32.totalorder %s474, 0
      %s477 = sadd.s32 %s476, 1
      %s478 = scalar_select %p475, %s476, %s477
      %p481 = pneg %p475
      %p482 = scmp.eq.s32.totalorder %s38, 3
      %p483 = por %p481, %p482
      %p484 = scmp.ne.s32.totalorder %s476, %s479
      %p485 = scmp.eq.s32.totalorder %s38, 0
      %p486 = por %p484, %p485
      %p487 = scmp.ne.s32.totalorder %s476, %s479
      %p488 = scmp.eq.s32.totalorder %s43, 3
      %p489 = por %p487, %p488
      %p490 = scmp.ne.s32.totalorder %s479, %s480
      %p491 = scmp.eq.s32.totalorder %s43, 0
      %p492 = por %p490, %p491
      %p493 = scmp.ne.s32.totalorder %s479, %s480
      %p494 = scmp.eq.s32.totalorder %s44, 3
      %p495 = por %p493, %p494
      %p497 = scmp.ne.s32.totalorder %s480, %s496
      %p498 = scmp.eq.s32.totalorder %s44, 0
      %p499 = por %p497, %p498
      %s500 = ssub.s32 %s46, %s53
      %p501 = scmp.eq.s32.totalorder %s500, 0
      %s503 = sadd.s32 %s502, 1
      %s504 = scalar_select %p501, %s502, %s503
      %p507 = pneg %p501
      %p508 = scmp.eq.s32.totalorder %s38, 3
      %p509 = por %p507, %p508
      %p510 = scmp.ne.s32.totalorder %s502, %s505
      %p511 = scmp.eq.s32.totalorder %s38, 0
      %p512 = por %p510, %p511
      %p513 = scmp.ne.s32.totalorder %s502, %s505
      %p514 = scmp.eq.s32.totalorder %s43, 3
      %p515 = por %p513, %p514
      %p516 = scmp.ne.s32.totalorder %s505, %s506
      %p517 = scmp.eq.s32.totalorder %s43, 0
      %p518 = por %p516, %p517
      %p519 = scmp.ne.s32.totalorder %s505, %s506
      %p520 = scmp.eq.s32.totalorder %s44, 3
      %p521 = por %p519, %p520
      %p523 = scmp.ne.s32.totalorder %s506, %s522
      %p524 = scmp.eq.s32.totalorder %s44, 0
      %p525 = por %p523, %p524
      %s526 = ssub.s32 %s46, %s53
      %p527 = scmp.eq.s32.totalorder %s526, 0
      %s529 = sadd.s32 %s528, 1
      %s530 = scalar_select %p527, %s528, %s529
      %p533 = pneg %p527
      %p534 = scmp.eq.s32.totalorder %s38, 3
      %p535 = por %p533, %p534
      %p536 = scmp.ne.s32.totalorder %s528, %s531
      %p537 = scmp.eq.s32.totalorder %s38, 0
      %p538 = por %p536, %p537
      %p539 = scmp.ne.s32.totalorder %s528, %s531
      %p540 = scmp.eq.s32.totalorder %s43, 3
      %p541 = por %p539, %p540
      %p542 = scmp.ne.s32.totalorder %s531, %s532
      %p543 = scmp.eq.s32.totalorder %s43, 0
      %p544 = por %p542, %p543
      %p545 = scmp.ne.s32.totalorder %s531, %s532
      %p546 = scmp.eq.s32.totalorder %s44, 3
      %p547 = por %p545, %p546
      %p549 = scmp.ne.s32.totalorder %s532, %s548
      %p550 = scmp.eq.s32.totalorder %s44, 0
      %p551 = por %p549, %p550
      %s553 = sadd.s32 %s552, 1
      %p556 = scmp.eq.s32.totalorder %s38, 3
      %p557 = scmp.ne.s32.totalorder %s552, %s554
      %p558 = scmp.eq.s32.totalorder %s38, 0
      %p559 = por %p557, %p558
      %p560 = scmp.ne.s32.totalorder %s552, %s554
      %p561 = scmp.eq.s32.totalorder %s43, 3
      %p562 = por %p560, %p561
      %p563 = scmp.ne.s32.totalorder %s554, %s555
      %p564 = scmp.eq.s32.totalorder %s43, 0
      %p565 = por %p563, %p564
      %p566 = scmp.ne.s32.totalorder %s554, %s555
      %p567 = scmp.eq.s32.totalorder %s44, 3
      %p568 = por %p566, %p567
      %p570 = scmp.ne.s32.totalorder %s555, %s569
      %p571 = scmp.eq.s32.totalorder %s44, 0
      %p572 = por %p570, %p571
      %s574 = sadd.s32 %s573, 1
      %p577 = scmp.eq.s32.totalorder %s38, 3
      %p578 = scmp.ne.s32.totalorder %s573, %s575
      %p579 = scmp.eq.s32.totalorder %s38, 0
      %p580 = por %p578, %p579
      %p581 = scmp.ne.s32.totalorder %s573, %s575
      %p582 = scmp.eq.s32.totalorder %s43, 3
      %p583 = por %p581, %p582
      %p584 = scmp.ne.s32.totalorder %s575, %s576
      %p585 = scmp.eq.s32.totalorder %s43, 0
      %p586 = por %p584, %p585
      %p587 = scmp.ne.s32.totalorder %s575, %s576
      %p588 = scmp.eq.s32.totalorder %s44, 3
      %p589 = por %p587, %p588
      %p591 = scmp.ne.s32.totalorder %s576, %s590
      %p592 = scmp.eq.s32.totalorder %s44, 0
      %p593 = por %p591, %p592
      %s595 = sadd.s32 %s594, 1
      %p598 = scmp.eq.s32.totalorder %s38, 3
      %p599 = scmp.ne.s32.totalorder %s594, %s596
      %p600 = scmp.eq.s32.totalorder %s38, 0
      %p601 = por %p599, %p600
      %p602 = scmp.ne.s32.totalorder %s594, %s596
      %p603 = scmp.eq.s32.totalorder %s43, 3
      %p604 = por %p602, %p603
      %p605 = scmp.ne.s32.totalorder %s596, %s597
      %p606 = scmp.eq.s32.totalorder %s43, 0
      %p607 = por %p605, %p606
      %p608 = scmp.ne.s32.totalorder %s596, %s597
      %p609 = scmp.eq.s32.totalorder %s44, 3
      %p610 = por %p608, %p609
      %p612 = scmp.ne.s32.totalorder %s597, %s611
      %p613 = scmp.eq.s32.totalorder %s44, 0
      %p614 = por %p612, %p613
      %s616 = sadd.s32 %s615, 1
      %p619 = scmp.eq.s32.totalorder %s38, 3
      %p620 = scmp.ne.s32.totalorder %s615, %s617
      %p621 = scmp.eq.s32.totalorder %s38, 0
      %p622 = por %p620, %p621
      %p623 = scmp.ne.s32.totalorder %s615, %s617
      %p624 = scmp.eq.s32.totalorder %s43, 3
      %p625 = por %p623, %p624
      %p626 = scmp.ne.s32.totalorder %s617, %s618
      %p627 = scmp.eq.s32.totalorder %s43, 0
      %p628 = por %p626, %p627
      %p629 = scmp.ne.s32.totalorder %s617, %s618
      %p630 = scmp.eq.s32.totalorder %s44, 3
      %p631 = por %p629, %p630
      %p633 = scmp.ne.s32.totalorder %s618, %s632
      %p634 = scmp.eq.s32.totalorder %s44, 0
      %p635 = por %p633, %p634
      %s636 = ssub.s32 %s45, %s57
      %p637 = scmp.eq.s32.totalorder %s636, 0
      %s639 = sadd.s32 %s638, 1
      %s640 = scalar_select %p637, %s638, %s639
      %p643 = pneg %p637
      %p644 = scmp.eq.s32.totalorder %s38, 3
      %p645 = por %p643, %p644
      %p646 = scmp.ne.s32.totalorder %s638, %s641
      %p647 = scmp.eq.s32.totalorder %s38, 0
      %p648 = por %p646, %p647
      %p649 = scmp.ne.s32.totalorder %s638, %s641
      %p650 = scmp.eq.s32.totalorder %s43, 3
      %p651 = por %p649, %p650
      %p652 = scmp.ne.s32.totalorder %s641, %s642
      %p653 = scmp.eq.s32.totalorder %s43, 0
      %p654 = por %p652, %p653
      %p655 = scmp.ne.s32.totalorder %s641, %s642
      %p656 = scmp.eq.s32.totalorder %s44, 3
      %p657 = por %p655, %p656
      %p659 = scmp.ne.s32.totalorder %s642, %s658
      %p660 = scmp.eq.s32.totalorder %s44, 0
      %p661 = por %p659, %p660
      %p662 = scmp.le.s32.totalorder 1, %s38
      %p663 = scmp.lt.s32.totalorder %s38, 5
      %p664 = pnand %p662, %p663
      %p665 = pneg %p664
      // Predicated region
      $region9: #{forward_virtual.1} parent=5 // pred_check
        _
      $region10: #{forward_virtual.1} parent=5 // pred_check_branch
        %667 = sbr.rel (%p664) target = $region12
      $region11: #{forward_virtual.1} parent=5 // pred_region
        %s668 = ssub.s32 %s38, 1
        // Predicated region
        $region13: #{forward_virtual.1} parent=11 // pred_check
          %p669 = pneg %p565
        $region14: #{forward_virtual.1} parent=11 // pred_check_branch
          %671 = sbr.rel (%p669) target = $region16
        $region15: #{forward_virtual.1} parent=11 // pred_region
          _
        $region16: #{forward_virtual.1} parent=11 // pred_fallthru
          _
        // Predicated region
        $region17: #{forward_virtual.1} parent=11 // pred_check
          %p672 = pneg %p586
        $region18: #{forward_virtual.1} parent=11 // pred_check_branch
          %674 = sbr.rel (%p672) target = $region20
        $region19: #{forward_virtual.1} parent=11 // pred_region
          _
        $region20: #{forward_virtual.1} parent=11 // pred_fallthru
          _
        // Predicated region
        $region21: #{forward_virtual.1} parent=11 // pred_check
          %p675 = pneg %p607
        $region22: #{forward_virtual.1} parent=11 // pred_check_branch
          %677 = sbr.rel (%p675) target = $region24
        $region23: #{forward_virtual.1} parent=11 // pred_region
          _
        $region24: #{forward_virtual.1} parent=11 // pred_fallthru
          _
        // Predicated region
        $region25: #{forward_virtual.1} parent=11 // pred_check
          %p678 = pneg %p628
        $region26: #{forward_virtual.1} parent=11 // pred_check_branch
          %680 = sbr.rel (%p678) target = $region28
        $region27: #{forward_virtual.1} parent=11 // pred_region
          _
        $region28: #{forward_virtual.1} parent=11 // pred_fallthru
          _
      $region12: #{forward_virtual.1} parent=5 // pred_fallthru
        _
      %p681 = scmp.lt.s32.totalorder %s38, 4
      // Predicated region
      $region29: #{forward_virtual.1} parent=5 // pred_check
        %p682 = pneg %p681
      $region30: #{forward_virtual.1} parent=5 // pred_check_branch
        %684 = sbr.rel (%p682) target = $region32
      $region31: #{forward_virtual.1} parent=5 // pred_region
        // Predicated region
        $region33: #{forward_virtual.1} parent=31 // pred_check
          %p685 = pneg %p70
        $region34: #{forward_virtual.1} parent=31 // pred_check_branch
          %687 = sbr.rel (%p685) target = $region36
        $region35: #{forward_virtual.1} parent=31 // pred_region
          %p688 = scmp.lt.s32.totalorder %s45, 1
          %s689 = scalar_select %p688, %s45, 1
          %s690 = smul.addr %s689, 8
          %s691 = scalar_lea.vmem %s0, %s690
        $region36: #{forward_virtual.1} parent=31 // pred_fallthru
          _
        // Predicated region
        $region37: #{forward_virtual.1} parent=31 // pred_check
          %p692 = pneg %p96
        $region38: #{forward_virtual.1} parent=31 // pred_check_branch
          %694 = sbr.rel (%p692) target = $region40
        $region39: #{forward_virtual.1} parent=31 // pred_region
          %p695 = scmp.lt.s32.totalorder %s45, 1
          %s696 = scalar_select %p695, %s45, 1
          %s697 = scalar_lea.vmem %s1, %s696
        $region40: #{forward_virtual.1} parent=31 // pred_fallthru
          _
        // Predicated region
        $region41: #{forward_virtual.1} parent=31 // pred_check
          %p698 = pneg %p122
        $region42: #{forward_virtual.1} parent=31 // pred_check_branch
          %700 = sbr.rel (%p698) target = $region44
        $region43: #{forward_virtual.1} parent=31 // pred_region
          %p701 = scmp.lt.s32.totalorder %s45, 1
          %s702 = scalar_select %p701, %s45, 1
          %s703 = smul.addr %s702, 2
          %s704 = scalar_lea.vmem %s2, %s703
        $region44: #{forward_virtual.1} parent=31 // pred_fallthru
          _
        // Predicated region
        $region45: #{forward_virtual.1} parent=31 // pred_check
          %p705 = pneg %p148
        $region46: #{forward_virtual.1} parent=31 // pred_check_branch
          %707 = sbr.rel (%p705) target = $region48
        $region47: #{forward_virtual.1} parent=31 // pred_region
          %s708 = sand.u32 %s138, 1
          %s709 = scalar_lea.sflag [#allocation4], %s708
          %s710 = sand.u32 %s138, 1
          %s711 = smul.addr %s710, 64
          %s712 = scalar_lea.vmem [#allocation3], %s711
          %s714 = ssub.s32 1024, 1024
          %715 = vsyncadd %s709, %s714
          %s716 = smul.addr %s46, 16
          %s717 = smul.addr %s716, 64
          %s718 = scalar_lea.hbm %s3, %s717
          %s719 = sshll.u32 %s712, 4
          %s720 = int_to_ptr.vmem [resolvable:$true] %s719
          %725 = dma.hbm_to_vmem [thread:$0]  %s718, 1024, %s720, %s709, 64, 64, 4
        $region48: #{forward_virtual.1} parent=31 // pred_fallthru
          _
        // Predicated region
        $region49: #{forward_virtual.1} parent=31 // pred_check
          %p726 = pneg %p174
        $region50: #{forward_virtual.1} parent=31 // pred_check_branch
          %728 = sbr.rel (%p726) target = $region52
        $region51: #{forward_virtual.1} parent=31 // pred_region
          %p729 = scmp.lt.s32.totalorder %s46, 1
          %s730 = scalar_select %p729, %s46, 1
          %s731 = scalar_lea.vmem %s4, %s730
        $region52: #{forward_virtual.1} parent=31 // pred_fallthru
          _
        // Predicated region
        $region53: #{forward_virtual.1} parent=31 // pred_check
          %p732 = pneg %p200
        $region54: #{forward_virtual.1} parent=31 // pred_check_branch
          %734 = sbr.rel (%p732) target = $region56
        $region55: #{forward_virtual.1} parent=31 // pred_region
          %s735 = sand.u32 %s38, 1
          %s736 = scalar_lea.sflag [#allocation6], %s735
          %s737 = sand.u32 %s190, 1
          %s738 = smul.addr %s737, 64
          %s739 = scalar_lea.vmem [#allocation5], %s738
          %s741 = ssub.s32 1024, 1024
          %742 = vsyncadd %s736, %s741
          %s743 = smul.addr %s46, 16
          %s744 = smul.addr %s743, 64
          %s745 = scalar_lea.hbm %s5, %s744
          %s746 = sshll.u32 %s739, 4
          %s747 = int_to_ptr.vmem [resolvable:$true] %s746
          %752 = dma.hbm_to_vmem [thread:$0]  %s745, 1024, %s747, %s736, 64, 64, 4
        $region56: #{forward_virtual.1} parent=31 // pred_fallthru
          _
        // Predicated region
        $region57: #{forward_virtual.1} parent=31 // pred_check
          %p753 = pneg %p226
        $region58: #{forward_virtual.1} parent=31 // pred_check_branch
          %755 = sbr.rel (%p753) target = $region60
        $region59: #{forward_virtual.1} parent=31 // pred_region
          %p756 = scmp.lt.s32.totalorder %s46, 1
          %s757 = scalar_select %p756, %s46, 1
          %s758 = scalar_lea.vmem %s6, %s757
        $region60: #{forward_virtual.1} parent=31 // pred_fallthru
          _
        // Predicated region
        $region61: #{forward_virtual.1} parent=31 // pred_check
          %p759 = pneg %p252
        $region62: #{forward_virtual.1} parent=31 // pred_check_branch
          %761 = sbr.rel (%p759) target = $region64
        $region63: #{forward_virtual.1} parent=31 // pred_region
          %s762 = sand.u32 %s38, 1
          %s763 = scalar_lea.sflag [#allocation6], %s762
          %s764 = sand.u32 %s242, 1
          %s765 = smul.addr %s764, 64
          %s766 = scalar_lea.vmem [#allocation7], %s765
          %s768 = ssub.s32 1024, 1024
          %769 = vsyncadd %s763, %s768
          %s770 = smul.addr %s46, 16
          %s771 = smul.addr %s770, 64
          %s772 = scalar_lea.hbm %s7, %s771
          %s773 = sshll.u32 %s766, 4
          %s774 = int_to_ptr.vmem [resolvable:$true] %s773
          %779 = dma.hbm_to_vmem [thread:$0]  %s772, 1024, %s774, %s763, 64, 64, 4
        $region64: #{forward_virtual.1} parent=31 // pred_fallthru
          _
        // Predicated region
        $region65: #{forward_virtual.1} parent=31 // pred_check
          %p780 = pneg %p278
        $region66: #{forward_virtual.1} parent=31 // pred_check_branch
          %782 = sbr.rel (%p780) target = $region68
        $region67: #{forward_virtual.1} parent=31 // pred_region
          %p783 = scmp.lt.s32.totalorder %s46, 1
          %s784 = scalar_select %p783, %s46, 1
          %s785 = scalar_lea.vmem %s8, %s784
        $region68: #{forward_virtual.1} parent=31 // pred_fallthru
          _
        // Predicated region
        $region69: #{forward_virtual.1} parent=31 // pred_check
          %p786 = pneg %p304
        $region70: #{forward_virtual.1} parent=31 // pred_check_branch
          %788 = sbr.rel (%p786) target = $region72
        $region71: #{forward_virtual.1} parent=31 // pred_region
          %s789 = sand.u32 %s38, 1
          %s790 = scalar_lea.sflag [#allocation9], %s789
          %s791 = sand.u32 %s294, 1
          %s792 = smul.addr %s791, 64
          %s793 = scalar_lea.vmem [#allocation8], %s792
          %s795 = ssub.s32 1024, 1024
          %796 = vsyncadd %s790, %s795
          %s797 = smul.addr %s46, 16
          %s798 = smul.addr %s797, 64
          %s799 = scalar_lea.hbm %s9, %s798
          %s800 = sshll.u32 %s793, 4
          %s801 = int_to_ptr.vmem [resolvable:$true] %s800
          %806 = dma.hbm_to_vmem [thread:$0]  %s799, 1024, %s801, %s790, 64, 64, 4
        $region72: #{forward_virtual.1} parent=31 // pred_fallthru
          _
        // Predicated region
        $region73: #{forward_virtual.1} parent=31 // pred_check
          %p807 = pneg %p330
        $region74: #{forward_virtual.1} parent=31 // pred_check_branch
          %809 = sbr.rel (%p807) target = $region76
        $region75: #{forward_virtual.1} parent=31 // pred_region
          %p810 = scmp.lt.s32.totalorder %s46, 1
          %s811 = scalar_select %p810, %s46, 1
          %s812 = scalar_lea.vmem %s10, %s811
        $region76: #{forward_virtual.1} parent=31 // pred_fallthru
          _
        // Predicated region
        $region77: #{forward_virtual.1} parent=31 // pred_check
          %p813 = pneg %p356
        $region78: #{forward_virtual.1} parent=31 // pred_check_branch
          %815 = sbr.rel (%p813) target = $region80
        $region79: #{forward_virtual.1} parent=31 // pred_region
          %p816 = scmp.lt.s32.totalorder %s46, 1
          %s817 = scalar_select %p816, %s46, 1
          %s818 = scalar_lea.vmem %s11, %s817
        $region80: #{forward_virtual.1} parent=31 // pred_fallthru
          _
        // Predicated region
        $region81: #{forward_virtual.1} parent=31 // pred_check
          %p819 = pneg %p382
        $region82: #{forward_virtual.1} parent=31 // pred_check_branch
          %821 = sbr.rel (%p819) target = $region84
        $region83: #{forward_virtual.1} parent=31 // pred_region
          %p822 = scmp.lt.s32.totalorder %s46, 1
          %s823 = scalar_select %p822, %s46, 1
          %s824 = scalar_lea.vmem %s12, %s823
        $region84: #{forward_virtual.1} parent=31 // pred_fallthru
          _
        // Predicated region
        $region85: #{forward_virtual.1} parent=31 // pred_check
          %p825 = pneg %p408
        $region86: #{forward_virtual.1} parent=31 // pred_check_branch
          %827 = sbr.rel (%p825) target = $region88
        $region87: #{forward_virtual.1} parent=31 // pred_region
          %p828 = scmp.lt.s32.totalorder %s46, 1
          %s829 = scalar_select %p828, %s46, 1
          %s830 = smul.addr %s829, 64
          %s831 = smul.addr %s830, 4
          %s832 = scalar_lea.vmem %s13, %s831
        $region88: #{forward_virtual.1} parent=31 // pred_fallthru
          _
        // Predicated region
        $region89: #{forward_virtual.1} parent=31 // pred_check
          %p833 = pneg %p434
        $region90: #{forward_virtual.1} parent=31 // pred_check_branch
          %835 = sbr.rel (%p833) target = $region92
        $region91: #{forward_virtual.1} parent=31 // pred_region
          %p836 = scmp.lt.s32.totalorder %s46, 1
          %s837 = scalar_select %p836, %s46, 1
          %s838 = smul.addr %s837, 4
          %s839 = scalar_lea.vmem %s14, %s838
        $region92: #{forward_virtual.1} parent=31 // pred_fallthru
          _
        // Predicated region
        $region93: #{forward_virtual.1} parent=31 // pred_check
          %p840 = pneg %p460
        $region94: #{forward_virtual.1} parent=31 // pred_check_branch
          %842 = sbr.rel (%p840) target = $region96
        $region95: #{forward_virtual.1} parent=31 // pred_region
          %s843 = sand.u32 %s38, 1
          %s844 = scalar_lea.sflag [#allocation9], %s843
          %s845 = sand.u32 %s450, 1
          %s846 = smul.addr %s845, 256
          %s847 = scalar_lea.vmem [#allocation10], %s846
          %s849 = ssub.s32 4096, 4096
          %850 = vsyncadd %s844, %s849
          %s851 = smul.addr %s46, 64
          %s852 = smul.addr %s851, 64
          %s853 = scalar_lea.hbm %s15, %s852
          %s854 = sshll.u32 %s847, 4
          %s855 = int_to_ptr.vmem [resolvable:$true] %s854
          %860 = dma.hbm_to_vmem [thread:$0]  %s853, 4096, %s855, %s844, 64, 64, 4
        $region96: #{forward_virtual.1} parent=31 // pred_fallthru
          _
        // Predicated region
        $region97: #{forward_virtual.1} parent=31 // pred_check
          %p861 = pneg %p486
        $region98: #{forward_virtual.1} parent=31 // pred_check_branch
          %863 = sbr.rel (%p861) target = $region100
        $region99: #{forward_virtual.1} parent=31 // pred_region
          %p864 = scmp.lt.s32.totalorder %s46, 1
          %s865 = scalar_select %p864, %s46, 1
          %s866 = scalar_lea.vmem %s16, %s865
        $region100: #{forward_virtual.1} parent=31 // pred_fallthru
          _
        // Predicated region
        $region101: #{forward_virtual.1} parent=31 // pred_check
          %p867 = pneg %p512
        $region102: #{forward_virtual.1} parent=31 // pred_check_branch
          %869 = sbr.rel (%p867) target = $region104
        $region103: #{forward_virtual.1} parent=31 // pred_region
          %p870 = scmp.lt.s32.totalorder %s46, 1
          %s871 = scalar_select %p870, %s46, 1
          %s872 = scalar_lea.vmem %s17, %s871
        $region104: #{forward_virtual.1} parent=31 // pred_fallthru
          _
        // Predicated region
        $region105: #{forward_virtual.1} parent=31 // pred_check
          %p873 = pneg %p538
        $region106: #{forward_virtual.1} parent=31 // pred_check_branch
          %875 = sbr.rel (%p873) target = $region108
        $region107: #{forward_virtual.1} parent=31 // pred_region
          %p876 = scmp.lt.s32.totalorder %s46, 1
          %s877 = scalar_select %p876, %s46, 1
          %s878 = scalar_lea.vmem %s18, %s877
        $region108: #{forward_virtual.1} parent=31 // pred_fallthru
          _
      $region32: #{forward_virtual.1} parent=5 // pred_fallthru
        _
      %p879 = scmp.le.s32.totalorder 1, %s38
      %p880 = scmp.lt.s32.totalorder %s38, 5
      %p881 = pnand %p879, %p880
      %p882 = pneg %p881
      // Predicated region
      $region109: #{forward_virtual.1} parent=5 // pred_check
        _
      $region110: #{forward_virtual.1} parent=5 // pred_check_branch
        %884 = sbr.rel (%p881) target = $region112
      $region111: #{forward_virtual.1} parent=5 // pred_region
        %s885 = ssub.s32 %s38, 1
        %s886 = sand.u32 %s141, 1
        %s887 = scalar_lea.sflag [#allocation4], %s886
        %s888 = sand.u32 %s141, 1
        %s889 = smul.addr %s888, 64
        %s890 = scalar_lea.vmem [#allocation3], %s889
        // Predicated region
        $region113: #{forward_virtual.1} parent=111 // pred_check
          %p891 = pneg %p154
        $region114: #{forward_virtual.1} parent=111 // pred_check_branch
          %893 = sbr.rel (%p891) target = $region116
        $region115: #{forward_virtual.1} parent=111 // pred_region
          %894 = dma.done %s887, 1024
        $region116: #{forward_virtual.1} parent=111 // pred_fallthru
          _
        %s895 = sand.u32 %s43, 1
        %s896 = scalar_lea.sflag [#allocation6], %s895
        %s897 = sand.u32 %s193, 1
        %s898 = smul.addr %s897, 64
        %s899 = scalar_lea.vmem [#allocation5], %s898
        // Predicated region
        $region117: #{forward_virtual.1} parent=111 // pred_check
          %p900 = pneg %p206
        $region118: #{forward_virtual.1} parent=111 // pred_check_branch
          %902 = sbr.rel (%p900) target = $region120
        $region119: #{forward_virtual.1} parent=111 // pred_region
          %903 = dma.done %s896, 1024
        $region120: #{forward_virtual.1} parent=111 // pred_fallthru
          _
        %s904 = sand.u32 %s43, 1
        %s905 = scalar_lea.sflag [#allocation6], %s904
        %s906 = sand.u32 %s245, 1
        %s907 = smul.addr %s906, 64
        %s908 = scalar_lea.vmem [#allocation7], %s907
        // Predicated region
        $region121: #{forward_virtual.1} parent=111 // pred_check
          %p909 = pneg %p258
        $region122: #{forward_virtual.1} parent=111 // pred_check_branch
          %911 = sbr.rel (%p909) target = $region124
        $region123: #{forward_virtual.1} parent=111 // pred_region
          %912 = dma.done %s905, 1024
        $region124: #{forward_virtual.1} parent=111 // pred_fallthru
          _
        %s913 = sand.u32 %s43, 1
        %s914 = scalar_lea.sflag [#allocation9], %s913
        %s915 = sand.u32 %s297, 1
        %s916 = smul.addr %s915, 64
        %s917 = scalar_lea.vmem [#allocation8], %s916
        // Predicated region
        $region125: #{forward_virtual.1} parent=111 // pred_check
          %p918 = pneg %p310
        $region126: #{forward_virtual.1} parent=111 // pred_check_branch
          %920 = sbr.rel (%p918) target = $region128
        $region127: #{forward_virtual.1} parent=111 // pred_region
          %921 = dma.done %s914, 1024
        $region128: #{forward_virtual.1} parent=111 // pred_fallthru
          _
        %s922 = sand.u32 %s43, 1
        %s923 = scalar_lea.sflag [#allocation9], %s922
        %s924 = sand.u32 %s453, 1
        %s925 = smul.addr %s924, 256
        %s926 = scalar_lea.vmem [#allocation10], %s925
        // Predicated region
        $region129: #{forward_virtual.1} parent=111 // pred_check
          %p927 = pneg %p466
        $region130: #{forward_virtual.1} parent=111 // pred_check_branch
          %929 = sbr.rel (%p927) target = $region132
        $region131: #{forward_virtual.1} parent=111 // pred_region
          %930 = dma.done %s923, 4096
        $region132: #{forward_virtual.1} parent=111 // pred_fallthru
          _
        %p931 = scmp.lt.s32.totalorder %s47, 1
        %s932 = scalar_select %p931, %s47, 1
        %s933 = smul.addr %s932, 8
        %s934 = scalar_lea.vmem %s0, %s933
        %p935 = pneg %p76
        %p936 = pneg %p73
        %p937 = scmp.lt.s32.totalorder %s47, 1
        %s938 = scalar_select %p937, %s47, 1
        %s939 = scalar_lea.vmem %s1, %s938
        %p940 = pneg %p102
        %p941 = pneg %p99
        %p942 = scmp.lt.s32.totalorder %s47, 1
        %s943 = scalar_select %p942, %s47, 1
        %s944 = smul.addr %s943, 2
        %s945 = scalar_lea.vmem %s2, %s944
        %p946 = pneg %p128
        %p947 = pneg %p125
        %s948 = sand.u32 %s141, 1
        %s949 = scalar_lea.sflag [#allocation4], %s948
        %s950 = sand.u32 %s141, 1
        %s951 = smul.addr %s950, 64
        %s952 = scalar_lea.vmem [#allocation3], %s951
        %p953 = pneg %p154
        %p954 = pneg %p151
        %p955 = scmp.lt.s32.totalorder %s48, 1
        %s956 = scalar_select %p955, %s48, 1
        %s957 = scalar_lea.vmem %s4, %s956
        %p958 = pneg %p180
        %p959 = pneg %p177
        %s960 = sand.u32 %s43, 1
        %s961 = scalar_lea.sflag [#allocation6], %s960
        %s962 = sand.u32 %s193, 1
        %s963 = smul.addr %s962, 64
        %s964 = scalar_lea.vmem [#allocation5], %s963
        %p965 = pneg %p206
        %p966 = pneg %p203
        %p967 = scmp.lt.s32.totalorder %s48, 1
        %s968 = scalar_select %p967, %s48, 1
        %s969 = scalar_lea.vmem %s6, %s968
        %p970 = pneg %p232
        %p971 = pneg %p229
        %s972 = sand.u32 %s43, 1
        %s973 = scalar_lea.sflag [#allocation6], %s972
        %s974 = sand.u32 %s245, 1
        %s975 = smul.addr %s974, 64
        %s976 = scalar_lea.vmem [#allocation7], %s975
        %p977 = pneg %p258
        %p978 = pneg %p255
        %p979 = scmp.lt.s32.totalorder %s48, 1
        %s980 = scalar_select %p979, %s48, 1
        %s981 = scalar_lea.vmem %s8, %s980
        %p982 = pneg %p284
        %p983 = pneg %p281
        %s984 = sand.u32 %s43, 1
        %s985 = scalar_lea.sflag [#allocation9], %s984
        %s986 = sand.u32 %s297, 1
        %s987 = smul.addr %s986, 64
        %s988 = scalar_lea.vmem [#allocation8], %s987
        %p989 = pneg %p310
        %p990 = pneg %p307
        %p991 = scmp.lt.s32.totalorder %s48, 1
        %s992 = scalar_select %p991, %s48, 1
        %s993 = scalar_lea.vmem %s10, %s992
        %p994 = pneg %p336
        %p995 = pneg %p333
        %p996 = scmp.lt.s32.totalorder %s48, 1
        %s997 = scalar_select %p996, %s48, 1
        %s998 = scalar_lea.vmem %s11, %s997
        %p999 = pneg %p362
        %p1000 = pneg %p359
        %p1001 = scmp.lt.s32.totalorder %s48, 1
        %s1002 = scalar_select %p1001, %s48, 1
        %s1003 = scalar_lea.vmem %s12, %s1002
        %p1004 = pneg %p388
        %p1005 = pneg %p385
        %p1006 = scmp.lt.s32.totalorder %s48, 1
        %s1007 = scalar_select %p1006, %s48, 1
        %s1008 = smul.addr %s1007, 64
        %s1009 = smul.addr %s1008, 4
        %s1010 = scalar_lea.vmem %s13, %s1009
        %p1011 = pneg %p414
        %p1012 = pneg %p411
        %p1013 = scmp.lt.s32.totalorder %s48, 1
        %s1014 = scalar_select %p1013, %s48, 1
        %s1015 = smul.addr %s1014, 4
        %s1016 = scalar_lea.vmem %s14, %s1015
        %p1017 = pneg %p440
        %p1018 = pneg %p437
        %s1019 = sand.u32 %s43, 1
        %s1020 = scalar_lea.sflag [#allocation9], %s1019
        %s1021 = sand.u32 %s453, 1
        %s1022 = smul.addr %s1021, 256
        %s1023 = scalar_lea.vmem [#allocation10], %s1022
        %p1024 = pneg %p466
        %p1025 = pneg %p463
        %p1026 = scmp.lt.s32.totalorder %s48, 1
        %s1027 = scalar_select %p1026, %s48, 1
        %s1028 = scalar_lea.vmem %s16, %s1027
        %p1029 = pneg %p492
        %p1030 = pneg %p489
        %p1031 = scmp.lt.s32.totalorder %s48, 1
        %s1032 = scalar_select %p1031, %s48, 1
        %s1033 = scalar_lea.vmem %s17, %s1032
        %p1034 = pneg %p518
        %p1035 = pneg %p515
        %p1036 = scmp.lt.s32.totalorder %s48, 1
        %s1037 = scalar_select %p1036, %s48, 1
        %s1038 = scalar_lea.vmem %s18, %s1037
        %p1039 = pneg %p544
        %p1040 = pneg %p541
        %p1041 = pneg %p565
        %p1042 = pneg %p562
        %p1043 = pneg %p586
        %p1044 = pneg %p583
        %p1045 = pneg %p607
        %p1046 = pneg %p604
        %p1047 = pneg %p628
        %p1048 = pneg %p625
        %p1049 = pneg %p654
        %p1050 = pneg %p651
        %p1051 = scmp.lt.s32.totalorder %s47, 1
        %s1052 = scalar_select %p1051, %s47, 1
        %s1053 = scalar_lea.vmem %s23, %s1052
        %p1054 = scmp.lt.s32.totalorder %s47, 1
        %s1055 = scalar_select %p1054, %s47, 1
        %s1056 = smul.addr %s1055, 8
        %s1057 = scalar_lea.vmem %s0, %s1056
        %p1058 = scmp.lt.s32.totalorder %s47, 1
        %s1059 = scalar_select %p1058, %s47, 1
        %s1060 = scalar_lea.vmem %s1, %s1059
        %p1061 = scmp.lt.s32.totalorder %s47, 1
        %s1062 = scalar_select %p1061, %s47, 1
        %s1063 = smul.addr %s1062, 2
        %s1064 = scalar_lea.vmem %s2, %s1063
        %p1065 = scmp.lt.s32.totalorder %s48, 1
        %s1066 = scalar_select %p1065, %s48, 1
        %s1067 = scalar_lea.vmem %s4, %s1066
        %p1068 = scmp.lt.s32.totalorder %s48, 1
        %s1069 = scalar_select %p1068, %s48, 1
        %s1070 = scalar_lea.vmem %s6, %s1069
        %p1071 = scmp.lt.s32.totalorder %s48, 1
        %s1072 = scalar_select %p1071, %s48, 1
        %s1073 = scalar_lea.vmem %s8, %s1072
        %p1074 = scmp.lt.s32.totalorder %s48, 1
        %s1075 = scalar_select %p1074, %s48, 1
        %s1076 = scalar_lea.vmem %s10, %s1075
        %p1077 = scmp.lt.s32.totalorder %s48, 1
        %s1078 = scalar_select %p1077, %s48, 1
        %s1079 = scalar_lea.vmem %s11, %s1078
        %p1080 = scmp.lt.s32.totalorder %s48, 1
        %s1081 = scalar_select %p1080, %s48, 1
        %s1082 = scalar_lea.vmem %s12, %s1081
        %p1083 = scmp.lt.s32.totalorder %s48, 1
        %s1084 = scalar_select %p1083, %s48, 1
        %s1085 = smul.addr %s1084, 64
        %s1086 = smul.addr %s1085, 4
        %s1087 = scalar_lea.vmem %s13, %s1086
        %p1088 = scmp.lt.s32.totalorder %s48, 1
        %s1089 = scalar_select %p1088, %s48, 1
        %s1090 = smul.addr %s1089, 4
        %s1091 = scalar_lea.vmem %s14, %s1090
        %p1092 = scmp.lt.s32.totalorder %s48, 1
        %s1093 = scalar_select %p1092, %s48, 1
        %s1094 = scalar_lea.vmem %s16, %s1093
        %p1095 = scmp.lt.s32.totalorder %s48, 1
        %s1096 = scalar_select %p1095, %s48, 1
        %s1097 = scalar_lea.vmem %s17, %s1096
        %p1098 = scmp.lt.s32.totalorder %s48, 1
        %s1099 = scalar_select %p1098, %s48, 1
        %s1100 = scalar_lea.vmem %s18, %s1099
        %p1101 = scmp.lt.s32.totalorder %s47, 1
        %s1102 = scalar_select %p1101, %s47, 1
        %s1103 = scalar_lea.vmem %s23, %s1102
        %p1105 = scmp.eq.s32.totalorder %s48, 0
        // Predicated region
        $region133: #{forward_virtual.1} parent=111 // pred_check
          %p1106 = pneg %p1105
        $region134: #{forward_virtual.1} parent=111 // pred_check_branch
          %1108 = sbr.rel (%p1106) target = $region136
        $region135: #{forward_virtual.1} parent=111 // pred_region
          %v1109 = vld [vmem:[%s1057] sm:$0xff]
          %1110 = vst [vmem:[#allocation2] sm:$0xff] %v1109
        $region136: #{forward_virtual.1} parent=111 // pred_fallthru
          _
        %v1111 = vld [vmem:[#allocation2] sm:$0xff]
        %v1112 = vpack.c.bf16 %v1111, %v1111
        %v1113 = vld [vmem:[%s890] sm:$0xf]
        %v1114 = vld [vmem:[%s890 + $0x4] sm:$0xf]
        %v1115 = vld [vmem:[%s890 + $0x8] sm:$0xf]
        %v1116 = vld [vmem:[%s890 + $0xc] sm:$0xf]
        %v1117 = vld [vmem:[%s890 + $0x10] sm:$0xf]
        %v1118 = vld [vmem:[%s890 + $0x14] sm:$0xf]
        %v1119 = vld [vmem:[%s890 + $0x18] sm:$0xf]
        %v1120 = vld [vmem:[%s890 + $0x1c] sm:$0xf]
        %v1121 = vld [vmem:[%s890 + $0x20] sm:$0xf]
        %v1122 = vld [vmem:[%s890 + $0x24] sm:$0xf]
        %v1123 = vld [vmem:[%s890 + $0x28] sm:$0xf]
        %v1124 = vld [vmem:[%s890 + $0x2c] sm:$0xf]
        %v1125 = vld [vmem:[%s890 + $0x30] sm:$0xf]
        %v1126 = vld [vmem:[%s890 + $0x34] sm:$0xf]
        %v1127 = vld [vmem:[%s890 + $0x38] sm:$0xf]
        %v1128 = vld [vmem:[%s890 + $0x3c] sm:$0xf]
        %v1129 = vld [vmem:[%s1067] sm:$0x1]
        %v1131 = vlaneseq
        %v1132 = vshrl.u32 %v1131, 7
        %v1133 = vsub.s32 0, %v1132
        %v1134 = vrot.slane %v1129, %v1133
        %v1152 = vunpack.c.l.b16 %v1113
        %v1153 = vunpack.c.l.b16 %v1114
        %v1154 = vunpack.c.l.b16 %v1115
        %v1155 = vunpack.c.l.b16 %v1116
        %v1156 = vunpack.c.l.b16 %v1117
        %v1157 = vunpack.c.l.b16 %v1118
        %v1158 = vunpack.c.l.b16 %v1119
        %v1159 = vunpack.c.l.b16 %v1120
        %v1160 = vunpack.c.l.b16 %v1121
        %v1161 = vunpack.c.l.b16 %v1122
        %v1162 = vunpack.c.l.b16 %v1123
        %v1163 = vunpack.c.l.b16 %v1124
        %v1164 = vunpack.c.l.b16 %v1125
        %v1165 = vunpack.c.l.b16 %v1126
        %v1166 = vunpack.c.l.b16 %v1127
        %v1167 = vunpack.c.l.b16 %v1128
        %v1168 = vpack.c.b16 %v1153, %v1152
        %v1169 = vpack.c.b16 %v1155, %v1154
        %v1170 = vpack.c.b16 %v1157, %v1156
        %v1171 = vpack.c.b16 %v1159, %v1158
        %v1172 = vpack.c.b16 %v1161, %v1160
        %v1173 = vpack.c.b16 %v1163, %v1162
        %v1174 = vpack.c.b16 %v1165, %v1164
        %v1175 = vpack.c.b16 %v1167, %v1166
        %1184 = vmatprep.subr.bf16.mxu0 0
        %1185 = vmatpush1.bf16.msra.mxu0 %v1168
        %1186 = vmatprep.subr.bf16.mxu0 0
        %1187 = vmatpush1.bf16.msra.mxu0 %v1169
        %1188 = vmatprep.subr.bf16.mxu0 0
        %1189 = vmatpush1.bf16.msra.mxu0 %v1170
        %1190 = vmatprep.subr.bf16.mxu0 0
        %1191 = vmatpush1.bf16.msra.mxu0 %v1171
        %1192 = vmatprep.subr.bf16.mxu0 0
        %1193 = vmatpush1.bf16.msra.mxu0 %v1172
        %1194 = vmatprep.subr.bf16.mxu0 0
        %1195 = vmatpush1.bf16.msra.mxu0 %v1173
        %1196 = vmatprep.subr.bf16.mxu0 0
        %1197 = vmatpush1.bf16.msra.mxu0 %v1174
        %1198 = vmatprep.subr.bf16.mxu0 0
        %1199 = vmatpush1.bf16.msra.mxu0 %v1175
        %1200 = vmatprep.subr.bf16.mxu0 0
        %1201 = vmatpush1.bf16.msra.mxu0 0
        %1202 = vmatprep.subr.bf16.mxu0 0
        %1203 = vmatpush1.bf16.msra.mxu0 0
        %1204 = vmatprep.subr.bf16.mxu0 0
        %1205 = vmatpush1.bf16.msra.mxu0 0
        %1206 = vmatprep.subr.bf16.mxu0 0
        %1207 = vmatpush1.bf16.msra.mxu0 0
        %1208 = vmatprep.subr.bf16.mxu0 0
        %1209 = vmatpush1.bf16.msra.mxu0 0
        %1210 = vmatprep.subr.bf16.mxu0 0
        %1211 = vmatpush1.bf16.msra.mxu0 0
        %1212 = vmatprep.subr.bf16.mxu0 0
        %1213 = vmatpush1.bf16.msra.mxu0 0
        %1214 = vmatprep.subr.bf16.mxu0 0
        %1215 = vmatpush1.bf16.msra.mxu0 0
        %1216 = vmatprep.mubr.bf16.mxu0 0
        %1217 = vmatmul.mubr.bf16.gmra.mrb[0].mxu0 %v1112
        %v1218 = vpop.f32.mrb[0].mxu0
        %v1219 = vadd.f32 %v1134, %v1218
        %v1220 = vpop.f32.mrb[0].mxu0
        %v1221 = vpop.f32.mrb[0].mxu0
        %v1222 = vpop.f32.mrb[0].mxu0
        %1223 = vdwg.mxu0
        %v1224 = vld [vmem:[%s899] sm:$0xf]
        %v1225 = vld [vmem:[%s899 + $0x4] sm:$0xf]
        %v1226 = vld [vmem:[%s899 + $0x8] sm:$0xf]
        %v1227 = vld [vmem:[%s899 + $0xc] sm:$0xf]
        %v1228 = vld [vmem:[%s899 + $0x10] sm:$0xf]
        %v1229 = vld [vmem:[%s899 + $0x14] sm:$0xf]
        %v1230 = vld [vmem:[%s899 + $0x18] sm:$0xf]
        %v1231 = vld [vmem:[%s899 + $0x1c] sm:$0xf]
        %v1232 = vld [vmem:[%s899 + $0x20] sm:$0xf]
        %v1233 = vld [vmem:[%s899 + $0x24] sm:$0xf]
        %v1234 = vld [vmem:[%s899 + $0x28] sm:$0xf]
        %v1235 = vld [vmem:[%s899 + $0x2c] sm:$0xf]
        %v1236 = vld [vmem:[%s899 + $0x30] sm:$0xf]
        %v1237 = vld [vmem:[%s899 + $0x34] sm:$0xf]
        %v1238 = vld [vmem:[%s899 + $0x38] sm:$0xf]
        %v1239 = vld [vmem:[%s899 + $0x3c] sm:$0xf]
        %v1240 = vld [vmem:[%s1070] sm:$0x1]
        %v1242 = vlaneseq
        %v1243 = vshrl.u32 %v1242, 7
        %v1244 = vsub.s32 0, %v1243
        %v1245 = vrot.slane %v1240, %v1244
        %v1263 = vunpack.c.l.b16 %v1224
        %v1264 = vunpack.c.l.b16 %v1225
        %v1265 = vunpack.c.l.b16 %v1226
        %v1266 = vunpack.c.l.b16 %v1227
        %v1267 = vunpack.c.l.b16 %v1228
        %v1268 = vunpack.c.l.b16 %v1229
        %v1269 = vunpack.c.l.b16 %v1230
        %v1270 = vunpack.c.l.b16 %v1231
        %v1271 = vunpack.c.l.b16 %v1232
        %v1272 = vunpack.c.l.b16 %v1233
        %v1273 = vunpack.c.l.b16 %v1234
        %v1274 = vunpack.c.l.b16 %v1235
        %v1275 = vunpack.c.l.b16 %v1236
        %v1276 = vunpack.c.l.b16 %v1237
        %v1277 = vunpack.c.l.b16 %v1238
        %v1278 = vunpack.c.l.b16 %v1239
        %v1279 = vpack.c.b16 %v1264, %v1263
        %v1280 = vpack.c.b16 %v1266, %v1265
        %v1281 = vpack.c.b16 %v1268, %v1267
        %v1282 = vpack.c.b16 %v1270, %v1269
        %v1283 = vpack.c.b16 %v1272, %v1271
        %v1284 = vpack.c.b16 %v1274, %v1273
        %v1285 = vpack.c.b16 %v1276, %v1275
        %v1286 = vpack.c.b16 %v1278, %v1277
        %1295 = vmatprep.subr.bf16.mxu0 0
        %1296 = vmatpush1.bf16.msra.mxu0 %v1279
        %1297 = vmatprep.subr.bf16.mxu0 0
        %1298 = vmatpush1.bf16.msra.mxu0 %v1280
        %1299 = vmatprep.subr.bf16.mxu0 0
        %1300 = vmatpush1.bf16.msra.mxu0 %v1281
        %1301 = vmatprep.subr.bf16.mxu0 0
        %1302 = vmatpush1.bf16.msra.mxu0 %v1282
        %1303 = vmatprep.subr.bf16.mxu0 0
        %1304 = vmatpush1.bf16.msra.mxu0 %v1283
        %1305 = vmatprep.subr.bf16.mxu0 0
        %1306 = vmatpush1.bf16.msra.mxu0 %v1284
        %1307 = vmatprep.subr.bf16.mxu0 0
        %1308 = vmatpush1.bf16.msra.mxu0 %v1285
        %1309 = vmatprep.subr.bf16.mxu0 0
        %1310 = vmatpush1.bf16.msra.mxu0 %v1286
        %1311 = vmatprep.subr.bf16.mxu0 0
        %1312 = vmatpush1.bf16.msra.mxu0 0
        %1313 = vmatprep.subr.bf16.mxu0 0
        %1314 = vmatpush1.bf16.msra.mxu0 0
        %1315 = vmatprep.subr.bf16.mxu0 0
        %1316 = vmatpush1.bf16.msra.mxu0 0
        %1317 = vmatprep.subr.bf16.mxu0 0
        %1318 = vmatpush1.bf16.msra.mxu0 0
        %1319 = vmatprep.subr.bf16.mxu0 0
        %1320 = vmatpush1.bf16.msra.mxu0 0
        %1321 = vmatprep.subr.bf16.mxu0 0
        %1322 = vmatpush1.bf16.msra.mxu0 0
        %1323 = vmatprep.subr.bf16.mxu0 0
        %1324 = vmatpush1.bf16.msra.mxu0 0
        %1325 = vmatprep.subr.bf16.mxu0 0
        %1326 = vmatpush1.bf16.msra.mxu0 0
        %1327 = vmatprep.mubr.bf16.mxu0 0
        %1328 = vmatmul.mubr.bf16.gmra.mrb[0].mxu0 %v1112
        %v1329 = vpop.f32.mrb[0].mxu0
        %v1330 = vadd.f32 %v1245, %v1329
        %v1331 = vpop.f32.mrb[0].mxu0
        %v1332 = vpop.f32.mrb[0].mxu0
        %v1333 = vpop.f32.mrb[0].mxu0
        %1334 = vdwg.mxu0
        %v1335 = vld [vmem:[%s908] sm:$0xf]
        %v1336 = vld [vmem:[%s908 + $0x4] sm:$0xf]
        %v1337 = vld [vmem:[%s908 + $0x8] sm:$0xf]
        %v1338 = vld [vmem:[%s908 + $0xc] sm:$0xf]
        %v1339 = vld [vmem:[%s908 + $0x10] sm:$0xf]
        %v1340 = vld [vmem:[%s908 + $0x14] sm:$0xf]
        %v1341 = vld [vmem:[%s908 + $0x18] sm:$0xf]
        %v1342 = vld [vmem:[%s908 + $0x1c] sm:$0xf]
        %v1343 = vld [vmem:[%s908 + $0x20] sm:$0xf]
        %v1344 = vld [vmem:[%s908 + $0x24] sm:$0xf]
        %v1345 = vld [vmem:[%s908 + $0x28] sm:$0xf]
        %v1346 = vld [vmem:[%s908 + $0x2c] sm:$0xf]
        %v1347 = vld [vmem:[%s908 + $0x30] sm:$0xf]
        %v1348 = vld [vmem:[%s908 + $0x34] sm:$0xf]
        %v1349 = vld [vmem:[%s908 + $0x38] sm:$0xf]
        %v1350 = vld [vmem:[%s908 + $0x3c] sm:$0xf]
        %v1351 = vld [vmem:[%s1073] sm:$0x1]
        %v1353 = vlaneseq
        %v1354 = vshrl.u32 %v1353, 7
        %v1355 = vsub.s32 0, %v1354
        %v1356 = vrot.slane %v1351, %v1355
        %v1374 = vunpack.c.l.b16 %v1335
        %v1375 = vunpack.c.l.b16 %v1336
        %v1376 = vunpack.c.l.b16 %v1337
        %v1377 = vunpack.c.l.b16 %v1338
        %v1378 = vunpack.c.l.b16 %v1339
        %v1379 = vunpack.c.l.b16 %v1340
        %v1380 = vunpack.c.l.b16 %v1341
        %v1381 = vunpack.c.l.b16 %v1342
        %v1382 = vunpack.c.l.b16 %v1343
        %v1383 = vunpack.c.l.b16 %v1344
        %v1384 = vunpack.c.l.b16 %v1345
        %v1385 = vunpack.c.l.b16 %v1346
        %v1386 = vunpack.c.l.b16 %v1347
        %v1387 = vunpack.c.l.b16 %v1348
        %v1388 = vunpack.c.l.b16 %v1349
        %v1389 = vunpack.c.l.b16 %v1350
        %v1390 = vpack.c.b16 %v1375, %v1374
        %v1391 = vpack.c.b16 %v1377, %v1376
        %v1392 = vpack.c.b16 %v1379, %v1378
        %v1393 = vpack.c.b16 %v1381, %v1380
        %v1394 = vpack.c.b16 %v1383, %v1382
        %v1395 = vpack.c.b16 %v1385, %v1384
        %v1396 = vpack.c.b16 %v1387, %v1386
        %v1397 = vpack.c.b16 %v1389, %v1388
        %1406 = vmatprep.subr.bf16.mxu0 0
        %1407 = vmatpush1.bf16.msra.mxu0 %v1390
        %1408 = vmatprep.subr.bf16.mxu0 0
        %1409 = vmatpush1.bf16.msra.mxu0 %v1391
        %1410 = vmatprep.subr.bf16.mxu0 0
        %1411 = vmatpush1.bf16.msra.mxu0 %v1392
        %1412 = vmatprep.subr.bf16.mxu0 0
        %1413 = vmatpush1.bf16.msra.mxu0 %v1393
        %1414 = vmatprep.subr.bf16.mxu0 0
        %1415 = vmatpush1.bf16.msra.mxu0 %v1394
        %1416 = vmatprep.subr.bf16.mxu0 0
        %1417 = vmatpush1.bf16.msra.mxu0 %v1395
        %1418 = vmatprep.subr.bf16.mxu0 0
        %1419 = vmatpush1.bf16.msra.mxu0 %v1396
        %1420 = vmatprep.subr.bf16.mxu0 0
        %1421 = vmatpush1.bf16.msra.mxu0 %v1397
        %1422 = vmatprep.subr.bf16.mxu0 0
        %1423 = vmatpush1.bf16.msra.mxu0 0
        %1424 = vmatprep.subr.bf16.mxu0 0
        %1425 = vmatpush1.bf16.msra.mxu0 0
        %1426 = vmatprep.subr.bf16.mxu0 0
        %1427 = vmatpush1.bf16.msra.mxu0 0
        %1428 = vmatprep.subr.bf16.mxu0 0
        %1429 = vmatpush1.bf16.msra.mxu0 0
        %1430 = vmatprep.subr.bf16.mxu0 0
        %1431 = vmatpush1.bf16.msra.mxu0 0
        %1432 = vmatprep.subr.bf16.mxu0 0
        %1433 = vmatpush1.bf16.msra.mxu0 0
        %1434 = vmatprep.subr.bf16.mxu0 0
        %1435 = vmatpush1.bf16.msra.mxu0 0
        %1436 = vmatprep.subr.bf16.mxu0 0
        %1437 = vmatpush1.bf16.msra.mxu0 0
        %1438 = vmatprep.mubr.bf16.mxu0 0
        %1439 = vmatmul.mubr.bf16.gmra.mrb[0].mxu0 %v1112
        %v1440 = vpop.f32.mrb[0].mxu0
        %v1441 = vadd.f32 %v1356, %v1440
        %v1442 = vpop.f32.mrb[0].mxu0
        %v1443 = vpop.f32.mrb[0].mxu0
        %v1444 = vpop.f32.mrb[0].mxu0
        %1445 = vdwg.mxu0
        %v1446 = vpack.c.bf16 %v1219, %v1219
        %v1447 = vpack.c.bf16 %v1330, %v1330
        %v1448 = vpack.c.bf16 %v1441, %v1441
        %v1449 = vld [vmem:[%s1060] sm:$0x1]
        %v1451 = vlaneseq
        %v1452 = vshrl.u32 %v1451, 7
        %v1453 = vsub.s32 0, %v1452
        %v1454 = vrot.slane %v1449, %v1453
        %1456 = vmatprep.subr.bf16.mxu0 0
        %1457 = vmatpush1.bf16.xpose.msra.mxu0 %v1447
        %1458 = vmatprep.subr.bf16.mxu0 0
        %1459 = vmatpush1.bf16.xpose.msra.mxu0 0
        %1460 = vmatprep.subr.bf16.mxu0 0
        %1461 = vmatpush1.bf16.xpose.msra.mxu0 0
        %1462 = vmatprep.subr.bf16.mxu0 0
        %1463 = vmatpush1.bf16.xpose.msra.mxu0 0
        %1464 = vmatprep.subr.bf16.mxu0 0
        %1465 = vmatpush1.bf16.xpose.msra.mxu0 0
        %1466 = vmatprep.subr.bf16.mxu0 0
        %1467 = vmatpush1.bf16.xpose.msra.mxu0 0
        %1468 = vmatprep.subr.bf16.mxu0 0
        %1469 = vmatpush1.bf16.xpose.msra.mxu0 0
        %1470 = vmatprep.subr.bf16.mxu0 0
        %1471 = vmatpush1.bf16.xpose.msra.mxu0 0
        %1472 = vmatprep.subr.bf16.mxu0 0
        %1473 = vmatpush1.bf16.xpose.msra.mxu0 0
        %1474 = vmatprep.subr.bf16.mxu0 0
        %1475 = vmatpush1.bf16.xpose.msra.mxu0 0
        %1476 = vmatprep.subr.bf16.mxu0 0
        %1477 = vmatpush1.bf16.xpose.msra.mxu0 0
        %1478 = vmatprep.subr.bf16.mxu0 0
        %1479 = vmatpush1.bf16.xpose.msra.mxu0 0
        %1480 = vmatprep.subr.bf16.mxu0 0
        %1481 = vmatpush1.bf16.xpose.msra.mxu0 0
        %1482 = vmatprep.subr.bf16.mxu0 0
        %1483 = vmatpush1.bf16.xpose.msra.mxu0 0
        %1484 = vmatprep.subr.bf16.mxu0 0
        %1485 = vmatpush1.bf16.xpose.msra.mxu0 0
        %1486 = vmatprep.subr.bf16.mxu0 0
        %1487 = vmatpush1.bf16.xpose.msra.mxu0 0
        %1488 = vmatprep.mubr.bf16.mxu0 0
        %1489 = vmatmul.mubr.bf16.gmra.mrb[0].mxu0 %v1446
        %v1490 = vpop.f32.mrb[0].mxu0
        %v1491 = vadd.f32 %v1454, %v1490
        %v1492 = vpop.f32.mrb[0].mxu0
        %v1493 = vpop.f32.mrb[0].mxu0
        %v1494 = vpop.f32.mrb[0].mxu0
        %1495 = vdwg.mxu0
        %vm1496 = vcmask 64512
        %v1497 = vsel %vm1496, %v1491, -inf
        %1498 = vmax.xlane.f32.xlu0 %v1497
        %v1499 = vpop.xlane.xlu0 %1498
        %v1500 = vsub.f32 %v1491, %v1499
        %v1501 = vmul.f32 %v1500, 1.442695
        %v1502 = vpow.pop %v1501
        %v1503 = vsel %vm1496, %v1502, 0.0
        %1504 = vadd.xlane.f32.xlu0 %v1503
        %v1505 = vpop.xlane.xlu0 %1504
        %v1506 = vrcp.pop %v1505
        %v1507 = vmul.f32 %v1502, %v1506
        %v1508 = vpack.c.bf16 %v1507, %v1507
        %v1510 = vsel %vm1496, %v1508, 0
        %vm1512 = vcmask 1043456
        %v1514 = vsel %vm1512, %v1448, 0
        %1516 = vmatprep.subr.bf16.mxu0 0
        %1517 = vmatpush1.bf16.msra.mxu0 %v1514
        %1518 = vmatprep.subr.bf16.mxu0 0
        %1519 = vmatpush1.bf16.msra.mxu0 0
        %1520 = vmatprep.subr.bf16.mxu0 0
        %1521 = vmatpush1.bf16.msra.mxu0 0
        %1522 = vmatprep.subr.bf16.mxu0 0
        %1523 = vmatpush1.bf16.msra.mxu0 0
        %1524 = vmatprep.subr.bf16.mxu0 0
        %1525 = vmatpush1.bf16.msra.mxu0 0
        %1526 = vmatprep.subr.bf16.mxu0 0
        %1527 = vmatpush1.bf16.msra.mxu0 0
        %1528 = vmatprep.subr.bf16.mxu0 0
        %1529 = vmatpush1.bf16.msra.mxu0 0
        %1530 = vmatprep.subr.bf16.mxu0 0
        %1531 = vmatpush1.bf16.msra.mxu0 0
        %1532 = vmatprep.subr.bf16.mxu0 0
        %1533 = vmatpush1.bf16.msra.mxu0 0
        %1534 = vmatprep.subr.bf16.mxu0 0
        %1535 = vmatpush1.bf16.msra.mxu0 0
        %1536 = vmatprep.subr.bf16.mxu0 0
        %1537 = vmatpush1.bf16.msra.mxu0 0
        %1538 = vmatprep.subr.bf16.mxu0 0
        %1539 = vmatpush1.bf16.msra.mxu0 0
        %1540 = vmatprep.subr.bf16.mxu0 0
        %1541 = vmatpush1.bf16.msra.mxu0 0
        %1542 = vmatprep.subr.bf16.mxu0 0
        %1543 = vmatpush1.bf16.msra.mxu0 0
        %1544 = vmatprep.subr.bf16.mxu0 0
        %1545 = vmatpush1.bf16.msra.mxu0 0
        %1546 = vmatprep.subr.bf16.mxu0 0
        %1547 = vmatpush1.bf16.msra.mxu0 0
        %1548 = vmatprep.mubr.bf16.mxu0 0
        %1549 = vmatmul.mubr.bf16.gmra.mrb[0].mxu0 %v1510
        %v1550 = vpop.f32.mrb[0].mxu0
        %v1551 = vadd.f32 0.0, %v1550
        %v1552 = vpop.f32.mrb[0].mxu0
        %v1553 = vpop.f32.mrb[0].mxu0
        %v1554 = vpop.f32.mrb[0].mxu0
        %1555 = vdwg.mxu0
        %v1556 = vpack.c.bf16 %v1551, %v1551
        %v1557 = vld [vmem:[%s917] sm:$0xf]
        %v1558 = vld [vmem:[%s917 + $0x4] sm:$0xf]
        %v1559 = vld [vmem:[%s917 + $0x8] sm:$0xf]
        %v1560 = vld [vmem:[%s917 + $0xc] sm:$0xf]
        %v1561 = vld [vmem:[%s917 + $0x10] sm:$0xf]
        %v1562 = vld [vmem:[%s917 + $0x14] sm:$0xf]
        %v1563 = vld [vmem:[%s917 + $0x18] sm:$0xf]
        %v1564 = vld [vmem:[%s917 + $0x1c] sm:$0xf]
        %v1565 = vld [vmem:[%s917 + $0x20] sm:$0xf]
        %v1566 = vld [vmem:[%s917 + $0x24] sm:$0xf]
        %v1567 = vld [vmem:[%s917 + $0x28] sm:$0xf]
        %v1568 = vld [vmem:[%s917 + $0x2c] sm:$0xf]
        %v1569 = vld [vmem:[%s917 + $0x30] sm:$0xf]
        %v1570 = vld [vmem:[%s917 + $0x34] sm:$0xf]
        %v1571 = vld [vmem:[%s917 + $0x38] sm:$0xf]
        %v1572 = vld [vmem:[%s917 + $0x3c] sm:$0xf]
        %v1573 = vld [vmem:[%s1076] sm:$0x1]
        %v1575 = vlaneseq
        %v1576 = vshrl.u32 %v1575, 7
        %v1577 = vsub.s32 0, %v1576
        %v1578 = vrot.slane %v1573, %v1577
        %v1596 = vunpack.c.l.b16 %v1557
        %v1597 = vunpack.c.l.b16 %v1558
        %v1598 = vunpack.c.l.b16 %v1559
        %v1599 = vunpack.c.l.b16 %v1560
        %v1600 = vunpack.c.l.b16 %v1561
        %v1601 = vunpack.c.l.b16 %v1562
        %v1602 = vunpack.c.l.b16 %v1563
        %v1603 = vunpack.c.l.b16 %v1564
        %v1604 = vunpack.c.l.b16 %v1565
        %v1605 = vunpack.c.l.b16 %v1566
        %v1606 = vunpack.c.l.b16 %v1567
        %v1607 = vunpack.c.l.b16 %v1568
        %v1608 = vunpack.c.l.b16 %v1569
        %v1609 = vunpack.c.l.b16 %v1570
        %v1610 = vunpack.c.l.b16 %v1571
        %v1611 = vunpack.c.l.b16 %v1572
        %v1612 = vpack.c.b16 %v1597, %v1596
        %v1613 = vpack.c.b16 %v1599, %v1598
        %v1614 = vpack.c.b16 %v1601, %v1600
        %v1615 = vpack.c.b16 %v1603, %v1602
        %v1616 = vpack.c.b16 %v1605, %v1604
        %v1617 = vpack.c.b16 %v1607, %v1606
        %v1618 = vpack.c.b16 %v1609, %v1608
        %v1619 = vpack.c.b16 %v1611, %v1610
        %1628 = vmatprep.subr.bf16.mxu0 0
        %1629 = vmatpush1.bf16.msra.mxu0 %v1612
        %1630 = vmatprep.subr.bf16.mxu0 0
        %1631 = vmatpush1.bf16.msra.mxu0 %v1613
        %1632 = vmatprep.subr.bf16.mxu0 0
        %1633 = vmatpush1.bf16.msra.mxu0 %v1614
        %1634 = vmatprep.subr.bf16.mxu0 0
        %1635 = vmatpush1.bf16.msra.mxu0 %v1615
        %1636 = vmatprep.subr.bf16.mxu0 0
        %1637 = vmatpush1.bf16.msra.mxu0 %v1616
        %1638 = vmatprep.subr.bf16.mxu0 0
        %1639 = vmatpush1.bf16.msra.mxu0 %v1617
        %1640 = vmatprep.subr.bf16.mxu0 0
        %1641 = vmatpush1.bf16.msra.mxu0 %v1618
        %1642 = vmatprep.subr.bf16.mxu0 0
        %1643 = vmatpush1.bf16.msra.mxu0 %v1619
        %1644 = vmatprep.subr.bf16.mxu0 0
        %1645 = vmatpush1.bf16.msra.mxu0 0
        %1646 = vmatprep.subr.bf16.mxu0 0
        %1647 = vmatpush1.bf16.msra.mxu0 0
        %1648 = vmatprep.subr.bf16.mxu0 0
        %1649 = vmatpush1.bf16.msra.mxu0 0
        %1650 = vmatprep.subr.bf16.mxu0 0
        %1651 = vmatpush1.bf16.msra.mxu0 0
        %1652 = vmatprep.subr.bf16.mxu0 0
        %1653 = vmatpush1.bf16.msra.mxu0 0
        %1654 = vmatprep.subr.bf16.mxu0 0
        %1655 = vmatpush1.bf16.msra.mxu0 0
        %1656 = vmatprep.subr.bf16.mxu0 0
        %1657 = vmatpush1.bf16.msra.mxu0 0
        %1658 = vmatprep.subr.bf16.mxu0 0
        %1659 = vmatpush1.bf16.msra.mxu0 0
        %1660 = vmatprep.mubr.bf16.mxu0 0
        %1661 = vmatmul.mubr.bf16.gmra.mrb[0].mxu0 %v1556
        %v1662 = vpop.f32.mrb[0].mxu0
        %v1663 = vadd.f32 %v1578, %v1662
        %v1664 = vpop.f32.mrb[0].mxu0
        %v1665 = vpop.f32.mrb[0].mxu0
        %v1666 = vpop.f32.mrb[0].mxu0
        %1667 = vdwg.mxu0
        %v1668 = vadd.f32 %v1111, %v1663
        %v1669 = vld [vmem:[%s1079] sm:$0x1]
        %v1670 = vld [vmem:[%s1082] sm:$0x1]
        %1671 = vadd.xlane.f32.xlu0 %v1668
        %v1672 = vpop.xlane.xlu0 %1671
        %v1673 = vrcp.pop 128.0
        %v1674 = vmul.f32 %v1672, %v1673
        %v1675 = vsub.f32 %v1668, %v1674
        %v1676 = vmul.f32 %v1675, %v1675
        %1677 = vadd.xlane.f32.xlu0 %v1676
        %v1678 = vpop.xlane.xlu0 %1677
        %v1679 = vmul.f32 %v1678, %v1673
        %v1680 = vadd.f32 %v1679, 1e-12
        %v1681 = vrsqrt.pop %v1680
        %v1682 = vmul.f32 %v1675, %v1681
        %v1684 = vlaneseq
        %v1685 = vshrl.u32 %v1684, 7
        %v1686 = vsub.s32 0, %v1685
        %v1687 = vrot.slane %v1669, %v1686
        %v1689 = vmul.f32 %v1682, %v1687
        %v1691 = vlaneseq
        %v1692 = vshrl.u32 %v1691, 7
        %v1693 = vsub.s32 0, %v1692
        %v1694 = vrot.slane %v1670, %v1693
        %v1696 = vadd.f32 %v1689, %v1694
        %v1697 = vpack.c.bf16 %v1696, %v1696
        %v1698 = vld [vmem:[%s1087] sm:$0xff]
        %v1699 = vld [vmem:[%s1087 + $0x8] sm:$0xff]
        %v1700 = vld [vmem:[%s1087 + $0x10] sm:$0xff]
        %v1701 = vld [vmem:[%s1087 + $0x18] sm:$0xff]
        %v1702 = vld [vmem:[%s1087 + $0x20] sm:$0xff]
        %v1703 = vld [vmem:[%s1087 + $0x28] sm:$0xff]
        %v1704 = vld [vmem:[%s1087 + $0x30] sm:$0xff]
        %v1705 = vld [vmem:[%s1087 + $0x38] sm:$0xff]
        %v1706 = vld [vmem:[%s1087 + $0x40] sm:$0xff]
        %v1707 = vld [vmem:[%s1087 + $0x48] sm:$0xff]
        %v1708 = vld [vmem:[%s1087 + $0x50] sm:$0xff]
        %v1709 = vld [vmem:[%s1087 + $0x58] sm:$0xff]
        %v1710 = vld [vmem:[%s1087 + $0x60] sm:$0xff]
        %v1711 = vld [vmem:[%s1087 + $0x68] sm:$0xff]
        %v1712 = vld [vmem:[%s1087 + $0x70] sm:$0xff]
        %v1713 = vld [vmem:[%s1087 + $0x78] sm:$0xff]
        %v1714 = vld [vmem:[%s1087 + $0x80] sm:$0xff]
        %v1715 = vld [vmem:[%s1087 + $0x88] sm:$0xff]
        %v1716 = vld [vmem:[%s1087 + $0x90] sm:$0xff]
        %v1717 = vld [vmem:[%s1087 + $0x98] sm:$0xff]
        %v1718 = vld [vmem:[%s1087 + $0xa0] sm:$0xff]
        %v1719 = vld [vmem:[%s1087 + $0xa8] sm:$0xff]
        %v1720 = vld [vmem:[%s1087 + $0xb0] sm:$0xff]
        %v1721 = vld [vmem:[%s1087 + $0xb8] sm:$0xff]
        %v1722 = vld [vmem:[%s1087 + $0xc0] sm:$0xff]
        %v1723 = vld [vmem:[%s1087 + $0xc8] sm:$0xff]
        %v1724 = vld [vmem:[%s1087 + $0xd0] sm:$0xff]
        %v1725 = vld [vmem:[%s1087 + $0xd8] sm:$0xff]
        %v1726 = vld [vmem:[%s1087 + $0xe0] sm:$0xff]
        %v1727 = vld [vmem:[%s1087 + $0xe8] sm:$0xff]
        %v1728 = vld [vmem:[%s1087 + $0xf0] sm:$0xff]
        %v1729 = vld [vmem:[%s1087 + $0xf8] sm:$0xff]
        %v1730 = vld [vmem:[%s1091] sm:$0xf]
        %v1732 = vlaneseq
        %v1733 = vshrl.u32 %v1732, 7
        %v1734 = vsub.s32 0, %v1733
        %v1735 = vrot.slane %v1730, %v1734
        %v1736 = vlaneseq
        %v1737 = vshrl.u32 %v1736, 7
        %v1738 = vsub.s32 1, %v1737
        %v1739 = vrot.slane %v1730, %v1738
        %v1740 = vlaneseq
        %v1741 = vshrl.u32 %v1740, 7
        %v1742 = vsub.s32 2, %v1741
        %v1743 = vrot.slane %v1730, %v1742
        %v1744 = vlaneseq
        %v1745 = vshrl.u32 %v1744, 7
        %v1746 = vsub.s32 3, %v1745
        %v1747 = vrot.slane %v1730, %v1746
        %v1784 = vunpack.c.l.b16 %v1698
        %v1785 = vunpack.c.h.b16 %v1698
        %v1786 = vunpack.c.l.b16 %v1699
        %v1787 = vunpack.c.h.b16 %v1699
        %v1788 = vunpack.c.l.b16 %v1700
        %v1789 = vunpack.c.h.b16 %v1700
        %v1790 = vunpack.c.l.b16 %v1701
        %v1791 = vunpack.c.h.b16 %v1701
        %v1792 = vunpack.c.l.b16 %v1702
        %v1793 = vunpack.c.h.b16 %v1702
        %v1794 = vunpack.c.l.b16 %v1703
        %v1795 = vunpack.c.h.b16 %v1703
        %v1796 = vunpack.c.l.b16 %v1704
        %v1797 = vunpack.c.h.b16 %v1704
        %v1798 = vunpack.c.l.b16 %v1705
        %v1799 = vunpack.c.h.b16 %v1705
        %v1800 = vunpack.c.l.b16 %v1706
        %v1801 = vunpack.c.h.b16 %v1706
        %v1802 = vunpack.c.l.b16 %v1707
        %v1803 = vunpack.c.h.b16 %v1707
        %v1804 = vunpack.c.l.b16 %v1708
        %v1805 = vunpack.c.h.b16 %v1708
        %v1806 = vunpack.c.l.b16 %v1709
        %v1807 = vunpack.c.h.b16 %v1709
        %v1808 = vunpack.c.l.b16 %v1710
        %v1809 = vunpack.c.h.b16 %v1710
        %v1810 = vunpack.c.l.b16 %v1711
        %v1811 = vunpack.c.h.b16 %v1711
        %v1812 = vunpack.c.l.b16 %v1712
        %v1813 = vunpack.c.h.b16 %v1712
        %v1814 = vunpack.c.l.b16 %v1713
        %v1815 = vunpack.c.h.b16 %v1713
        %v1816 = vunpack.c.l.b16 %v1714
        %v1817 = vunpack.c.h.b16 %v1714
        %v1818 = vunpack.c.l.b16 %v1715
        %v1819 = vunpack.c.h.b16 %v1715
        %v1820 = vunpack.c.l.b16 %v1716
        %v1821 = vunpack.c.h.b16 %v1716
        %v1822 = vunpack.c.l.b16 %v1717
        %v1823 = vunpack.c.h.b16 %v1717
        %v1824 = vunpack.c.l.b16 %v1718
        %v1825 = vunpack.c.h.b16 %v1718
        %v1826 = vunpack.c.l.b16 %v1719
        %v1827 = vunpack.c.h.b16 %v1719
        %v1828 = vunpack.c.l.b16 %v1720
        %v1829 = vunpack.c.h.b16 %v1720
        %v1830 = vunpack.c.l.b16 %v1721
        %v1831 = vunpack.c.h.b16 %v1721
        %v1832 = vunpack.c.l.b16 %v1722
        %v1833 = vunpack.c.h.b16 %v1722
        %v1834 = vunpack.c.l.b16 %v1723
        %v1835 = vunpack.c.h.b16 %v1723
        %v1836 = vunpack.c.l.b16 %v1724
        %v1837 = vunpack.c.h.b16 %v1724
        %v1838 = vunpack.c.l.b16 %v1725
        %v1839 = vunpack.c.h.b16 %v1725
        %v1840 = vunpack.c.l.b16 %v1726
        %v1841 = vunpack.c.h.b16 %v1726
        %v1842 = vunpack.c.l.b16 %v1727
        %v1843 = vunpack.c.h.b16 %v1727
        %v1844 = vunpack.c.l.b16 %v1728
        %v1845 = vunpack.c.h.b16 %v1728
        %v1846 = vunpack.c.l.b16 %v1729
        %v1847 = vunpack.c.h.b16 %v1729
        %v1848 = vpack.c.b16 %v1788, %v1784
        %v1849 = vpack.c.b16 %v1789, %v1785
        %v1850 = vpack.c.b16 %v1790, %v1786
        %v1851 = vpack.c.b16 %v1791, %v1787
        %v1852 = vpack.c.b16 %v1796, %v1792
        %v1853 = vpack.c.b16 %v1797, %v1793
        %v1854 = vpack.c.b16 %v1798, %v1794
        %v1855 = vpack.c.b16 %v1799, %v1795
        %v1856 = vpack.c.b16 %v1804, %v1800
        %v1857 = vpack.c.b16 %v1805, %v1801
        %v1858 = vpack.c.b16 %v1806, %v1802
        %v1859 = vpack.c.b16 %v1807, %v1803
        %v1860 = vpack.c.b16 %v1812, %v1808
        %v1861 = vpack.c.b16 %v1813, %v1809
        %v1862 = vpack.c.b16 %v1814, %v1810
        %v1863 = vpack.c.b16 %v1815, %v1811
        %v1864 = vpack.c.b16 %v1820, %v1816
        %v1865 = vpack.c.b16 %v1821, %v1817
        %v1866 = vpack.c.b16 %v1822, %v1818
        %v1867 = vpack.c.b16 %v1823, %v1819
        %v1868 = vpack.c.b16 %v1828, %v1824
        %v1869 = vpack.c.b16 %v1829, %v1825
        %v1870 = vpack.c.b16 %v1830, %v1826
        %v1871 = vpack.c.b16 %v1831, %v1827
        %v1872 = vpack.c.b16 %v1836, %v1832
        %v1873 = vpack.c.b16 %v1837, %v1833
        %v1874 = vpack.c.b16 %v1838, %v1834
        %v1875 = vpack.c.b16 %v1839, %v1835
        %v1876 = vpack.c.b16 %v1844, %v1840
        %v1877 = vpack.c.b16 %v1845, %v1841
        %v1878 = vpack.c.b16 %v1846, %v1842
        %v1879 = vpack.c.b16 %v1847, %v1843
        %1912 = vmatprep.subr.bf16.mxu0 %v1849
        %1913 = vmatpush1.bf16.msra.mxu0 %v1848
        %1914 = vmatprep.subr.bf16.mxu0 %v1853
        %1915 = vmatpush1.bf16.msra.mxu0 %v1852
        %1916 = vmatprep.subr.bf16.mxu0 %v1857
        %1917 = vmatpush1.bf16.msra.mxu0 %v1856
        %1918 = vmatprep.subr.bf16.mxu0 %v1861
        %1919 = vmatpush1.bf16.msra.mxu0 %v1860
        %1920 = vmatprep.subr.bf16.mxu0 %v1865
        %1921 = vmatpush1.bf16.msra.mxu0 %v1864
        %1922 = vmatprep.subr.bf16.mxu0 %v1869
        %1923 = vmatpush1.bf16.msra.mxu0 %v1868
        %1924 = vmatprep.subr.bf16.mxu0 %v1873
        %1925 = vmatpush1.bf16.msra.mxu0 %v1872
        %1926 = vmatprep.subr.bf16.mxu0 %v1877
        %1927 = vmatpush1.bf16.msra.mxu0 %v1876
        %1928 = vmatprep.subr.bf16.mxu0 0
        %1929 = vmatpush1.bf16.msra.mxu0 0
        %1930 = vmatprep.subr.bf16.mxu0 0
        %1931 = vmatpush1.bf16.msra.mxu0 0
        %1932 = vmatprep.subr.bf16.mxu0 0
        %1933 = vmatpush1.bf16.msra.mxu0 0
        %1934 = vmatprep.subr.bf16.mxu0 0
        %1935 = vmatpush1.bf16.msra.mxu0 0
        %1936 = vmatprep.subr.bf16.mxu0 0
        %1937 = vmatpush1.bf16.msra.mxu0 0
        %1938 = vmatprep.subr.bf16.mxu0 0
        %1939 = vmatpush1.bf16.msra.mxu0 0
        %1940 = vmatprep.subr.bf16.mxu0 0
        %1941 = vmatpush1.bf16.msra.mxu0 0
        %1942 = vmatprep.subr.bf16.mxu0 0
        %1943 = vmatpush1.bf16.msra.mxu0 0
        %1944 = vmatprep.mubr.bf16.mxu0 0
        %1945 = vmatmul.mubr.bf16.gmra.mrb[0].mxu0 %v1697
        %v1946 = vpop.f32.mrb[0].mxu0
        %v1947 = vadd.f32 %v1735, %v1946
        %v1948 = vpop.f32.mrb[0].mxu0
        %v1949 = vadd.f32 %v1739, %v1948
        %v1950 = vpop.f32.mrb[0].mxu0
        %v1951 = vpop.f32.mrb[0].mxu0
        %1952 = vdwg.mxu0
        %1953 = vmatprep.subr.bf16.mxu0 %v1851
        %1954 = vmatpush1.bf16.msra.mxu0 %v1850
        %1955 = vmatprep.subr.bf16.mxu0 %v1855
        %1956 = vmatpush1.bf16.msra.mxu0 %v1854
        %1957 = vmatprep.subr.bf16.mxu0 %v1859
        %1958 = vmatpush1.bf16.msra.mxu0 %v1858
        %1959 = vmatprep.subr.bf16.mxu0 %v1863
        %1960 = vmatpush1.bf16.msra.mxu0 %v1862
        %1961 = vmatprep.subr.bf16.mxu0 %v1867
        %1962 = vmatpush1.bf16.msra.mxu0 %v1866
        %1963 = vmatprep.subr.bf16.mxu0 %v1871
        %1964 = vmatpush1.bf16.msra.mxu0 %v1870
        %1965 = vmatprep.subr.bf16.mxu0 %v1875
        %1966 = vmatpush1.bf16.msra.mxu0 %v1874
        %1967 = vmatprep.subr.bf16.mxu0 %v1879
        %1968 = vmatpush1.bf16.msra.mxu0 %v1878
        %1969 = vmatprep.subr.bf16.mxu0 0
        %1970 = vmatpush1.bf16.msra.mxu0 0
        %1971 = vmatprep.subr.bf16.mxu0 0
        %1972 = vmatpush1.bf16.msra.mxu0 0
        %1973 = vmatprep.subr.bf16.mxu0 0
        %1974 = vmatpush1.bf16.msra.mxu0 0
        %1975 = vmatprep.subr.bf16.mxu0 0
        %1976 = vmatpush1.bf16.msra.mxu0 0
        %1977 = vmatprep.subr.bf16.mxu0 0
        %1978 = vmatpush1.bf16.msra.mxu0 0
        %1979 = vmatprep.subr.bf16.mxu0 0
        %1980 = vmatpush1.bf16.msra.mxu0 0
        %1981 = vmatprep.subr.bf16.mxu0 0
        %1982 = vmatpush1.bf16.msra.mxu0 0
        %1983 = vmatprep.subr.bf16.mxu0 0
        %1984 = vmatpush1.bf16.msra.mxu0 0
        %1985 = vmatprep.mubr.bf16.mxu0 0
        %1986 = vmatmul.mubr.bf16.gmra.mrb[0].mxu0 %v1697
        %v1987 = vpop.f32.mrb[0].mxu0
        %v1988 = vadd.f32 %v1743, %v1987
        %v1989 = vpop.f32.mrb[0].mxu0
        %v1990 = vadd.f32 %v1747, %v1989
        %v1991 = vpop.f32.mrb[0].mxu0
        %v1992 = vpop.f32.mrb[0].mxu0
        %1993 = vdwg.mxu0
        %v1994 = vmul.f32 %v1947, 0.5
        %v1995 = vmul.f32 %v1949, 0.5
        %v1996 = vmul.f32 %v1988, 0.5
        %v1997 = vmul.f32 %v1990, 0.5
        %v1998 = vmul.f32 %v1947, 0.044715
        %v1999 = vmul.f32 %v1949, 0.044715
        %v2000 = vmul.f32 %v1988, 0.044715
        %v2001 = vmul.f32 %v1990, 0.044715
        %v2002 = vmul.f32 %v1998, %v1947
        %v2003 = vmul.f32 %v1999, %v1949
        %v2004 = vmul.f32 %v2000, %v1988
        %v2005 = vmul.f32 %v2001, %v1990
        %v2006 = vmul.f32 %v2002, %v1947
        %v2007 = vmul.f32 %v2003, %v1949
        %v2008 = vmul.f32 %v2004, %v1988
        %v2009 = vmul.f32 %v2005, %v1990
        %v2010 = vadd.f32 %v1947, %v2006
        %v2011 = vadd.f32 %v1949, %v2007
        %v2012 = vadd.f32 %v1988, %v2008
        %v2013 = vadd.f32 %v1990, %v2009
        %v2014 = vmul.f32 %v2010, 0.7978846
        %v2015 = vmul.f32 %v2011, 0.7978846
        %v2016 = vmul.f32 %v2012, 0.7978846
        %v2017 = vmul.f32 %v2013, 0.7978846
        %v2018 = vtanh.pop %v2014
        %v2019 = vtanh.pop %v2015
        %v2020 = vtanh.pop %v2016
        %v2021 = vtanh.pop %v2017
        %v2022 = vadd.f32 %v2018, 1.0
        %v2023 = vadd.f32 %v2019, 1.0
        %v2024 = vadd.f32 %v2020, 1.0
        %v2025 = vadd.f32 %v2021, 1.0
        %v2026 = vmul.f32 %v1994, %v2022
        %v2027 = vmul.f32 %v1995, %v2023
        %v2028 = vmul.f32 %v1996, %v2024
        %v2029 = vmul.f32 %v1997, %v2025
        %v2030 = vpack.c.bf16 %v2026, %v2026
        %v2031 = vpack.c.bf16 %v2027, %v2027
        %v2032 = vpack.c.bf16 %v2028, %v2028
        %v2033 = vpack.c.bf16 %v2029, %v2029
        %v2034 = vld [vmem:[%s926] sm:$0xf]
        %v2035 = vld [vmem:[%s926 + $0x4] sm:$0xf]
        %v2036 = vld [vmem:[%s926 + $0x8] sm:$0xf]
        %v2037 = vld [vmem:[%s926 + $0xc] sm:$0xf]
        %v2038 = vld [vmem:[%s926 + $0x10] sm:$0xf]
        %v2039 = vld [vmem:[%s926 + $0x14] sm:$0xf]
        %v2040 = vld [vmem:[%s926 + $0x18] sm:$0xf]
        %v2041 = vld [vmem:[%s926 + $0x1c] sm:$0xf]
        %v2042 = vld [vmem:[%s926 + $0x20] sm:$0xf]
        %v2043 = vld [vmem:[%s926 + $0x24] sm:$0xf]
        %v2044 = vld [vmem:[%s926 + $0x28] sm:$0xf]
        %v2045 = vld [vmem:[%s926 + $0x2c] sm:$0xf]
        %v2046 = vld [vmem:[%s926 + $0x30] sm:$0xf]
        %v2047 = vld [vmem:[%s926 + $0x34] sm:$0xf]
        %v2048 = vld [vmem:[%s926 + $0x38] sm:$0xf]
        %v2049 = vld [vmem:[%s926 + $0x3c] sm:$0xf]
        %v2050 = vld [vmem:[%s926 + $0x40] sm:$0xf]
        %v2051 = vld [vmem:[%s926 + $0x44] sm:$0xf]
        %v2052 = vld [vmem:[%s926 + $0x48] sm:$0xf]
        %v2053 = vld [vmem:[%s926 + $0x4c] sm:$0xf]
        %v2054 = vld [vmem:[%s926 + $0x50] sm:$0xf]
        %v2055 = vld [vmem:[%s926 + $0x54] sm:$0xf]
        %v2056 = vld [vmem:[%s926 + $0x58] sm:$0xf]
        %v2057 = vld [vmem:[%s926 + $0x5c] sm:$0xf]
        %v2058 = vld [vmem:[%s926 + $0x60] sm:$0xf]
        %v2059 = vld [vmem:[%s926 + $0x64] sm:$0xf]
        %v2060 = vld [vmem:[%s926 + $0x68] sm:$0xf]
        %v2061 = vld [vmem:[%s926 + $0x6c] sm:$0xf]
        %v2062 = vld [vmem:[%s926 + $0x70] sm:$0xf]
        %v2063 = vld [vmem:[%s926 + $0x74] sm:$0xf]
        %v2064 = vld [vmem:[%s926 + $0x78] sm:$0xf]
        %v2065 = vld [vmem:[%s926 + $0x7c] sm:$0xf]
        %v2066 = vld [vmem:[%s926 + $0x80] sm:$0xf]
        %v2067 = vld [vmem:[%s926 + $0x84] sm:$0xf]
        %v2068 = vld [vmem:[%s926 + $0x88] sm:$0xf]
        %v2069 = vld [vmem:[%s926 + $0x8c] sm:$0xf]
        %v2070 = vld [vmem:[%s926 + $0x90] sm:$0xf]
        %v2071 = vld [vmem:[%s926 + $0x94] sm:$0xf]
        %v2072 = vld [vmem:[%s926 + $0x98] sm:$0xf]
        %v2073 = vld [vmem:[%s926 + $0x9c] sm:$0xf]
        %v2074 = vld [vmem:[%s926 + $0xa0] sm:$0xf]
        %v2075 = vld [vmem:[%s926 + $0xa4] sm:$0xf]
        %v2076 = vld [vmem:[%s926 + $0xa8] sm:$0xf]
        %v2077 = vld [vmem:[%s926 + $0xac] sm:$0xf]
        %v2078 = vld [vmem:[%s926 + $0xb0] sm:$0xf]
        %v2079 = vld [vmem:[%s926 + $0xb4] sm:$0xf]
        %v2080 = vld [vmem:[%s926 + $0xb8] sm:$0xf]
        %v2081 = vld [vmem:[%s926 + $0xbc] sm:$0xf]
        %v2082 = vld [vmem:[%s926 + $0xc0] sm:$0xf]
        %v2083 = vld [vmem:[%s926 + $0xc4] sm:$0xf]
        %v2084 = vld [vmem:[%s926 + $0xc8] sm:$0xf]
        %v2085 = vld [vmem:[%s926 + $0xcc] sm:$0xf]
        %v2086 = vld [vmem:[%s926 + $0xd0] sm:$0xf]
        %v2087 = vld [vmem:[%s926 + $0xd4] sm:$0xf]
        %v2088 = vld [vmem:[%s926 + $0xd8] sm:$0xf]
        %v2089 = vld [vmem:[%s926 + $0xdc] sm:$0xf]
        %v2090 = vld [vmem:[%s926 + $0xe0] sm:$0xf]
        %v2091 = vld [vmem:[%s926 + $0xe4] sm:$0xf]
        %v2092 = vld [vmem:[%s926 + $0xe8] sm:$0xf]
        %v2093 = vld [vmem:[%s926 + $0xec] sm:$0xf]
        %v2094 = vld [vmem:[%s926 + $0xf0] sm:$0xf]
        %v2095 = vld [vmem:[%s926 + $0xf4] sm:$0xf]
        %v2096 = vld [vmem:[%s926 + $0xf8] sm:$0xf]
        %v2097 = vld [vmem:[%s926 + $0xfc] sm:$0xf]
        %v2098 = vld [vmem:[%s1094] sm:$0x1]
        %v2100 = vlaneseq
        %v2101 = vshrl.u32 %v2100, 7
        %v2102 = vsub.s32 0, %v2101
        %v2103 = vrot.slane %v2098, %v2102
        %v2169 = vunpack.c.l.b16 %v2034
        %v2170 = vunpack.c.l.b16 %v2035
        %v2171 = vunpack.c.l.b16 %v2036
        %v2172 = vunpack.c.l.b16 %v2037
        %v2173 = vunpack.c.l.b16 %v2038
        %v2174 = vunpack.c.l.b16 %v2039
        %v2175 = vunpack.c.l.b16 %v2040
        %v2176 = vunpack.c.l.b16 %v2041
        %v2177 = vunpack.c.l.b16 %v2042
        %v2178 = vunpack.c.l.b16 %v2043
        %v2179 = vunpack.c.l.b16 %v2044
        %v2180 = vunpack.c.l.b16 %v2045
        %v2181 = vunpack.c.l.b16 %v2046
        %v2182 = vunpack.c.l.b16 %v2047
        %v2183 = vunpack.c.l.b16 %v2048
        %v2184 = vunpack.c.l.b16 %v2049
        %v2185 = vunpack.c.l.b16 %v2050
        %v2186 = vunpack.c.l.b16 %v2051
        %v2187 = vunpack.c.l.b16 %v2052
        %v2188 = vunpack.c.l.b16 %v2053
        %v2189 = vunpack.c.l.b16 %v2054
        %v2190 = vunpack.c.l.b16 %v2055
        %v2191 = vunpack.c.l.b16 %v2056
        %v2192 = vunpack.c.l.b16 %v2057
        %v2193 = vunpack.c.l.b16 %v2058
        %v2194 = vunpack.c.l.b16 %v2059
        %v2195 = vunpack.c.l.b16 %v2060
        %v2196 = vunpack.c.l.b16 %v2061
        %v2197 = vunpack.c.l.b16 %v2062
        %v2198 = vunpack.c.l.b16 %v2063
        %v2199 = vunpack.c.l.b16 %v2064
        %v2200 = vunpack.c.l.b16 %v2065
        %v2201 = vunpack.c.l.b16 %v2066
        %v2202 = vunpack.c.l.b16 %v2067
        %v2203 = vunpack.c.l.b16 %v2068
        %v2204 = vunpack.c.l.b16 %v2069
        %v2205 = vunpack.c.l.b16 %v2070
        %v2206 = vunpack.c.l.b16 %v2071
        %v2207 = vunpack.c.l.b16 %v2072
        %v2208 = vunpack.c.l.b16 %v2073
        %v2209 = vunpack.c.l.b16 %v2074
        %v2210 = vunpack.c.l.b16 %v2075
        %v2211 = vunpack.c.l.b16 %v2076
        %v2212 = vunpack.c.l.b16 %v2077
        %v2213 = vunpack.c.l.b16 %v2078
        %v2214 = vunpack.c.l.b16 %v2079
        %v2215 = vunpack.c.l.b16 %v2080
        %v2216 = vunpack.c.l.b16 %v2081
        %v2217 = vunpack.c.l.b16 %v2082
        %v2218 = vunpack.c.l.b16 %v2083
        %v2219 = vunpack.c.l.b16 %v2084
        %v2220 = vunpack.c.l.b16 %v2085
        %v2221 = vunpack.c.l.b16 %v2086
        %v2222 = vunpack.c.l.b16 %v2087
        %v2223 = vunpack.c.l.b16 %v2088
        %v2224 = vunpack.c.l.b16 %v2089
        %v2225 = vunpack.c.l.b16 %v2090
        %v2226 = vunpack.c.l.b16 %v2091
        %v2227 = vunpack.c.l.b16 %v2092
        %v2228 = vunpack.c.l.b16 %v2093
        %v2229 = vunpack.c.l.b16 %v2094
        %v2230 = vunpack.c.l.b16 %v2095
        %v2231 = vunpack.c.l.b16 %v2096
        %v2232 = vunpack.c.l.b16 %v2097
        %v2233 = vpack.c.b16 %v2170, %v2169
        %v2234 = vpack.c.b16 %v2172, %v2171
        %v2235 = vpack.c.b16 %v2174, %v2173
        %v2236 = vpack.c.b16 %v2176, %v2175
        %v2237 = vpack.c.b16 %v2178, %v2177
        %v2238 = vpack.c.b16 %v2180, %v2179
        %v2239 = vpack.c.b16 %v2182, %v2181
        %v2240 = vpack.c.b16 %v2184, %v2183
        %v2241 = vpack.c.b16 %v2186, %v2185
        %v2242 = vpack.c.b16 %v2188, %v2187
        %v2243 = vpack.c.b16 %v2190, %v2189
        %v2244 = vpack.c.b16 %v2192, %v2191
        %v2245 = vpack.c.b16 %v2194, %v2193
        %v2246 = vpack.c.b16 %v2196, %v2195
        %v2247 = vpack.c.b16 %v2198, %v2197
        %v2248 = vpack.c.b16 %v2200, %v2199
        %v2249 = vpack.c.b16 %v2202, %v2201
        %v2250 = vpack.c.b16 %v2204, %v2203
        %v2251 = vpack.c.b16 %v2206, %v2205
        %v2252 = vpack.c.b16 %v2208, %v2207
        %v2253 = vpack.c.b16 %v2210, %v2209
        %v2254 = vpack.c.b16 %v2212, %v2211
        %v2255 = vpack.c.b16 %v2214, %v2213
        %v2256 = vpack.c.b16 %v2216, %v2215
        %v2257 = vpack.c.b16 %v2218, %v2217
        %v2258 = vpack.c.b16 %v2220, %v2219
        %v2259 = vpack.c.b16 %v2222, %v2221
        %v2260 = vpack.c.b16 %v2224, %v2223
        %v2261 = vpack.c.b16 %v2226, %v2225
        %v2262 = vpack.c.b16 %v2228, %v2227
        %v2263 = vpack.c.b16 %v2230, %v2229
        %v2264 = vpack.c.b16 %v2232, %v2231
        %2297 = vmatprep.subr.bf16.mxu0 0
        %2298 = vmatpush1.bf16.msra.mxu0 %v2233
        %2299 = vmatprep.subr.bf16.mxu0 0
        %2300 = vmatpush1.bf16.msra.mxu0 %v2234
        %2301 = vmatprep.subr.bf16.mxu0 0
        %2302 = vmatpush1.bf16.msra.mxu0 %v2235
        %2303 = vmatprep.subr.bf16.mxu0 0
        %2304 = vmatpush1.bf16.msra.mxu0 %v2236
        %2305 = vmatprep.subr.bf16.mxu0 0
        %2306 = vmatpush1.bf16.msra.mxu0 %v2237
        %2307 = vmatprep.subr.bf16.mxu0 0
        %2308 = vmatpush1.bf16.msra.mxu0 %v2238
        %2309 = vmatprep.subr.bf16.mxu0 0
        %2310 = vmatpush1.bf16.msra.mxu0 %v2239
        %2311 = vmatprep.subr.bf16.mxu0 0
        %2312 = vmatpush1.bf16.msra.mxu0 %v2240
        %2313 = vmatprep.subr.bf16.mxu0 0
        %2314 = vmatpush1.bf16.msra.mxu0 %v2241
        %2315 = vmatprep.subr.bf16.mxu0 0
        %2316 = vmatpush1.bf16.msra.mxu0 %v2242
        %2317 = vmatprep.subr.bf16.mxu0 0
        %2318 = vmatpush1.bf16.msra.mxu0 %v2243
        %2319 = vmatprep.subr.bf16.mxu0 0
        %2320 = vmatpush1.bf16.msra.mxu0 %v2244
        %2321 = vmatprep.subr.bf16.mxu0 0
        %2322 = vmatpush1.bf16.msra.mxu0 %v2245
        %2323 = vmatprep.subr.bf16.mxu0 0
        %2324 = vmatpush1.bf16.msra.mxu0 %v2246
        %2325 = vmatprep.subr.bf16.mxu0 0
        %2326 = vmatpush1.bf16.msra.mxu0 %v2247
        %2327 = vmatprep.subr.bf16.mxu0 0
        %2328 = vmatpush1.bf16.msra.mxu0 %v2248
        %2329 = vmatprep.mubr.bf16.mxu0 %v2031
        %2330 = vmatmul.mubr.bf16.gmra.mrb[0].mxu0 %v2030
        %v2331 = vpop.f32.mrb[0].mxu0
        %v2332 = vadd.f32 %v2103, %v2331
        %v2333 = vpop.f32.mrb[0].mxu0
        %v2334 = vpop.f32.mrb[0].mxu0
        %v2335 = vpop.f32.mrb[0].mxu0
        %2336 = vdwg.mxu0
        %2337 = vmatprep.subr.bf16.mxu0 0
        %2338 = vmatpush1.bf16.msra.mxu0 %v2249
        %2339 = vmatprep.subr.bf16.mxu0 0
        %2340 = vmatpush1.bf16.msra.mxu0 %v2250
        %2341 = vmatprep.subr.bf16.mxu0 0
        %2342 = vmatpush1.bf16.msra.mxu0 %v2251
        %2343 = vmatprep.subr.bf16.mxu0 0
        %2344 = vmatpush1.bf16.msra.mxu0 %v2252
        %2345 = vmatprep.subr.bf16.mxu0 0
        %2346 = vmatpush1.bf16.msra.mxu0 %v2253
        %2347 = vmatprep.subr.bf16.mxu0 0
        %2348 = vmatpush1.bf16.msra.mxu0 %v2254
        %2349 = vmatprep.subr.bf16.mxu0 0
        %2350 = vmatpush1.bf16.msra.mxu0 %v2255
        %2351 = vmatprep.subr.bf16.mxu0 0
        %2352 = vmatpush1.bf16.msra.mxu0 %v2256
        %2353 = vmatprep.subr.bf16.mxu0 0
        %2354 = vmatpush1.bf16.msra.mxu0 %v2257
        %2355 = vmatprep.subr.bf16.mxu0 0
        %2356 = vmatpush1.bf16.msra.mxu0 %v2258
        %2357 = vmatprep.subr.bf16.mxu0 0
        %2358 = vmatpush1.bf16.msra.mxu0 %v2259
        %2359 = vmatprep.subr.bf16.mxu0 0
        %2360 = vmatpush1.bf16.msra.mxu0 %v2260
        %2361 = vmatprep.subr.bf16.mxu0 0
        %2362 = vmatpush1.bf16.msra.mxu0 %v2261
        %2363 = vmatprep.subr.bf16.mxu0 0
        %2364 = vmatpush1.bf16.msra.mxu0 %v2262
        %2365 = vmatprep.subr.bf16.mxu0 0
        %2366 = vmatpush1.bf16.msra.mxu0 %v2263
        %2367 = vmatprep.subr.bf16.mxu0 0
        %2368 = vmatpush1.bf16.msra.mxu0 %v2264
        %2369 = vmatprep.mubr.bf16.mxu0 %v2033
        %2370 = vmatmul.mubr.bf16.gmra.mrb[0].mxu0 %v2032
        %v2371 = vpop.f32.mrb[0].mxu0
        %v2372 = vadd.f32 %v2332, %v2371
        %v2373 = vpop.f32.mrb[0].mxu0
        %v2374 = vpop.f32.mrb[0].mxu0
        %v2375 = vpop.f32.mrb[0].mxu0
        %2376 = vdwg.mxu0
        %v2377 = vadd.f32 %v1696, %v2372
        %v2378 = vld [vmem:[%s1097] sm:$0x1]
        %v2379 = vld [vmem:[%s1100] sm:$0x1]
        %2380 = vadd.xlane.f32.xlu0 %v2377
        %v2381 = vpop.xlane.xlu0 %2380
        %v2382 = vmul.f32 %v2381, %v1673
        %v2383 = vsub.f32 %v2377, %v2382
        %v2384 = vmul.f32 %v2383, %v2383
        %2385 = vadd.xlane.f32.xlu0 %v2384
        %v2386 = vpop.xlane.xlu0 %2385
        %v2387 = vmul.f32 %v2386, %v1673
        %v2388 = vadd.f32 %v2387, 1e-12
        %v2389 = vrsqrt.pop %v2388
        %v2390 = vmul.f32 %v2383, %v2389
        %v2392 = vlaneseq
        %v2393 = vshrl.u32 %v2392, 7
        %v2394 = vsub.s32 0, %v2393
        %v2395 = vrot.slane %v2378, %v2394
        %v2397 = vmul.f32 %v2390, %v2395
        %v2399 = vlaneseq
        %v2400 = vshrl.u32 %v2399, 7
        %v2401 = vsub.s32 0, %v2400
        %v2402 = vrot.slane %v2379, %v2401
        %v2404 = vadd.f32 %v2397, %v2402
        %2405 = vst [vmem:[#allocation2] sm:$0xff] %v2404
        %p2406 = scmp.eq.s32.totalorder %s48, 1
        // Predicated region
        $region137: #{forward_virtual.1} parent=111 // pred_check
          %p2407 = pneg %p2406
        $region138: #{forward_virtual.1} parent=111 // pred_check_branch
          %2409 = sbr.rel (%p2407) target = $region140
        $region139: #{forward_virtual.1} parent=111 // pred_region
          %v2410 = vld [vmem:[%s1064] sm:$0x3]
          %v2412 = vsel %vm1496, %v2410, 0
          %2414 = vmatprep.subr.mxu0 0.0
          %2415 = vmatpush1.msra.mxu0 %v2404
          %2416 = vmatprep.subr.mxu0 0.0
          %2417 = vmatpush1.msra.mxu0 0.0
          %2418 = vmatprep.subr.mxu0 0.0
          %2419 = vmatpush1.msra.mxu0 0.0
          %2420 = vmatprep.subr.mxu0 0.0
          %2421 = vmatpush1.msra.mxu0 0.0
          %2422 = vmatprep.subr.mxu0 0.0
          %2423 = vmatpush1.msra.mxu0 0.0
          %2424 = vmatprep.subr.mxu0 0.0
          %2425 = vmatpush1.msra.mxu0 0.0
          %2426 = vmatprep.subr.mxu0 0.0
          %2427 = vmatpush1.msra.mxu0 0.0
          %2428 = vmatprep.subr.mxu0 0.0
          %2429 = vmatpush1.msra.mxu0 0.0
          %2430 = vmatprep.subr.mxu0 0.0
          %2431 = vmatpush1.msra.mxu0 0.0
          %2432 = vmatprep.subr.mxu0 0.0
          %2433 = vmatpush1.msra.mxu0 0.0
          %2434 = vmatprep.subr.mxu0 0.0
          %2435 = vmatpush1.msra.mxu0 0.0
          %2436 = vmatprep.subr.mxu0 0.0
          %2437 = vmatpush1.msra.mxu0 0.0
          %2438 = vmatprep.subr.mxu0 0.0
          %2439 = vmatpush1.msra.mxu0 0.0
          %2440 = vmatprep.subr.mxu0 0.0
          %2441 = vmatpush1.msra.mxu0 0.0
          %2442 = vmatprep.subr.mxu0 0.0
          %2443 = vmatpush1.msra.mxu0 0.0
          %2444 = vmatprep.subr.mxu0 0.0
          %2445 = vmatpush1.msra.mxu0 0.0
          %2446 = vmatprep.subr.mxu0 0.0
          %2447 = vmatpush1.msra.mxu0 0.0
          %2448 = vmatprep.subr.mxu0 0.0
          %2449 = vmatpush1.msra.mxu0 0.0
          %2450 = vmatprep.subr.mxu0 0.0
          %2451 = vmatpush1.msra.mxu0 0.0
          %2452 = vmatprep.subr.mxu0 0.0
          %2453 = vmatpush1.msra.mxu0 0.0
          %2454 = vmatprep.subr.mxu0 0.0
          %2455 = vmatpush1.msra.mxu0 0.0
          %2456 = vmatprep.subr.mxu0 0.0
          %2457 = vmatpush1.msra.mxu0 0.0
          %2458 = vmatprep.subr.mxu0 0.0
          %2459 = vmatpush1.msra.mxu0 0.0
          %2460 = vmatprep.subr.mxu0 0.0
          %2461 = vmatpush1.msra.mxu0 0.0
          %2462 = vmatprep.subr.mxu0 0.0
          %2463 = vmatpush1.msra.mxu0 0.0
          %2464 = vmatprep.subr.mxu0 0.0
          %2465 = vmatpush1.msra.mxu0 0.0
          %2466 = vmatprep.subr.mxu0 0.0
          %2467 = vmatpush1.msra.mxu0 0.0
          %2468 = vmatprep.subr.mxu0 0.0
          %2469 = vmatpush1.msra.mxu0 0.0
          %2470 = vmatprep.subr.mxu0 0.0
          %2471 = vmatpush1.msra.mxu0 0.0
          %2472 = vmatprep.subr.mxu0 0.0
          %2473 = vmatpush1.msra.mxu0 0.0
          %2474 = vmatprep.subr.mxu0 0.0
          %2475 = vmatpush1.msra.mxu0 0.0
          %2476 = vmatprep.subr.mxu0 0.0
          %2477 = vmatpush1.msra.mxu0 0.0
          %2478 = vmatprep.mubr.f32.mxu0 0.0
          %2479 = vmatmul.mubr.f32.gmra.mrb[0].mxu0 %v2412
          %v2480 = vpop.f32.mrb[0].mxu0
          %v2481 = vadd.f32 0.0, %v2480
          %v2482 = vpop.f32.mrb[0].mxu0
          %2483 = vdwg.mxu0
          %v2485 = vunpack.c.l.s4 1934713408
          %v2486 = vunpack.c.0.s8 %v2485
          %v2487 = vlaneseq
          %v2488 = vshrl.u32 %v2487, 7
          %v2489 = vsub.s32 %v2486, %v2488
          %v2490 = vrot.slane %v2481, %v2489
          %v2491 = vcombine.high %v2490, 0.0
          %v2492 = vpack.c.bf16 %v2490, %v2490
          %v2493 = vpack.c.bf16 %v2491, %v2491
          %v2494 = vld [vmem:[%s19] sm:$0xf]
          %v2495 = vld [vmem:[%s19 + $0x4] sm:$0xf]
          %v2496 = vld [vmem:[%s19 + $0x8] sm:$0xf]
          %v2497 = vld [vmem:[%s19 + $0xc] sm:$0xf]
          %v2498 = vld [vmem:[%s19 + $0x10] sm:$0xf]
          %v2499 = vld [vmem:[%s19 + $0x14] sm:$0xf]
          %v2500 = vld [vmem:[%s19 + $0x18] sm:$0xf]
          %v2501 = vld [vmem:[%s19 + $0x1c] sm:$0xf]
          %v2502 = vld [vmem:[%s19 + $0x20] sm:$0xf]
          %v2503 = vld [vmem:[%s19 + $0x24] sm:$0xf]
          %v2504 = vld [vmem:[%s19 + $0x28] sm:$0xf]
          %v2505 = vld [vmem:[%s19 + $0x2c] sm:$0xf]
          %v2506 = vld [vmem:[%s19 + $0x30] sm:$0xf]
          %v2507 = vld [vmem:[%s19 + $0x34] sm:$0xf]
          %v2508 = vld [vmem:[%s19 + $0x38] sm:$0xf]
          %v2509 = vld [vmem:[%s19 + $0x3c] sm:$0xf]
          %v2510 = vld [vmem:[%s19 + $0x40] sm:$0xf]
          %v2511 = vld [vmem:[%s19 + $0x44] sm:$0xf]
          %v2512 = vld [vmem:[%s19 + $0x48] sm:$0xf]
          %v2513 = vld [vmem:[%s19 + $0x4c] sm:$0xf]
          %v2514 = vld [vmem:[%s19 + $0x50] sm:$0xf]
          %v2515 = vld [vmem:[%s19 + $0x54] sm:$0xf]
          %v2516 = vld [vmem:[%s19 + $0x58] sm:$0xf]
          %v2517 = vld [vmem:[%s19 + $0x5c] sm:$0xf]
          %v2518 = vld [vmem:[%s19 + $0x60] sm:$0xf]
          %v2519 = vld [vmem:[%s19 + $0x64] sm:$0xf]
          %v2520 = vld [vmem:[%s19 + $0x68] sm:$0xf]
          %v2521 = vld [vmem:[%s19 + $0x6c] sm:$0xf]
          %v2522 = vld [vmem:[%s19 + $0x70] sm:$0xf]
          %v2523 = vld [vmem:[%s19 + $0x74] sm:$0xf]
          %v2524 = vld [vmem:[%s19 + $0x78] sm:$0xf]
          %v2525 = vld [vmem:[%s19 + $0x7c] sm:$0xf]
          %v2526 = vld [vmem:[%s20] sm:$0x1]
          %v2559 = vunpack.c.l.b16 %v2494
          %v2560 = vunpack.c.l.b16 %v2495
          %v2561 = vunpack.c.l.b16 %v2496
          %v2562 = vunpack.c.l.b16 %v2497
          %v2563 = vunpack.c.l.b16 %v2498
          %v2564 = vunpack.c.l.b16 %v2499
          %v2565 = vunpack.c.l.b16 %v2500
          %v2566 = vunpack.c.l.b16 %v2501
          %v2567 = vunpack.c.l.b16 %v2502
          %v2568 = vunpack.c.l.b16 %v2503
          %v2569 = vunpack.c.l.b16 %v2504
          %v2570 = vunpack.c.l.b16 %v2505
          %v2571 = vunpack.c.l.b16 %v2506
          %v2572 = vunpack.c.l.b16 %v2507
          %v2573 = vunpack.c.l.b16 %v2508
          %v2574 = vunpack.c.l.b16 %v2509
          %v2575 = vunpack.c.l.b16 %v2510
          %v2576 = vunpack.c.l.b16 %v2511
          %v2577 = vunpack.c.l.b16 %v2512
          %v2578 = vunpack.c.l.b16 %v2513
          %v2579 = vunpack.c.l.b16 %v2514
          %v2580 = vunpack.c.l.b16 %v2515
          %v2581 = vunpack.c.l.b16 %v2516
          %v2582 = vunpack.c.l.b16 %v2517
          %v2583 = vunpack.c.l.b16 %v2518
          %v2584 = vunpack.c.l.b16 %v2519
          %v2585 = vunpack.c.l.b16 %v2520
          %v2586 = vunpack.c.l.b16 %v2521
          %v2587 = vunpack.c.l.b16 %v2522
          %v2588 = vunpack.c.l.b16 %v2523
          %v2589 = vunpack.c.l.b16 %v2524
          %v2590 = vunpack.c.l.b16 %v2525
          %v2591 = vpack.c.b16 %v2560, %v2559
          %v2592 = vpack.c.b16 %v2562, %v2561
          %v2593 = vpack.c.b16 %v2564, %v2563
          %v2594 = vpack.c.b16 %v2566, %v2565
          %v2595 = vpack.c.b16 %v2568, %v2567
          %v2596 = vpack.c.b16 %v2570, %v2569
          %v2597 = vpack.c.b16 %v2572, %v2571
          %v2598 = vpack.c.b16 %v2574, %v2573
          %v2599 = vpack.c.b16 %v2576, %v2575
          %v2600 = vpack.c.b16 %v2578, %v2577
          %v2601 = vpack.c.b16 %v2580, %v2579
          %v2602 = vpack.c.b16 %v2582, %v2581
          %v2603 = vpack.c.b16 %v2584, %v2583
          %v2604 = vpack.c.b16 %v2586, %v2585
          %v2605 = vpack.c.b16 %v2588, %v2587
          %v2606 = vpack.c.b16 %v2590, %v2589
          %2623 = vmatprep.subr.bf16.mxu0 0
          %2624 = vmatpush1.bf16.msra.mxu0 %v2591
          %2625 = vmatprep.subr.bf16.mxu0 0
          %2626 = vmatpush1.bf16.msra.mxu0 %v2592
          %2627 = vmatprep.subr.bf16.mxu0 0
          %2628 = vmatpush1.bf16.msra.mxu0 %v2593
          %2629 = vmatprep.subr.bf16.mxu0 0
          %2630 = vmatpush1.bf16.msra.mxu0 %v2594
          %2631 = vmatprep.subr.bf16.mxu0 0
          %2632 = vmatpush1.bf16.msra.mxu0 %v2595
          %2633 = vmatprep.subr.bf16.mxu0 0
          %2634 = vmatpush1.bf16.msra.mxu0 %v2596
          %2635 = vmatprep.subr.bf16.mxu0 0
          %2636 = vmatpush1.bf16.msra.mxu0 %v2597
          %2637 = vmatprep.subr.bf16.mxu0 0
          %2638 = vmatpush1.bf16.msra.mxu0 %v2598
          %2639 = vmatprep.subr.bf16.mxu0 0
          %2640 = vmatpush1.bf16.msra.mxu0 %v2599
          %2641 = vmatprep.subr.bf16.mxu0 0
          %2642 = vmatpush1.bf16.msra.mxu0 %v2600
          %2643 = vmatprep.subr.bf16.mxu0 0
          %2644 = vmatpush1.bf16.msra.mxu0 %v2601
          %2645 = vmatprep.subr.bf16.mxu0 0
          %2646 = vmatpush1.bf16.msra.mxu0 %v2602
          %2647 = vmatprep.subr.bf16.mxu0 0
          %2648 = vmatpush1.bf16.msra.mxu0 %v2603
          %2649 = vmatprep.subr.bf16.mxu0 0
          %2650 = vmatpush1.bf16.msra.mxu0 %v2604
          %2651 = vmatprep.subr.bf16.mxu0 0
          %2652 = vmatpush1.bf16.msra.mxu0 %v2605
          %2653 = vmatprep.subr.bf16.mxu0 0
          %2654 = vmatpush1.bf16.msra.mxu0 %v2606
          %2655 = vmatprep.mubr.bf16.mxu0 %v2493
          %2656 = vmatmul.mubr.bf16.gmra.mrb[0].mxu0 %v2492
          %v2657 = vpop.f32.mrb[0].mxu0
          %v2658 = vadd.f32 %v2526, %v2657
          %v2659 = vpop.f32.mrb[0].mxu0
          %v2660 = vpop.f32.mrb[0].mxu0
          %v2661 = vpop.f32.mrb[0].mxu0
          %2662 = vdwg.mxu0
          %v2663 = vmax.f32 %v2658, 0.0
          %v2664 = vpack.c.bf16 %v2663, %v2663
          %v2665 = vld [vmem:[%s21] sm:$0xf]
          %v2666 = vld [vmem:[%s21 + $0x4] sm:$0xf]
          %v2667 = vld [vmem:[%s21 + $0x8] sm:$0xf]
          %v2668 = vld [vmem:[%s21 + $0xc] sm:$0xf]
          %v2669 = vld [vmem:[%s22] sm:$0x1]
          %v2674 = vunpack.c.l.b16 %v2665
          %v2675 = vunpack.c.l.b16 %v2666
          %v2676 = vunpack.c.l.b16 %v2667
          %v2677 = vunpack.c.l.b16 %v2668
          %v2678 = vpack.c.b16 %v2675, %v2674
          %v2679 = vpack.c.b16 %v2677, %v2676
          %vm2682 = vcmask 261120
          %v2684 = vsel %vm2682, %v2664, 0
          %2686 = vmatprep.subr.bf16.mxu0 0
          %2687 = vmatpush1.bf16.msra.mxu0 %v2678
          %2688 = vmatprep.subr.bf16.mxu0 0
          %2689 = vmatpush1.bf16.msra.mxu0 %v2679
          %2690 = vmatprep.subr.bf16.mxu0 0
          %2691 = vmatpush1.bf16.msra.mxu0 0
          %2692 = vmatprep.subr.bf16.mxu0 0
          %2693 = vmatpush1.bf16.msra.mxu0 0
          %2694 = vmatprep.subr.bf16.mxu0 0
          %2695 = vmatpush1.bf16.msra.mxu0 0
          %2696 = vmatprep.subr.bf16.mxu0 0
          %2697 = vmatpush1.bf16.msra.mxu0 0
          %2698 = vmatprep.subr.bf16.mxu0 0
          %2699 = vmatpush1.bf16.msra.mxu0 0
          %2700 = vmatprep.subr.bf16.mxu0 0
          %2701 = vmatpush1.bf16.msra.mxu0 0
          %2702 = vmatprep.subr.bf16.mxu0 0
          %2703 = vmatpush1.bf16.msra.mxu0 0
          %2704 = vmatprep.subr.bf16.mxu0 0
          %2705 = vmatpush1.bf16.msra.mxu0 0
          %2706 = vmatprep.subr.bf16.mxu0 0
          %2707 = vmatpush1.bf16.msra.mxu0 0
          %2708 = vmatprep.subr.bf16.mxu0 0
          %2709 = vmatpush1.bf16.msra.mxu0 0
          %2710 = vmatprep.subr.bf16.mxu0 0
          %2711 = vmatpush1.bf16.msra.mxu0 0
          %2712 = vmatprep.subr.bf16.mxu0 0
          %2713 = vmatpush1.bf16.msra.mxu0 0
          %2714 = vmatprep.subr.bf16.mxu0 0
          %2715 = vmatpush1.bf16.msra.mxu0 0
          %2716 = vmatprep.subr.bf16.mxu0 0
          %2717 = vmatpush1.bf16.msra.mxu0 0
          %2718 = vmatprep.mubr.bf16.mxu0 0
          %2719 = vmatmul.mubr.bf16.gmra.mrb[0].mxu0 %v2684
          %v2720 = vpop.f32.mrb[0].mxu0
          %v2721 = vadd.f32 %v2669, %v2720
          %v2722 = vpop.f32.mrb[0].mxu0
          %v2723 = vpop.f32.mrb[0].mxu0
          %v2724 = vpop.f32.mrb[0].mxu0
          %2725 = vdwg.mxu0
          %2727 = vrot.lane.b32.xlu0 %v2721, 32
          %v2728 = vpop.permute.xlu0 %2727
          %v2730 = vsel %vm2682, %v2663, %v2728
          %vm2731 = vcmask 293888
          %v2732 = vsel %vm2731, %v2730, 0.0
          %2733 = vst [vmem:[%s1103] sm:$0x1] %v2732
        $region140: #{forward_virtual.1} parent=111 // pred_fallthru
          _
        %p2734 = scmp.lt.s32.totalorder %s47, 1
        %s2735 = scalar_select %p2734, %s47, 1
        %s2736 = scalar_lea.vmem %s23, %s2735
        // Predicated region
        $region141: #{forward_virtual.1} parent=111 // pred_check
          %p2737 = pneg %p651
        $region142: #{forward_virtual.1} parent=111 // pred_check_branch
          %2739 = sbr.rel (%p2737) target = $region144
        $region143: #{forward_virtual.1} parent=111 // pred_region
          _
        $region144: #{forward_virtual.1} parent=111 // pred_fallthru
          _
      $region112: #{forward_virtual.1} parent=5 // pred_fallthru
        _
      %p2740 = scmp.le.s32.totalorder 2, %s38
      // Predicated region
      $region145: #{forward_virtual.1} parent=5 // pred_check
        %p2741 = pneg %p2740
      $region146: #{forward_virtual.1} parent=5 // pred_check_branch
        %2743 = sbr.rel (%p2741) target = $region148
      $region147: #{forward_virtual.1} parent=5 // pred_region
        %s2744 = ssub.s32 %s38, 2
        // Predicated region
        $region149: #{forward_virtual.1} parent=147 // pred_check
          %p2745 = pneg %p657
        $region150: #{forward_virtual.1} parent=147 // pred_check_branch
          %2747 = sbr.rel (%p2745) target = $region152
        $region151: #{forward_virtual.1} parent=147 // pred_region
          %p2748 = scmp.lt.s32.totalorder %s49, 1
          %s2749 = scalar_select %p2748, %s49, 1
          %s2750 = scalar_lea.vmem %s23, %s2749
        $region152: #{forward_virtual.1} parent=147 // pred_fallthru
          _
      $region148: #{forward_virtual.1} parent=5 // pred_fallthru
        _
    $region6: #{forward_virtual.1} parent=1 // loop_footer
      %s42 = sadd.s32 1, %s38
    $region7: #{forward_virtual.1} parent=1 // loop_footer_branch
      %37 = sbr.rel target = $region3
    $region8: #{forward_virtual.1} parent=1 // loop_exit
      _
    %2751 = vsyncpa [#allocation4], 1
    %s2752 = scalar_lea.sflag [#allocation4], 1
    %2753 = vsyncpa %s2752, 1
    %2754 = vsyncpa [#allocation6], 1
    %s2755 = scalar_lea.sflag [#allocation6], 1
    %2756 = vsyncpa %s2755, 1
    %2757 = vsyncpa [#allocation9], 1
    %s2758 = scalar_lea.sflag [#allocation9], 1
    %2759 = vsyncpa %s2758, 1

</llo_original>
